<compile_context>
chip_gen: v7x
topology: tpu7x:2x2x1
jax: 0.10.0
libtpu: 0.0.40
codegen_flags: <defaults>
</compile_context>

<pallas_src>
import functools

import jax
import jax.numpy as jnp
import numpy as np
from jax import lax
from jax.experimental import pallas as pl
from jax.experimental.pallas import tpu as pltpu


# ----------------------------------------------------------------------------
# Fused Pallas kernel: conv3x3+ReLU -> conv1x1+ReLU -> ZeroConv3x3 -> coupling
# ----------------------------------------------------------------------------
def _fused_coupling_kernel(
    a_ref,      # (L, c_half)  f32   in_a in the padded/flattened frame (zeros on border)
    b_ref,      # (L, c_half)  f32   in_b in the same frame
    mask_ref,   # (L, 1)       f32   1.0 on interior rows, 0.0 on padded/extra rows
    w1_ref,     # (9*c_half, F) bf16 conv1 weight (tap-major im2col order)
    b1_ref,     # (1, F)       f32
    w2_ref,     # (F, F)       bf16  1x1 conv weight
    b2_ref,     # (1, F)       f32
    w3_ref,     # (F, 9*C)     bf16  ZeroConv weight, gain folded in, per-tap blocks
    b3_ref,     # (1, C)       f32   ZeroConv bias * gain
    out_b_ref,  # (L, c_half)  f32   (in_b + t) * s   (garbage on non-interior rows)
    logdet_ref, # (1, c_half)  f32   per-image, per-channel sum of log(s)
    *,
    H,
    W,
    c_half,
):
    Wp = W + 2
    L = a_ref.shape[0]          # padded row count, multiple of 8
    C = 2 * c_half
    mxu = w1_ref.dtype          # bf16 (or f32 for the reference-accuracy path)

    # Row shift for tap (dy, dx): flat index offset in the padded frame.  Shifts
    # are implemented as static slices of a row-doubled buffer (aligned concat +
    # static slices only); cyclic wrap only affects discarded border rows.
    shifts = [((dy - 1) * Wp + (dx - 1)) % L for dy in range(3) for dx in range(3)]

    # ---- net[0]: Conv2d(c_half, F, 3, padding=1) + ReLU  (in-VMEM im2col) ----
    a = a_ref[...]                                    # f32, small (c_half lanes)
    a2 = jnp.concatenate([a, a], axis=0)              # aligned sublane concat
    patch = jnp.concatenate([a2[s:s + L] for s in shifts], axis=1)   # (L, 9*c_half)
    h1 = jnp.dot(patch.astype(mxu), w1_ref[...], preferred_element_type=jnp.float32)
    h1 = jnp.maximum(h1 + b1_ref[...], 0.0)

    # ---- net[2]: Conv2d(F, F, 1) + ReLU ----
    h2 = jnp.dot(h1.astype(mxu), w2_ref[...], preferred_element_type=jnp.float32)
    h2 = jnp.maximum(h2 + b2_ref[...], 0.0)

    # ---- net[4]: ZeroConv2d(F, C): pad value 1.0, 3x3 conv, gain pre-folded ----
    mask = mask_ref[...]                              # (L, 1)
    h2p = jnp.where(mask > 0.5, h2, 1.0)              # border rows = pad value 1.0
    # One wide matmul; the 9 per-tap partials live on C lanes each.
    p3 = jnp.dot(h2p.astype(mxu), w3_ref[...], preferred_element_type=jnp.float32)  # (L, 9*C)
    p3d = jnp.concatenate([p3, p3], axis=0)           # aligned sublane concat
    acc = jnp.zeros((L, C), jnp.float32)
    for k, s in enumerate(shifts):                    # shift the SMALL partials
        acc = acc + p3d[s:s + L, k * C:(k + 1) * C]
    net = acc + b3_ref[...]

    # ---- affine coupling epilogue (kept in f32) ----
    # Single narrow lane split of the final (L, C) accumulator (cheaper than
    # doubling the ZeroConv matmul count with split weights).
    log_s = net[:, :c_half]
    t_val = net[:, c_half:]
    s_gate = jax.nn.sigmoid(log_s + 2.0)
    out_b_ref[...] = ((b_ref[...] + t_val) * s_gate).astype(out_b_ref.dtype)
    # Masked (interior-only) reduction to a single (1, c_half) partial per image.
    log_s_safe = jnp.where(mask > 0.5, jnp.log(s_gate), 0.0)
    logdet_ref[...] = jnp.sum(log_s_safe, axis=0, keepdims=True)


# ----------------------------------------------------------------------------
# Wrapper: layout conversion, parameter packing, pallas_call
# ----------------------------------------------------------------------------
def affine_coupling_forward(x, params, mxu_dtype=jnp.bfloat16):
    """Forward of AffineCoupling(affine=True).  x: (N, C, H, W) float32."""
    N, C, H, W = x.shape
    assert C % 2 == 0
    c_half = C // 2
    F = params["w1"].shape[0]
    Hp, Wp = H + 2, W + 2
    Lp = Hp * Wp
    Lpad = ((Lp + 7) // 8) * 8          # 8-sublane-aligned row count

    in_a = x[:, :c_half]
    in_b = x[:, c_half:]

    def pad_flat(t_nchw):
        # NCHW -> NHWC -> pad H/W by 1 (zeros) -> flatten padded frame -> pad rows to Lpad.
        t = jnp.transpose(t_nchw, (0, 2, 3, 1))
        t = jnp.pad(t, ((0, 0), (1, 1), (1, 1), (0, 0)))
        t = t.reshape(N, Lp, c_half)
        if Lpad > Lp:
            t = jnp.pad(t, ((0, 0), (0, Lpad - Lp), (0, 0)))
        return t.astype(jnp.float32)

    a_flat = pad_flat(in_a)             # (N, Lpad, c_half)
    b_flat = pad_flat(in_b)             # (N, Lpad, c_half)

    # Interior-row mask (1 = real pixel, 0 = padding/border rows).
    interior2d = jnp.zeros((Hp, Wp), jnp.float32).at[1:H + 1, 1:W + 1].set(1.0)
    mask = jnp.zeros((Lpad, 1), jnp.float32).at[:Lp, 0].set(interior2d.reshape(Lp))

    # ---- parameter packing (gain folded into ZeroConv weight/bias) ----
    w1m = jnp.transpose(params["w1"], (2, 3, 1, 0)).reshape(9 * c_half, F).astype(mxu_dtype)
    b1 = params["b1"].reshape(1, F).astype(jnp.float32)
    w2m = params["w2"][:, :, 0, 0].T.astype(mxu_dtype)                    # (F, F)
    b2 = params["b2"].reshape(1, F).astype(jnp.float32)
    gain = jnp.exp(3.0 * params["scale"])                                 # (C,)
    w3_eff = params["w3"] * gain[:, None, None, None]                     # (C, F, 3, 3)
    b3_eff = (params["b3"] * gain).reshape(1, C).astype(jnp.float32)
    # (F, 9*C): column block k = dy*3+dx holds that tap's (F, C) weight.
    w3c = jnp.transpose(w3_eff, (1, 2, 3, 0)).reshape(F, 9 * C).astype(mxu_dtype)

    kernel = functools.partial(_fused_coupling_kernel, H=H, W=W, c_half=c_half)

    out_b_flat, ld_part = pl.pallas_call(
        kernel,
        out_shape=(
            jax.ShapeDtypeStruct((N, Lpad, c_half), x.dtype),
            jax.ShapeDtypeStruct((N, 1, c_half), jnp.float32),
        ),
        grid=(N,),
        in_specs=[
            pl.BlockSpec((None, Lpad, c_half), lambda n: (n, 0, 0)),   # in_a (padded frame)
            pl.BlockSpec((None, Lpad, c_half), lambda n: (n, 0, 0)),   # in_b (padded frame)
            pl.BlockSpec((Lpad, 1), lambda n: (0, 0)),                 # interior mask
            pl.BlockSpec((9 * c_half, F), lambda n: (0, 0)),           # w1 (im2col packed)
            pl.BlockSpec((1, F), lambda n: (0, 0)),                    # b1
            pl.BlockSpec((F, F), lambda n: (0, 0)),                    # w2
            pl.BlockSpec((1, F), lambda n: (0, 0)),                    # b2
            pl.BlockSpec((F, 9 * C), lambda n: (0, 0)),                # w3 (gain folded)
            pl.BlockSpec((1, C), lambda n: (0, 0)),                    # b3 (gain folded)
        ],
        out_specs=(
            pl.BlockSpec((None, Lpad, c_half), lambda n: (n, 0, 0)),   # out_b (padded frame)
            pl.BlockSpec((None, 1, c_half), lambda n: (n, 0, 0)),      # per-image logdet partial
        ),
        compiler_params=pltpu.CompilerParams(
            dimension_semantics=("parallel",),   # shards the batch across v7x's 2 TCs
        ),
    )(a_flat, b_flat, mask, w1m, b1, w2m, b2, w3c, b3_eff)

    # Extract the interior of the padded frame, back to NCHW.
    out_b = out_b_flat[:, :Lp].reshape(N, Hp, Wp, c_half)[:, 1:H + 1, 1:W + 1, :]
    out_b = jnp.transpose(out_b, (0, 3, 1, 2))
    out = jnp.concatenate([in_a, out_b], axis=1)
    logdet = ld_part.reshape(N, c_half).sum(axis=-1)
    return out, logdet


# ----------------------------------------------------------------------------
# Pure-JAX reference (mirrors the PyTorch module exactly) for validation
# ----------------------------------------------------------------------------
def reference_forward(x, params):
    dn = ("NCHW", "OIHW", "NCHW")
    N, C, H, W = x.shape
    c_half = C // 2
    in_a, in_b = x[:, :c_half], x[:, c_half:]
    h = lax.conv_general_dilated(
        in_a, params["w1"], (1, 1), [(1, 1), (1, 1)], dimension_numbers=dn
    ) + params["b1"][None, :, None, None]
    h = jnp.maximum(h, 0.0)
    h = lax.conv_general_dilated(
        h, params["w2"], (1, 1), "VALID", dimension_numbers=dn
    ) + params["b2"][None, :, None, None]
    h = jnp.maximum(h, 0.0)
    hp = jnp.pad(h, ((0, 0), (0, 0), (1, 1), (1, 1)), constant_values=1.0)
    h = lax.conv_general_dilated(
        hp, params["w3"], (1, 1), "VALID", dimension_numbers=dn
    ) + params["b3"][None, :, None, None]
    h = h * jnp.exp(3.0 * params["scale"])[None, :, None, None]
    log_s, t = h[:, :c_half], h[:, c_half:]
    s = jax.nn.sigmoid(log_s + 2.0)
    out_b = (in_b + t) * s
    logdet = jnp.sum(jnp.log(s).reshape(N, -1), axis=1)
    return jnp.concatenate([in_a, out_b], axis=1), logdet


# ----------------------------------------------------------------------------
if __name__ == "__main__":
    # Small shapes consistent with the module: batch=2, channels=4, spatial=16.
    N, C, H, W = 2, 4, 16, 16
    FILT = 32  # filter_size (module default is 512; small synthetic value here)
    c_half = C // 2

    key = jax.random.PRNGKey(0)
    k_x, k_w1, k_w2, k_w3, k_sc = jax.random.split(key, 5)
    x = jax.random.normal(k_x, (N, C, H, W), dtype=jnp.float32)

    # Module-faithful init: net[0]/net[2] weights ~ N(0, 0.05), biases zero,
    # ZeroConv2d weight/bias/scale all zero.
    params = {
        "w1": 0.05 * jax.random.normal(k_w1, (FILT, c_half, 3, 3), jnp.float32),
        "b1": jnp.zeros((FILT,), jnp.float32),
        "w2": 0.05 * jax.random.normal(k_w2, (FILT, FILT, 1, 1), jnp.float32),
        "b2": jnp.zeros((FILT,), jnp.float32),
        "w3": jnp.zeros((C, FILT, 3, 3), jnp.float32),
        "b3": jnp.zeros((C,), jnp.float32),
        "scale": jnp.zeros((C,), jnp.float32),
    }

    fwd_bf16 = jax.jit(functools.partial(affine_coupling_forward, mxu_dtype=jnp.bfloat16))
    fwd_f32 = jax.jit(functools.partial(affine_coupling_forward, mxu_dtype=jnp.float32))

    # 1) Module-faithful parameters, bf16 MXU path.
    out, logdet = fwd_bf16(x, params)
    jax.block_until_ready((out, logdet))
    out_ref, logdet_ref = reference_forward(x, params)
    assert out.shape == (N, C, H, W) and logdet.shape == (N,)
    np.testing.assert_allclose(np.asarray(out), np.asarray(out_ref), rtol=1e-4, atol=1e-4)
    np.testing.assert_allclose(np.asarray(logdet), np.asarray(logdet_ref), rtol=1e-4, atol=1e-3)

    # 2) Non-zero ZeroConv weights / gain exercise the fused conv3 + epilogue path.
    params2 = dict(params)
    params2["w3"] = 0.05 * jax.random.normal(k_w3, (C, FILT, 3, 3), jnp.float32)
    params2["b3"] = 0.01 * jnp.ones((C,), jnp.float32)
    params2["scale"] = 0.1 * jax.random.normal(k_sc, (C,), jnp.float32)
    out_ref2, logdet_ref2 = reference_forward(x, params2)

    out2, logdet2 = fwd_f32(x, params2)     # f32 MXU path: tight tolerance
    jax.block_until_ready((out2, logdet2))
    np.testing.assert_allclose(np.asarray(out2), np.asarray(out_ref2), rtol=1e-4, atol=1e-4)
    np.testing.assert_allclose(np.asarray(logdet2), np.asarray(logdet_ref2), rtol=1e-4, atol=1e-3)

    out3, logdet3 = fwd_bf16(x, params2)    # bf16 MXU path: bf16-level tolerance
    jax.block_until_ready((out3, logdet3))
    np.testing.assert_allclose(np.asarray(out3), np.asarray(out_ref2), rtol=5e-2, atol=5e-2)
    np.testing.assert_allclose(np.asarray(logdet3), np.asarray(logdet_ref2), rtol=5e-2, atol=1.0)

    print("KERNEL_OK")
</pallas_src>

<mosaic_0001>
module attributes {stable_mosaic.version = 11 : i64} {
  func.func @_fused_coupling_kernel(%arg0: i32, %arg1: memref<1x328x2xf32, #tpu.memory_space<vmem>>, %arg2: memref<1x328x2xf32, #tpu.memory_space<vmem>>, %arg3: memref<328x1xf32, #tpu.memory_space<vmem>>, %arg4: memref<18x32xbf16, #tpu.memory_space<vmem>>, %arg5: memref<1x32xf32, #tpu.memory_space<vmem>>, %arg6: memref<32x32xbf16, #tpu.memory_space<vmem>>, %arg7: memref<1x32xf32, #tpu.memory_space<vmem>>, %arg8: memref<32x36xbf16, #tpu.memory_space<vmem>>, %arg9: memref<1x4xf32, #tpu.memory_space<vmem>>, %arg10: memref<1x328x2xf32, #tpu.memory_space<vmem>>, %arg11: memref<1x1x2xf32, #tpu.memory_space<vmem>>) attributes {dimension_semantics = [#tpu.dimension_semantics<parallel>], iteration_bounds = array<i64: 2>, scalar_prefetch = 0 : i64, scratch_operands = 0 : i64, tpu.core_type = #tpu.core_type<tc>, window_params = [{transform_indices = @transform_0, window_bounds = array<i64: 1, 328, 2>}, {transform_indices = @transform_1, window_bounds = array<i64: 1, 328, 2>}, {pipeline_mode = #tpu.pipeline_mode<synchronous>, transform_indices = @transform_2, window_bounds = array<i64: 328, 1>}, {pipeline_mode = #tpu.pipeline_mode<synchronous>, transform_indices = @transform_3, window_bounds = array<i64: 18, 32>}, {pipeline_mode = #tpu.pipeline_mode<synchronous>, transform_indices = @transform_4, window_bounds = array<i64: 1, 32>}, {pipeline_mode = #tpu.pipeline_mode<synchronous>, transform_indices = @transform_5, window_bounds = array<i64: 32, 32>}, {pipeline_mode = #tpu.pipeline_mode<synchronous>, transform_indices = @transform_6, window_bounds = array<i64: 1, 32>}, {pipeline_mode = #tpu.pipeline_mode<synchronous>, transform_indices = @transform_7, window_bounds = array<i64: 32, 36>}, {pipeline_mode = #tpu.pipeline_mode<synchronous>, transform_indices = @transform_8, window_bounds = array<i64: 1, 4>}, {transform_indices = @transform_9, window_bounds = array<i64: 1, 328, 2>}, {transform_indices = @transform_10, window_bounds = array<i64: 1, 1, 2>}]} {
    %c0 = arith.constant 0 : index
    %c0_0 = arith.constant 0 : index
    %c0_1 = arith.constant 0 : index
    %0 = vector.load %arg1[%c0, %c0_0, %c0_1] : memref<1x328x2xf32, #tpu.memory_space<vmem>>, vector<1x328x2xf32>
    %1 = vector.shape_cast %0 : vector<1x328x2xf32> to vector<328x2xf32>
    %2 = tpu.concatenate %1, %1 in 0 : vector<328x2xf32>, vector<328x2xf32> -> vector<656x2xf32>
    %3 = vector.extract_strided_slice %2 {offsets = [309, 0], sizes = [328, 2], strides = [1, 1]} : vector<656x2xf32> to vector<328x2xf32>
    %4 = vector.extract_strided_slice %2 {offsets = [310, 0], sizes = [328, 2], strides = [1, 1]} : vector<656x2xf32> to vector<328x2xf32>
    %5 = vector.extract_strided_slice %2 {offsets = [311, 0], sizes = [328, 2], strides = [1, 1]} : vector<656x2xf32> to vector<328x2xf32>
    %6 = vector.extract_strided_slice %2 {offsets = [327, 0], sizes = [328, 2], strides = [1, 1]} : vector<656x2xf32> to vector<328x2xf32>
    %7 = vector.extract_strided_slice %2 {offsets = [0, 0], sizes = [328, 2], strides = [1, 1]} : vector<656x2xf32> to vector<328x2xf32>
    %8 = vector.extract_strided_slice %2 {offsets = [1, 0], sizes = [328, 2], strides = [1, 1]} : vector<656x2xf32> to vector<328x2xf32>
    %9 = vector.extract_strided_slice %2 {offsets = [17, 0], sizes = [328, 2], strides = [1, 1]} : vector<656x2xf32> to vector<328x2xf32>
    %10 = vector.extract_strided_slice %2 {offsets = [18, 0], sizes = [328, 2], strides = [1, 1]} : vector<656x2xf32> to vector<328x2xf32>
    %11 = vector.extract_strided_slice %2 {offsets = [19, 0], sizes = [328, 2], strides = [1, 1]} : vector<656x2xf32> to vector<328x2xf32>
    %12 = tpu.concatenate %3, %4, %5, %6, %7, %8, %9, %10, %11 in 1 : vector<328x2xf32>, vector<328x2xf32>, vector<328x2xf32>, vector<328x2xf32>, vector<328x2xf32>, vector<328x2xf32>, vector<328x2xf32>, vector<328x2xf32>, vector<328x2xf32> -> vector<328x18xf32>
    %13 = arith.truncf %12 : vector<328x18xf32> to vector<328x18xbf16>
    %c0_2 = arith.constant 0 : index
    %c0_3 = arith.constant 0 : index
    %14 = vector.load %arg4[%c0_2, %c0_3] : memref<18x32xbf16, #tpu.memory_space<vmem>>, vector<18x32xbf16>
    %cst = arith.constant dense<0.000000e+00> : vector<328x32xf32>
    %15 = tpu.matmul %13, %14, %cst {dimension_numbers = #tpu.dot_dimension_numbers<[1], [0], [0], [1], [0, 0, 1, 1], [], []>} : vector<328x18xbf16>, vector<18x32xbf16>, vector<328x32xf32> -> vector<328x32xf32>
    %c0_4 = arith.constant 0 : index
    %c0_5 = arith.constant 0 : index
    %16 = vector.load %arg5[%c0_4, %c0_5] : memref<1x32xf32, #tpu.memory_space<vmem>>, vector<1x32xf32>
    %17 = vector.broadcast %16 : vector<1x32xf32> to vector<328x32xf32>
    %18 = arith.addf %15, %17 : vector<328x32xf32>
    %cst_6 = arith.constant 0.000000e+00 : f32
    %19 = vector.broadcast %cst_6 : f32 to vector<328x32xf32>
    %20 = arith.maximumf %18, %19 : vector<328x32xf32>
    %21 = arith.truncf %20 : vector<328x32xf32> to vector<328x32xbf16>
    %c0_7 = arith.constant 0 : index
    %c0_8 = arith.constant 0 : index
    %22 = vector.load %arg6[%c0_7, %c0_8] : memref<32x32xbf16, #tpu.memory_space<vmem>>, vector<32x32xbf16>
    %cst_9 = arith.constant dense<0.000000e+00> : vector<328x32xf32>
    %23 = tpu.matmul %21, %22, %cst_9 {dimension_numbers = #tpu.dot_dimension_numbers<[1], [0], [0], [1], [0, 0, 1, 1], [], []>} : vector<328x32xbf16>, vector<32x32xbf16>, vector<328x32xf32> -> vector<328x32xf32>
    %c0_10 = arith.constant 0 : index
    %c0_11 = arith.constant 0 : index
    %24 = vector.load %arg7[%c0_10, %c0_11] : memref<1x32xf32, #tpu.memory_space<vmem>>, vector<1x32xf32>
    %25 = vector.broadcast %24 : vector<1x32xf32> to vector<328x32xf32>
    %26 = arith.addf %23, %25 : vector<328x32xf32>
    %cst_12 = arith.constant 0.000000e+00 : f32
    %27 = vector.broadcast %cst_12 : f32 to vector<328x32xf32>
    %28 = arith.maximumf %26, %27 : vector<328x32xf32>
    %c0_13 = arith.constant 0 : index
    %c0_14 = arith.constant 0 : index
    %29 = vector.load %arg3[%c0_13, %c0_14] : memref<328x1xf32, #tpu.memory_space<vmem>>, vector<328x1xf32>
    %cst_15 = arith.constant 5.000000e-01 : f32
    %30 = vector.broadcast %cst_15 : f32 to vector<328x1xf32>
    %31 = arith.cmpf ogt, %29, %30 : vector<328x1xf32>
    %cst_16 = arith.constant 1.000000e+00 : f32
    %32 = vector.shape_cast %31 : vector<328x1xi1> to vector<328x1xi1>
    %33 = vector.broadcast %32 : vector<328x1xi1> to vector<328x32xi1>
    %34 = vector.broadcast %cst_16 : f32 to vector<328x32xf32>
    %35 = arith.select %33, %28, %34 : vector<328x32xi1>, vector<328x32xf32>
    %36 = arith.truncf %35 : vector<328x32xf32> to vector<328x32xbf16>
    %c0_17 = arith.constant 0 : index
    %c0_18 = arith.constant 0 : index
    %37 = vector.load %arg8[%c0_17, %c0_18] : memref<32x36xbf16, #tpu.memory_space<vmem>>, vector<32x36xbf16>
    %cst_19 = arith.constant dense<0.000000e+00> : vector<328x36xf32>
    %38 = tpu.matmul %36, %37, %cst_19 {dimension_numbers = #tpu.dot_dimension_numbers<[1], [0], [0], [1], [0, 0, 1, 1], [], []>} : vector<328x32xbf16>, vector<32x36xbf16>, vector<328x36xf32> -> vector<328x36xf32>
    %39 = tpu.concatenate %38, %38 in 0 : vector<328x36xf32>, vector<328x36xf32> -> vector<656x36xf32>
    %cst_20 = arith.constant 0.000000e+00 : f32
    %40 = vector.broadcast %cst_20 : f32 to vector<328x4xf32>
    %41 = vector.extract_strided_slice %39 {offsets = [309, 0], sizes = [328, 4], strides = [1, 1]} : vector<656x36xf32> to vector<328x4xf32>
    %42 = arith.addf %40, %41 : vector<328x4xf32>
    %43 = vector.extract_strided_slice %39 {offsets = [310, 4], sizes = [328, 4], strides = [1, 1]} : vector<656x36xf32> to vector<328x4xf32>
    %44 = arith.addf %42, %43 : vector<328x4xf32>
    %45 = vector.extract_strided_slice %39 {offsets = [311, 8], sizes = [328, 4], strides = [1, 1]} : vector<656x36xf32> to vector<328x4xf32>
    %46 = arith.addf %44, %45 : vector<328x4xf32>
    %47 = vector.extract_strided_slice %39 {offsets = [327, 12], sizes = [328, 4], strides = [1, 1]} : vector<656x36xf32> to vector<328x4xf32>
    %48 = arith.addf %46, %47 : vector<328x4xf32>
    %49 = vector.extract_strided_slice %39 {offsets = [0, 16], sizes = [328, 4], strides = [1, 1]} : vector<656x36xf32> to vector<328x4xf32>
    %50 = arith.addf %48, %49 : vector<328x4xf32>
    %51 = vector.extract_strided_slice %39 {offsets = [1, 20], sizes = [328, 4], strides = [1, 1]} : vector<656x36xf32> to vector<328x4xf32>
    %52 = arith.addf %50, %51 : vector<328x4xf32>
    %53 = vector.extract_strided_slice %39 {offsets = [17, 24], sizes = [328, 4], strides = [1, 1]} : vector<656x36xf32> to vector<328x4xf32>
    %54 = arith.addf %52, %53 : vector<328x4xf32>
    %55 = vector.extract_strided_slice %39 {offsets = [18, 28], sizes = [328, 4], strides = [1, 1]} : vector<656x36xf32> to vector<328x4xf32>
    %56 = arith.addf %54, %55 : vector<328x4xf32>
    %57 = vector.extract_strided_slice %39 {offsets = [19, 32], sizes = [328, 4], strides = [1, 1]} : vector<656x36xf32> to vector<328x4xf32>
    %58 = arith.addf %56, %57 : vector<328x4xf32>
    %c0_21 = arith.constant 0 : index
    %c0_22 = arith.constant 0 : index
    %59 = vector.load %arg9[%c0_21, %c0_22] : memref<1x4xf32, #tpu.memory_space<vmem>>, vector<1x4xf32>
    %60 = vector.broadcast %59 : vector<1x4xf32> to vector<328x4xf32>
    %61 = arith.addf %58, %60 : vector<328x4xf32>
    %62 = vector.extract_strided_slice %61 {offsets = [0, 0], sizes = [328, 2], strides = [1, 1]} : vector<328x4xf32> to vector<328x2xf32>
    %63 = vector.extract_strided_slice %61 {offsets = [0, 2], sizes = [328, 2], strides = [1, 1]} : vector<328x4xf32> to vector<328x2xf32>
    %cst_23 = arith.constant 2.000000e+00 : f32
    %64 = vector.broadcast %cst_23 : f32 to vector<328x2xf32>
    %65 = arith.addf %62, %64 : vector<328x2xf32>
    %66 = arith.negf %65 : vector<328x2xf32>
    %67 = math.exp %66 : vector<328x2xf32>
    %cst_24 = arith.constant 1.000000e+00 : f32
    %68 = vector.broadcast %cst_24 : f32 to vector<328x2xf32>
    %69 = arith.addf %68, %67 : vector<328x2xf32>
    %70 = arith.divf %68, %69 : vector<328x2xf32>
    %c0_25 = arith.constant 0 : index
    %c0_26 = arith.constant 0 : index
    %c0_27 = arith.constant 0 : index
    %71 = vector.load %arg2[%c0_25, %c0_26, %c0_27] : memref<1x328x2xf32, #tpu.memory_space<vmem>>, vector<1x328x2xf32>
    %72 = vector.shape_cast %71 : vector<1x328x2xf32> to vector<328x2xf32>
    %73 = arith.addf %72, %63 : vector<328x2xf32>
    %74 = arith.mulf %73, %70 : vector<328x2xf32>
    %c0_28 = arith.constant 0 : index
    %c0_29 = arith.constant 0 : index
    %c0_30 = arith.constant 0 : index
    %75 = vector.load %arg10[%c0_28, %c0_29, %c0_30] : memref<1x328x2xf32, #tpu.memory_space<vmem>>, vector<1x328x2xf32>
    %76 = vector.shape_cast %75 : vector<1x328x2xf32> to vector<328x2xf32>
    %77 = vector.shape_cast %74 : vector<328x2xf32> to vector<1x328x2xf32>
    tpu.vector_store %arg10[%c0_28, %c0_29, %c0_30], %77 {strides = array<i32>} : memref<1x328x2xf32, #tpu.memory_space<vmem>>, vector<1x328x2xf32>,
    %cst_31 = arith.constant 5.000000e-01 : f32
    %78 = vector.broadcast %cst_31 : f32 to vector<328x1xf32>
    %79 = arith.cmpf ogt, %29, %78 : vector<328x1xf32>
    %80 = math.log %70 : vector<328x2xf32>
    %cst_32 = arith.constant 0.000000e+00 : f32
    %81 = vector.shape_cast %79 : vector<328x1xi1> to vector<328x1xi1>
    %82 = vector.broadcast %81 : vector<328x1xi1> to vector<328x2xi1>
    %83 = vector.broadcast %cst_32 : f32 to vector<328x2xf32>
    %84 = arith.select %82, %80, %83 : vector<328x2xi1>, vector<328x2xf32>
    %cst_33 = arith.constant dense<0.000000e+00> : vector<2xf32>
    %85 = vector.multi_reduction <add>, %84, %cst_33 [0] : vector<328x2xf32> to vector<2xf32>
    %86 = vector.shape_cast %85 : vector<2xf32> to vector<1x2xf32>
    %c0_34 = arith.constant 0 : index
    %c0_35 = arith.constant 0 : index
    %c0_36 = arith.constant 0 : index
    %87 = vector.load %arg11[%c0_34, %c0_35, %c0_36] : memref<1x1x2xf32, #tpu.memory_space<vmem>>, vector<1x1x2xf32>
    %88 = vector.shape_cast %87 : vector<1x1x2xf32> to vector<1x2xf32>
    %89 = vector.shape_cast %86 : vector<1x2xf32> to vector<1x1x2xf32>
    tpu.vector_store %arg11[%c0_34, %c0_35, %c0_36], %89 {strides = array<i32>} : memref<1x1x2xf32, #tpu.memory_space<vmem>>, vector<1x1x2xf32>,
    return
  }
  func.func @transform_0(%arg0: i32) -> (i32, i32, i32) {
    %c0_i32 = arith.constant 0 : i32
    %c0_i32_0 = arith.constant 0 : i32
    %c0_i32_1 = arith.constant 0 : i32
    return %arg0, %c0_i32, %c0_i32_0 : i32, i32, i32
  }
  func.func @transform_1(%arg0: i32) -> (i32, i32, i32) {
    %c0_i32 = arith.constant 0 : i32
    %c0_i32_0 = arith.constant 0 : i32
    %c0_i32_1 = arith.constant 0 : i32
    return %arg0, %c0_i32, %c0_i32_0 : i32, i32, i32
  }
  func.func @transform_2(%arg0: i32) -> (i32, i32) {
    %c0_i32 = arith.constant 0 : i32
    %c0_i32_0 = arith.constant 0 : i32
    %c0_i32_1 = arith.constant 0 : i32
    return %c0_i32, %c0_i32_0 : i32, i32
  }
  func.func @transform_3(%arg0: i32) -> (i32, i32) {
    %c0_i32 = arith.constant 0 : i32
    %c0_i32_0 = arith.constant 0 : i32
    %c0_i32_1 = arith.constant 0 : i32
    return %c0_i32, %c0_i32_0 : i32, i32
  }
  func.func @transform_4(%arg0: i32) -> (i32, i32) {
    %c0_i32 = arith.constant 0 : i32
    %c0_i32_0 = arith.constant 0 : i32
    %c0_i32_1 = arith.constant 0 : i32
    return %c0_i32, %c0_i32_0 : i32, i32
  }
  func.func @transform_5(%arg0: i32) -> (i32, i32) {
    %c0_i32 = arith.constant 0 : i32
    %c0_i32_0 = arith.constant 0 : i32
    %c0_i32_1 = arith.constant 0 : i32
    return %c0_i32, %c0_i32_0 : i32, i32
  }
  func.func @transform_6(%arg0: i32) -> (i32, i32) {
    %c0_i32 = arith.constant 0 : i32
    %c0_i32_0 = arith.constant 0 : i32
    %c0_i32_1 = arith.constant 0 : i32
    return %c0_i32, %c0_i32_0 : i32, i32
  }
  func.func @transform_7(%arg0: i32) -> (i32, i32) {
    %c0_i32 = arith.constant 0 : i32
    %c0_i32_0 = arith.constant 0 : i32
    %c0_i32_1 = arith.constant 0 : i32
    return %c0_i32, %c0_i32_0 : i32, i32
  }
  func.func @transform_8(%arg0: i32) -> (i32, i32) {
    %c0_i32 = arith.constant 0 : i32
    %c0_i32_0 = arith.constant 0 : i32
    %c0_i32_1 = arith.constant 0 : i32
    return %c0_i32, %c0_i32_0 : i32, i32
  }
  func.func @transform_9(%arg0: i32) -> (i32, i32, i32) {
    %c0_i32 = arith.constant 0 : i32
    %c0_i32_0 = arith.constant 0 : i32
    %c0_i32_1 = arith.constant 0 : i32
    return %arg0, %c0_i32, %c0_i32_0 : i32, i32, i32
  }
  func.func @transform_10(%arg0: i32) -> (i32, i32, i32) {
    %c0_i32 = arith.constant 0 : i32
    %c0_i32_0 = arith.constant 0 : i32
    %c0_i32_1 = arith.constant 0 : i32
    return %arg0, %c0_i32, %c0_i32_0 : i32, i32, i32
  }
}

</mosaic_0001>

<llo_original>
// kernel: affine_coupling_forward.1
$region0: #{affine_coupling_forward.1}
  #allocation0 [shape = 'u32[]', space=smem, size = 0x4, offset = 0x4, fixed_abs, tag = 'smem constant byte address 0x4 - core index']
  #allocation1 [shape = 'u32[144,128]{1,0:T(1,128)}', space=vmem, size = 0x12000, scoped, tag = 'internal scratch']
  %s0 = inlined_call_operand.vmem [shape: f32[2,328,2], index: 0, kind: input, shape index: {}]
  %s1 = inlined_call_operand.vmem [shape: f32[2,328,2], index: 1, kind: input, shape index: {}]
  %s2 = inlined_call_operand.vmem [shape: f32[328,1], index: 2, kind: input, shape index: {}]
  %s3 = inlined_call_operand.vmem [shape: bf16[18,32], index: 3, kind: input, shape index: {}]
  %s4 = inlined_call_operand.vmem [shape: f32[1,32], index: 4, kind: input, shape index: {}]
  %s5 = inlined_call_operand.vmem [shape: bf16[32,32], index: 5, kind: input, shape index: {}]
  %s6 = inlined_call_operand.vmem [shape: f32[1,32], index: 6, kind: input, shape index: {}]
  %s7 = inlined_call_operand.vmem [shape: bf16[32,36], index: 7, kind: input, shape index: {}]
  %s8 = inlined_call_operand.vmem [shape: f32[1,4], index: 8, kind: input, shape index: {}]
  %s9 = inlined_call_operand.vmem [shape: f32[2,328,2], index: 9, kind: output, shape index: {0}]
  %s10 = inlined_call_operand.vmem [shape: f32[2,1,2], index: 10, kind: output, shape index: {1}]
  %11 = xla_tuple %s9, %s10
  %s12 = sld [smem:[#allocation0]]
  $region77: #{affine_coupling_forward.1} parent=0
    _
  %s14 = ssub.s32 1, %s12
  %s15 = scalar_select 0, %s14, %s12
  loop: start=0, step=1, limit=4
  $region2: #{affine_coupling_forward.1} parent=0 // loop_pre_header
    _
  $region3: #{affine_coupling_forward.1} parent=0 // loop_header
    %s17 = sphi 0, %s21
    %p18 = scmp.ge.s32.totalorder %s17, 4
    %s27 = sphi 0, %s29
    %s30 = sphi 0, %s27
    %s31 = sphi 0, %s30
    %s47 = sphi 0, %s31
    %s53 = sphi 0, %s55
    %s56 = sphi 0, %s53
    %s57 = sphi 0, %s56
    %s73 = sphi 0, %s57
    %s77 = sphi 0, %s77
    %s79 = sphi 0, %s77
    %s80 = sphi 0, %s79
    %s94 = sphi 0, %s80
    %s98 = sphi 0, %s98
    %s100 = sphi 0, %s98
    %s101 = sphi 0, %s100
    %s115 = sphi 0, %s101
    %s119 = sphi 0, %s119
    %s121 = sphi 0, %s119
    %s122 = sphi 0, %s121
    %s136 = sphi 0, %s122
    %s140 = sphi 0, %s140
    %s142 = sphi 0, %s140
    %s143 = sphi 0, %s142
    %s157 = sphi 0, %s143
    %s161 = sphi 0, %s161
    %s163 = sphi 0, %s161
    %s164 = sphi 0, %s163
    %s178 = sphi 0, %s164
    %s182 = sphi 0, %s182
    %s184 = sphi 0, %s182
    %s185 = sphi 0, %s184
    %s199 = sphi 0, %s185
    %s203 = sphi 0, %s203
    %s205 = sphi 0, %s203
    %s206 = sphi 0, %s205
    %s220 = sphi 0, %s206
    %s226 = sphi 0, %s228
    %s229 = sphi 0, %s226
    %s230 = sphi 0, %s229
    %s246 = sphi 0, %s230
    %s252 = sphi 0, %s254
    %s255 = sphi 0, %s252
    %s256 = sphi 0, %s255
    %s272 = sphi 0, %s256
  $region4: #{affine_coupling_forward.1} parent=0 // loop_header_branch
    %20 = sbr.rel (%p18) target = $region8
  $region5: #{affine_coupling_forward.1} parent=0 // loop_body
    %s22 = ssub.s32 %s17, 1
    %s23 = ssub.s32 %s17, 2
    %s24 = sadd.s32 %s17, 1
    %s25 = ssub.s32 %s17, %s24
    %p26 = scmp.eq.s32.totalorder %s25, 0
    %s28 = sadd.s32 %s27, 1
    %s29 = scalar_select %p26, %s27, %s28
    %p32 = pneg %p26
    %p33 = scmp.eq.s32.totalorder %s17, 1
    %p34 = por %p32, %p33
    %p35 = scmp.ne.s32.totalorder %s27, %s30
    %p36 = scmp.eq.s32.totalorder %s17, 0
    %p37 = por %p35, %p36
    %p38 = scmp.ne.s32.totalorder %s27, %s30
    %p39 = scmp.eq.s32.totalorder %s22, 1
    %p40 = por %p38, %p39
    %p41 = scmp.ne.s32.totalorder %s30, %s31
    %p42 = scmp.eq.s32.totalorder %s22, 0
    %p43 = por %p41, %p42
    %p44 = scmp.ne.s32.totalorder %s30, %s31
    %p45 = scmp.eq.s32.totalorder %s23, 1
    %p46 = por %p44, %p45
    %p48 = scmp.ne.s32.totalorder %s31, %s47
    %p49 = scmp.eq.s32.totalorder %s23, 0
    %p50 = por %p48, %p49
    %s51 = ssub.s32 %s17, %s24
    %p52 = scmp.eq.s32.totalorder %s51, 0
    %s54 = sadd.s32 %s53, 1
    %s55 = scalar_select %p52, %s53, %s54
    %p58 = pneg %p52
    %p59 = scmp.eq.s32.totalorder %s17, 1
    %p60 = por %p58, %p59
    %p61 = scmp.ne.s32.totalorder %s53, %s56
    %p62 = scmp.eq.s32.totalorder %s17, 0
    %p63 = por %p61, %p62
    %p64 = scmp.ne.s32.totalorder %s53, %s56
    %p65 = scmp.eq.s32.totalorder %s22, 1
    %p66 = por %p64, %p65
    %p67 = scmp.ne.s32.totalorder %s56, %s57
    %p68 = scmp.eq.s32.totalorder %s22, 0
    %p69 = por %p67, %p68
    %p70 = scmp.ne.s32.totalorder %s56, %s57
    %p71 = scmp.eq.s32.totalorder %s23, 1
    %p72 = por %p70, %p71
    %p74 = scmp.ne.s32.totalorder %s57, %s73
    %p75 = scmp.eq.s32.totalorder %s23, 0
    %p76 = por %p74, %p75
    %s78 = sadd.s32 %s77, 1
    %p81 = scmp.eq.s32.totalorder %s17, 1
    %p82 = scmp.ne.s32.totalorder %s77, %s79
    %p83 = scmp.eq.s32.totalorder %s17, 0
    %p84 = por %p82, %p83
    %p85 = scmp.ne.s32.totalorder %s77, %s79
    %p86 = scmp.eq.s32.totalorder %s22, 1
    %p87 = por %p85, %p86
    %p88 = scmp.ne.s32.totalorder %s79, %s80
    %p89 = scmp.eq.s32.totalorder %s22, 0
    %p90 = por %p88, %p89
    %p91 = scmp.ne.s32.totalorder %s79, %s80
    %p92 = scmp.eq.s32.totalorder %s23, 1
    %p93 = por %p91, %p92
    %p95 = scmp.ne.s32.totalorder %s80, %s94
    %p96 = scmp.eq.s32.totalorder %s23, 0
    %p97 = por %p95, %p96
    %s99 = sadd.s32 %s98, 1
    %p102 = scmp.eq.s32.totalorder %s17, 1
    %p103 = scmp.ne.s32.totalorder %s98, %s100
    %p104 = scmp.eq.s32.totalorder %s17, 0
    %p105 = por %p103, %p104
    %p106 = scmp.ne.s32.totalorder %s98, %s100
    %p107 = scmp.eq.s32.totalorder %s22, 1
    %p108 = por %p106, %p107
    %p109 = scmp.ne.s32.totalorder %s100, %s101
    %p110 = scmp.eq.s32.totalorder %s22, 0
    %p111 = por %p109, %p110
    %p112 = scmp.ne.s32.totalorder %s100, %s101
    %p113 = scmp.eq.s32.totalorder %s23, 1
    %p114 = por %p112, %p113
    %p116 = scmp.ne.s32.totalorder %s101, %s115
    %p117 = scmp.eq.s32.totalorder %s23, 0
    %p118 = por %p116, %p117
    %s120 = sadd.s32 %s119, 1
    %p123 = scmp.eq.s32.totalorder %s17, 1
    %p124 = scmp.ne.s32.totalorder %s119, %s121
    %p125 = scmp.eq.s32.totalorder %s17, 0
    %p126 = por %p124, %p125
    %p127 = scmp.ne.s32.totalorder %s119, %s121
    %p128 = scmp.eq.s32.totalorder %s22, 1
    %p129 = por %p127, %p128
    %p130 = scmp.ne.s32.totalorder %s121, %s122
    %p131 = scmp.eq.s32.totalorder %s22, 0
    %p132 = por %p130, %p131
    %p133 = scmp.ne.s32.totalorder %s121, %s122
    %p134 = scmp.eq.s32.totalorder %s23, 1
    %p135 = por %p133, %p134
    %p137 = scmp.ne.s32.totalorder %s122, %s136
    %p138 = scmp.eq.s32.totalorder %s23, 0
    %p139 = por %p137, %p138
    %s141 = sadd.s32 %s140, 1
    %p144 = scmp.eq.s32.totalorder %s17, 1
    %p145 = scmp.ne.s32.totalorder %s140, %s142
    %p146 = scmp.eq.s32.totalorder %s17, 0
    %p147 = por %p145, %p146
    %p148 = scmp.ne.s32.totalorder %s140, %s142
    %p149 = scmp.eq.s32.totalorder %s22, 1
    %p150 = por %p148, %p149
    %p151 = scmp.ne.s32.totalorder %s142, %s143
    %p152 = scmp.eq.s32.totalorder %s22, 0
    %p153 = por %p151, %p152
    %p154 = scmp.ne.s32.totalorder %s142, %s143
    %p155 = scmp.eq.s32.totalorder %s23, 1
    %p156 = por %p154, %p155
    %p158 = scmp.ne.s32.totalorder %s143, %s157
    %p159 = scmp.eq.s32.totalorder %s23, 0
    %p160 = por %p158, %p159
    %s162 = sadd.s32 %s161, 1
    %p165 = scmp.eq.s32.totalorder %s17, 1
    %p166 = scmp.ne.s32.totalorder %s161, %s163
    %p167 = scmp.eq.s32.totalorder %s17, 0
    %p168 = por %p166, %p167
    %p169 = scmp.ne.s32.totalorder %s161, %s163
    %p170 = scmp.eq.s32.totalorder %s22, 1
    %p171 = por %p169, %p170
    %p172 = scmp.ne.s32.totalorder %s163, %s164
    %p173 = scmp.eq.s32.totalorder %s22, 0
    %p174 = por %p172, %p173
    %p175 = scmp.ne.s32.totalorder %s163, %s164
    %p176 = scmp.eq.s32.totalorder %s23, 1
    %p177 = por %p175, %p176
    %p179 = scmp.ne.s32.totalorder %s164, %s178
    %p180 = scmp.eq.s32.totalorder %s23, 0
    %p181 = por %p179, %p180
    %s183 = sadd.s32 %s182, 1
    %p186 = scmp.eq.s32.totalorder %s17, 1
    %p187 = scmp.ne.s32.totalorder %s182, %s184
    %p188 = scmp.eq.s32.totalorder %s17, 0
    %p189 = por %p187, %p188
    %p190 = scmp.ne.s32.totalorder %s182, %s184
    %p191 = scmp.eq.s32.totalorder %s22, 1
    %p192 = por %p190, %p191
    %p193 = scmp.ne.s32.totalorder %s184, %s185
    %p194 = scmp.eq.s32.totalorder %s22, 0
    %p195 = por %p193, %p194
    %p196 = scmp.ne.s32.totalorder %s184, %s185
    %p197 = scmp.eq.s32.totalorder %s23, 1
    %p198 = por %p196, %p197
    %p200 = scmp.ne.s32.totalorder %s185, %s199
    %p201 = scmp.eq.s32.totalorder %s23, 0
    %p202 = por %p200, %p201
    %s204 = sadd.s32 %s203, 1
    %p207 = scmp.eq.s32.totalorder %s17, 1
    %p208 = scmp.ne.s32.totalorder %s203, %s205
    %p209 = scmp.eq.s32.totalorder %s17, 0
    %p210 = por %p208, %p209
    %p211 = scmp.ne.s32.totalorder %s203, %s205
    %p212 = scmp.eq.s32.totalorder %s22, 1
    %p213 = por %p211, %p212
    %p214 = scmp.ne.s32.totalorder %s205, %s206
    %p215 = scmp.eq.s32.totalorder %s22, 0
    %p216 = por %p214, %p215
    %p217 = scmp.ne.s32.totalorder %s205, %s206
    %p218 = scmp.eq.s32.totalorder %s23, 1
    %p219 = por %p217, %p218
    %p221 = scmp.ne.s32.totalorder %s206, %s220
    %p222 = scmp.eq.s32.totalorder %s23, 0
    %p223 = por %p221, %p222
    %s224 = ssub.s32 %s17, %s24
    %p225 = scmp.eq.s32.totalorder %s224, 0
    %s227 = sadd.s32 %s226, 1
    %s228 = scalar_select %p225, %s226, %s227
    %p231 = pneg %p225
    %p232 = scmp.eq.s32.totalorder %s17, 1
    %p233 = por %p231, %p232
    %p234 = scmp.ne.s32.totalorder %s226, %s229
    %p235 = scmp.eq.s32.totalorder %s17, 0
    %p236 = por %p234, %p235
    %p237 = scmp.ne.s32.totalorder %s226, %s229
    %p238 = scmp.eq.s32.totalorder %s22, 1
    %p239 = por %p237, %p238
    %p240 = scmp.ne.s32.totalorder %s229, %s230
    %p241 = scmp.eq.s32.totalorder %s22, 0
    %p242 = por %p240, %p241
    %p243 = scmp.ne.s32.totalorder %s229, %s230
    %p244 = scmp.eq.s32.totalorder %s23, 1
    %p245 = por %p243, %p244
    %p247 = scmp.ne.s32.totalorder %s230, %s246
    %p248 = scmp.eq.s32.totalorder %s23, 0
    %p249 = por %p247, %p248
    %s250 = ssub.s32 %s17, %s24
    %p251 = scmp.eq.s32.totalorder %s250, 0
    %s253 = sadd.s32 %s252, 1
    %s254 = scalar_select %p251, %s252, %s253
    %p257 = pneg %p251
    %p258 = scmp.eq.s32.totalorder %s17, 1
    %p259 = por %p257, %p258
    %p260 = scmp.ne.s32.totalorder %s252, %s255
    %p261 = scmp.eq.s32.totalorder %s17, 0
    %p262 = por %p260, %p261
    %p263 = scmp.ne.s32.totalorder %s252, %s255
    %p264 = scmp.eq.s32.totalorder %s22, 1
    %p265 = por %p263, %p264
    %p266 = scmp.ne.s32.totalorder %s255, %s256
    %p267 = scmp.eq.s32.totalorder %s22, 0
    %p268 = por %p266, %p267
    %p269 = scmp.ne.s32.totalorder %s255, %s256
    %p270 = scmp.eq.s32.totalorder %s23, 1
    %p271 = por %p269, %p270
    %p273 = scmp.ne.s32.totalorder %s256, %s272
    %p274 = scmp.eq.s32.totalorder %s23, 0
    %p275 = por %p273, %p274
    %p276 = scmp.le.s32.totalorder 1, %s17
    %p277 = scmp.lt.s32.totalorder %s17, 3
    %p278 = pnand %p276, %p277
    %p279 = pneg %p278
    // Predicated region
    $region9: #{affine_coupling_forward.1} parent=5 // pred_check
      _
    $region10: #{affine_coupling_forward.1} parent=5 // pred_check_branch
      %281 = sbr.rel (%p278) target = $region12
    $region11: #{affine_coupling_forward.1} parent=5 // pred_region
      %s282 = ssub.s32 %s17, 1
      // Predicated region
      $region13: #{affine_coupling_forward.1} parent=11 // pred_check
        %p283 = pneg %p90
      $region14: #{affine_coupling_forward.1} parent=11 // pred_check_branch
        %285 = sbr.rel (%p283) target = $region16
      $region15: #{affine_coupling_forward.1} parent=11 // pred_region
        _
      $region16: #{affine_coupling_forward.1} parent=11 // pred_fallthru
        _
      // Predicated region
      $region17: #{affine_coupling_forward.1} parent=11 // pred_check
        %p286 = pneg %p111
      $region18: #{affine_coupling_forward.1} parent=11 // pred_check_branch
        %288 = sbr.rel (%p286) target = $region20
      $region19: #{affine_coupling_forward.1} parent=11 // pred_region
        _
      $region20: #{affine_coupling_forward.1} parent=11 // pred_fallthru
        _
      // Predicated region
      $region21: #{affine_coupling_forward.1} parent=11 // pred_check
        %p289 = pneg %p132
      $region22: #{affine_coupling_forward.1} parent=11 // pred_check_branch
        %291 = sbr.rel (%p289) target = $region24
      $region23: #{affine_coupling_forward.1} parent=11 // pred_region
        _
      $region24: #{affine_coupling_forward.1} parent=11 // pred_fallthru
        _
      // Predicated region
      $region25: #{affine_coupling_forward.1} parent=11 // pred_check
        %p292 = pneg %p153
      $region26: #{affine_coupling_forward.1} parent=11 // pred_check_branch
        %294 = sbr.rel (%p292) target = $region28
      $region27: #{affine_coupling_forward.1} parent=11 // pred_region
        _
      $region28: #{affine_coupling_forward.1} parent=11 // pred_fallthru
        _
      // Predicated region
      $region29: #{affine_coupling_forward.1} parent=11 // pred_check
        %p295 = pneg %p174
      $region30: #{affine_coupling_forward.1} parent=11 // pred_check_branch
        %297 = sbr.rel (%p295) target = $region32
      $region31: #{affine_coupling_forward.1} parent=11 // pred_region
        _
      $region32: #{affine_coupling_forward.1} parent=11 // pred_fallthru
        _
      // Predicated region
      $region33: #{affine_coupling_forward.1} parent=11 // pred_check
        %p298 = pneg %p195
      $region34: #{affine_coupling_forward.1} parent=11 // pred_check_branch
        %300 = sbr.rel (%p298) target = $region36
      $region35: #{affine_coupling_forward.1} parent=11 // pred_region
        _
      $region36: #{affine_coupling_forward.1} parent=11 // pred_fallthru
        _
      // Predicated region
      $region37: #{affine_coupling_forward.1} parent=11 // pred_check
        %p301 = pneg %p216
      $region38: #{affine_coupling_forward.1} parent=11 // pred_check_branch
        %303 = sbr.rel (%p301) target = $region40
      $region39: #{affine_coupling_forward.1} parent=11 // pred_region
        _
      $region40: #{affine_coupling_forward.1} parent=11 // pred_fallthru
        _
    $region12: #{affine_coupling_forward.1} parent=5 // pred_fallthru
      _
    %p304 = scmp.lt.s32.totalorder %s17, 2
    // Predicated region
    $region41: #{affine_coupling_forward.1} parent=5 // pred_check
      %p305 = pneg %p304
    $region42: #{affine_coupling_forward.1} parent=5 // pred_check_branch
      %307 = sbr.rel (%p305) target = $region44
    $region43: #{affine_coupling_forward.1} parent=5 // pred_region
      // Predicated region
      $region45: #{affine_coupling_forward.1} parent=43 // pred_check
        %p308 = pneg %p37
      $region46: #{affine_coupling_forward.1} parent=43 // pred_check_branch
        %310 = sbr.rel (%p308) target = $region48
      $region47: #{affine_coupling_forward.1} parent=43 // pred_region
        %p311 = scmp.lt.s32.totalorder %s17, 1
        %s312 = scalar_select %p311, %s17, 1
        %s313 = smul.addr %s312, 41
        %s314 = smul.addr %s313, 8
        %s315 = scalar_lea.vmem %s0, %s314
      $region48: #{affine_coupling_forward.1} parent=43 // pred_fallthru
        _
      // Predicated region
      $region49: #{affine_coupling_forward.1} parent=43 // pred_check
        %p316 = pneg %p63
      $region50: #{affine_coupling_forward.1} parent=43 // pred_check_branch
        %318 = sbr.rel (%p316) target = $region52
      $region51: #{affine_coupling_forward.1} parent=43 // pred_region
        %p319 = scmp.lt.s32.totalorder %s17, 1
        %s320 = scalar_select %p319, %s17, 1
        %s321 = smul.addr %s320, 41
        %s322 = smul.addr %s321, 8
        %s323 = scalar_lea.vmem %s1, %s322
      $region52: #{affine_coupling_forward.1} parent=43 // pred_fallthru
        _
    $region44: #{affine_coupling_forward.1} parent=5 // pred_fallthru
      _
    %p324 = scmp.le.s32.totalorder 1, %s17
    %p325 = scmp.lt.s32.totalorder %s17, 3
    %p326 = pnand %p324, %p325
    %p327 = pneg %p326
    // Predicated region
    $region53: #{affine_coupling_forward.1} parent=5 // pred_check
      _
    $region54: #{affine_coupling_forward.1} parent=5 // pred_check_branch
      %329 = sbr.rel (%p326) target = $region56
    $region55: #{affine_coupling_forward.1} parent=5 // pred_region
      %s330 = ssub.s32 %s17, 1
      %p331 = scmp.lt.s32.totalorder %s22, 1
      %s332 = scalar_select %p331, %s22, 1
      %s333 = smul.addr %s332, 41
      %s334 = smul.addr %s333, 8
      %s335 = scalar_lea.vmem %s0, %s334
      %p336 = pneg %p43
      %p337 = pneg %p40
      %p338 = scmp.lt.s32.totalorder %s22, 1
      %s339 = scalar_select %p338, %s22, 1
      %s340 = smul.addr %s339, 41
      %s341 = smul.addr %s340, 8
      %s342 = scalar_lea.vmem %s1, %s341
      %p343 = pneg %p69
      %p344 = pneg %p66
      %p345 = pneg %p90
      %p346 = pneg %p87
      %p347 = pneg %p111
      %p348 = pneg %p108
      %p349 = pneg %p132
      %p350 = pneg %p129
      %p351 = pneg %p153
      %p352 = pneg %p150
      %p353 = pneg %p174
      %p354 = pneg %p171
      %p355 = pneg %p195
      %p356 = pneg %p192
      %p357 = pneg %p216
      %p358 = pneg %p213
      %p359 = pneg %p242
      %p360 = pneg %p239
      %p361 = scmp.lt.s32.totalorder %s22, 1
      %s362 = scalar_select %p361, %s22, 1
      %s363 = smul.addr %s362, 41
      %s364 = smul.addr %s363, 8
      %s365 = scalar_lea.vmem %s9, %s364
      %p366 = pneg %p268
      %p367 = pneg %p265
      %p368 = scmp.lt.s32.totalorder %s22, 1
      %s369 = scalar_select %p368, %s22, 1
      %s370 = scalar_lea.vmem %s10, %s369
      %p371 = scmp.lt.s32.totalorder %s22, 1
      %s372 = scalar_select %p371, %s22, 1
      %s373 = smul.addr %s372, 41
      %s374 = smul.addr %s373, 8
      %s375 = scalar_lea.vmem %s0, %s374
      %p376 = scmp.lt.s32.totalorder %s22, 1
      %s377 = scalar_select %p376, %s22, 1
      %s378 = smul.addr %s377, 41
      %s379 = smul.addr %s378, 8
      %s380 = scalar_lea.vmem %s1, %s379
      %p381 = scmp.lt.s32.totalorder %s22, 1
      %s382 = scalar_select %p381, %s22, 1
      %s383 = smul.addr %s382, 41
      %s384 = smul.addr %s383, 8
      %s385 = scalar_lea.vmem %s9, %s384
      %p386 = scmp.lt.s32.totalorder %s22, 1
      %s387 = scalar_select %p386, %s22, 1
      %s388 = scalar_lea.vmem %s10, %s387
      %v390 = vld [vmem:[%s375] sm:$0xff]
      %v391 = vld [vmem:[%s375 + $0x8] sm:$0xff]
      %v392 = vld [vmem:[%s375 + $0x10] sm:$0xff]
      %v393 = vld [vmem:[%s375 + $0x18] sm:$0xff]
      %v394 = vld [vmem:[%s375 + $0x20] sm:$0xff]
      %v395 = vld [vmem:[%s375 + $0x28] sm:$0xff]
      %v396 = vld [vmem:[%s375 + $0x30] sm:$0xff]
      %v397 = vld [vmem:[%s375 + $0x38] sm:$0xff]
      %v398 = vld [vmem:[%s375 + $0x40] sm:$0xff]
      %v399 = vld [vmem:[%s375 + $0x48] sm:$0xff]
      %v400 = vld [vmem:[%s375 + $0x50] sm:$0xff]
      %v401 = vld [vmem:[%s375 + $0x58] sm:$0xff]
      %v402 = vld [vmem:[%s375 + $0x60] sm:$0xff]
      %v403 = vld [vmem:[%s375 + $0x68] sm:$0xff]
      %v404 = vld [vmem:[%s375 + $0x70] sm:$0xff]
      %v405 = vld [vmem:[%s375 + $0x78] sm:$0xff]
      %v406 = vld [vmem:[%s375 + $0x80] sm:$0xff]
      %v407 = vld [vmem:[%s375 + $0x88] sm:$0xff]
      %v408 = vld [vmem:[%s375 + $0x90] sm:$0xff]
      %v409 = vld [vmem:[%s375 + $0x98] sm:$0xff]
      %v410 = vld [vmem:[%s375 + $0xa0] sm:$0xff]
      %v411 = vld [vmem:[%s375 + $0xa8] sm:$0xff]
      %v412 = vld [vmem:[%s375 + $0xb0] sm:$0xff]
      %v413 = vld [vmem:[%s375 + $0xb8] sm:$0xff]
      %v414 = vld [vmem:[%s375 + $0xc0] sm:$0xff]
      %v415 = vld [vmem:[%s375 + $0xc8] sm:$0xff]
      %v416 = vld [vmem:[%s375 + $0xd0] sm:$0xff]
      %v417 = vld [vmem:[%s375 + $0xd8] sm:$0xff]
      %v418 = vld [vmem:[%s375 + $0xe0] sm:$0xff]
      %v419 = vld [vmem:[%s375 + $0xe8] sm:$0xff]
      %v420 = vld [vmem:[%s375 + $0xf0] sm:$0xff]
      %v421 = vld [vmem:[%s375 + $0xf8] sm:$0xff]
      %v422 = vld [vmem:[%s375 + $0x100] sm:$0xff]
      %v423 = vld [vmem:[%s375 + $0x108] sm:$0xff]
      %v424 = vld [vmem:[%s375 + $0x110] sm:$0xff]
      %v425 = vld [vmem:[%s375 + $0x118] sm:$0xff]
      %v426 = vld [vmem:[%s375 + $0x120] sm:$0xff]
      %v427 = vld [vmem:[%s375 + $0x128] sm:$0xff]
      %v428 = vld [vmem:[%s375 + $0x130] sm:$0xff]
      %v429 = vld [vmem:[%s375 + $0x138] sm:$0xff]
      %v430 = vld [vmem:[%s375 + $0x140] sm:$0xff]
      %vm472 = vcmask 1046528
      %v473 = vrot.slane %v428, 1
      %v474 = vrot.slane %v429, 1
      %v475 = vsel %vm472, %v473, %v474
      %v476 = vrot.slane %v430, 1
      %v477 = vsel %vm472, %v474, %v476
      %v478 = vrot.slane %v390, 1
      %v479 = vsel %vm472, %v476, %v478
      %v480 = vrot.slane %v391, 1
      %v481 = vsel %vm472, %v478, %v480
      %v482 = vrot.slane %v392, 1
      %v483 = vsel %vm472, %v480, %v482
      %v484 = vrot.slane %v393, 1
      %v485 = vsel %vm472, %v482, %v484
      %v486 = vrot.slane %v394, 1
      %v487 = vsel %vm472, %v484, %v486
      %v488 = vrot.slane %v395, 1
      %v489 = vsel %vm472, %v486, %v488
      %v490 = vrot.slane %v396, 1
      %v491 = vsel %vm472, %v488, %v490
      %v492 = vrot.slane %v397, 1
      %v493 = vsel %vm472, %v490, %v492
      %v494 = vrot.slane %v398, 1
      %v495 = vsel %vm472, %v492, %v494
      %v496 = vrot.slane %v399, 1
      %v497 = vsel %vm472, %v494, %v496
      %v498 = vrot.slane %v400, 1
      %v499 = vsel %vm472, %v496, %v498
      %v500 = vrot.slane %v401, 1
      %v501 = vsel %vm472, %v498, %v500
      %v502 = vrot.slane %v402, 1
      %v503 = vsel %vm472, %v500, %v502
      %v504 = vrot.slane %v403, 1
      %v505 = vsel %vm472, %v502, %v504
      %v506 = vrot.slane %v404, 1
      %v507 = vsel %vm472, %v504, %v506
      %v508 = vrot.slane %v405, 1
      %v509 = vsel %vm472, %v506, %v508
      %v510 = vrot.slane %v406, 1
      %v511 = vsel %vm472, %v508, %v510
      %v512 = vrot.slane %v407, 1
      %v513 = vsel %vm472, %v510, %v512
      %v514 = vrot.slane %v408, 1
      %v515 = vsel %vm472, %v512, %v514
      %v516 = vrot.slane %v409, 1
      %v517 = vsel %vm472, %v514, %v516
      %v518 = vrot.slane %v410, 1
      %v519 = vsel %vm472, %v516, %v518
      %v520 = vrot.slane %v411, 1
      %v521 = vsel %vm472, %v518, %v520
      %v522 = vrot.slane %v412, 1
      %v523 = vsel %vm472, %v520, %v522
      %v524 = vrot.slane %v413, 1
      %v525 = vsel %vm472, %v522, %v524
      %v526 = vrot.slane %v414, 1
      %v527 = vsel %vm472, %v524, %v526
      %v528 = vrot.slane %v415, 1
      %v529 = vsel %vm472, %v526, %v528
      %v530 = vrot.slane %v416, 1
      %v531 = vsel %vm472, %v528, %v530
      %v532 = vrot.slane %v417, 1
      %v533 = vsel %vm472, %v530, %v532
      %v534 = vrot.slane %v418, 1
      %v535 = vsel %vm472, %v532, %v534
      %v536 = vrot.slane %v419, 1
      %v537 = vsel %vm472, %v534, %v536
      %v538 = vrot.slane %v420, 1
      %v539 = vsel %vm472, %v536, %v538
      %v540 = vrot.slane %v421, 1
      %v541 = vsel %vm472, %v538, %v540
      %v542 = vrot.slane %v422, 1
      %v543 = vsel %vm472, %v540, %v542
      %v544 = vrot.slane %v423, 1
      %v545 = vsel %vm472, %v542, %v544
      %v546 = vrot.slane %v424, 1
      %v547 = vsel %vm472, %v544, %v546
      %v548 = vrot.slane %v425, 1
      %v549 = vsel %vm472, %v546, %v548
      %v550 = vrot.slane %v426, 1
      %v551 = vsel %vm472, %v548, %v550
      %v552 = vrot.slane %v427, 1
      %v553 = vsel %vm472, %v550, %v552
      %v554 = vsel %vm472, %v552, %v473
      %555 = vrot.lane.b32.xlu0 %v475, 2
      %v556 = vpop.permute.xlu0 %555
      %557 = vrot.lane.b32.xlu0 %v477, 2
      %v558 = vpop.permute.xlu0 %557
      %559 = vrot.lane.b32.xlu0 %v479, 2
      %v560 = vpop.permute.xlu0 %559
      %561 = vrot.lane.b32.xlu0 %v481, 2
      %v562 = vpop.permute.xlu0 %561
      %563 = vrot.lane.b32.xlu0 %v483, 2
      %v564 = vpop.permute.xlu0 %563
      %565 = vrot.lane.b32.xlu0 %v485, 2
      %v566 = vpop.permute.xlu0 %565
      %567 = vrot.lane.b32.xlu0 %v487, 2
      %v568 = vpop.permute.xlu0 %567
      %569 = vrot.lane.b32.xlu0 %v489, 2
      %v570 = vpop.permute.xlu0 %569
      %571 = vrot.lane.b32.xlu0 %v491, 2
      %v572 = vpop.permute.xlu0 %571
      %573 = vrot.lane.b32.xlu0 %v493, 2
      %v574 = vpop.permute.xlu0 %573
      %575 = vrot.lane.b32.xlu0 %v495, 2
      %v576 = vpop.permute.xlu0 %575
      %577 = vrot.lane.b32.xlu0 %v497, 2
      %v578 = vpop.permute.xlu0 %577
      %579 = vrot.lane.b32.xlu0 %v499, 2
      %v580 = vpop.permute.xlu0 %579
      %581 = vrot.lane.b32.xlu0 %v501, 2
      %v582 = vpop.permute.xlu0 %581
      %583 = vrot.lane.b32.xlu0 %v503, 2
      %v584 = vpop.permute.xlu0 %583
      %585 = vrot.lane.b32.xlu0 %v505, 2
      %v586 = vpop.permute.xlu0 %585
      %587 = vrot.lane.b32.xlu0 %v507, 2
      %v588 = vpop.permute.xlu0 %587
      %589 = vrot.lane.b32.xlu0 %v509, 2
      %v590 = vpop.permute.xlu0 %589
      %591 = vrot.lane.b32.xlu0 %v511, 2
      %v592 = vpop.permute.xlu0 %591
      %593 = vrot.lane.b32.xlu0 %v513, 2
      %v594 = vpop.permute.xlu0 %593
      %595 = vrot.lane.b32.xlu0 %v515, 2
      %v596 = vpop.permute.xlu0 %595
      %597 = vrot.lane.b32.xlu0 %v517, 2
      %v598 = vpop.permute.xlu0 %597
      %599 = vrot.lane.b32.xlu0 %v519, 2
      %v600 = vpop.permute.xlu0 %599
      %601 = vrot.lane.b32.xlu0 %v521, 2
      %v602 = vpop.permute.xlu0 %601
      %603 = vrot.lane.b32.xlu0 %v523, 2
      %v604 = vpop.permute.xlu0 %603
      %605 = vrot.lane.b32.xlu0 %v525, 2
      %v606 = vpop.permute.xlu0 %605
      %607 = vrot.lane.b32.xlu0 %v527, 2
      %v608 = vpop.permute.xlu0 %607
      %609 = vrot.lane.b32.xlu0 %v529, 2
      %v610 = vpop.permute.xlu0 %609
      %611 = vrot.lane.b32.xlu0 %v531, 2
      %v612 = vpop.permute.xlu0 %611
      %613 = vrot.lane.b32.xlu0 %v533, 2
      %v614 = vpop.permute.xlu0 %613
      %615 = vrot.lane.b32.xlu0 %v535, 2
      %v616 = vpop.permute.xlu0 %615
      %617 = vrot.lane.b32.xlu0 %v537, 2
      %v618 = vpop.permute.xlu0 %617
      %619 = vrot.lane.b32.xlu0 %v539, 2
      %v620 = vpop.permute.xlu0 %619
      %621 = vrot.lane.b32.xlu0 %v541, 2
      %v622 = vpop.permute.xlu0 %621
      %623 = vrot.lane.b32.xlu0 %v543, 2
      %v624 = vpop.permute.xlu0 %623
      %625 = vrot.lane.b32.xlu0 %v545, 2
      %v626 = vpop.permute.xlu0 %625
      %627 = vrot.lane.b32.xlu0 %v547, 2
      %v628 = vpop.permute.xlu0 %627
      %629 = vrot.lane.b32.xlu0 %v549, 2
      %v630 = vpop.permute.xlu0 %629
      %631 = vrot.lane.b32.xlu0 %v551, 2
      %v632 = vpop.permute.xlu0 %631
      %633 = vrot.lane.b32.xlu0 %v553, 2
      %v634 = vpop.permute.xlu0 %633
      %635 = vrot.lane.b32.xlu0 %v554, 2
      %v636 = vpop.permute.xlu0 %635
      %637 = vrot.lane.b32.xlu0 %v473, 2
      %v638 = vpop.permute.xlu0 %637
      %vm681 = vcmask 1045504
      %v682 = vrot.slane %v428, 2
      %v683 = vrot.slane %v429, 2
      %v684 = vsel %vm681, %v682, %v683
      %v685 = vrot.slane %v430, 2
      %v686 = vsel %vm681, %v683, %v685
      %v687 = vrot.slane %v390, 2
      %v688 = vsel %vm681, %v685, %v687
      %v689 = vrot.slane %v391, 2
      %v690 = vsel %vm681, %v687, %v689
      %v691 = vrot.slane %v392, 2
      %v692 = vsel %vm681, %v689, %v691
      %v693 = vrot.slane %v393, 2
      %v694 = vsel %vm681, %v691, %v693
      %v695 = vrot.slane %v394, 2
      %v696 = vsel %vm681, %v693, %v695
      %v697 = vrot.slane %v395, 2
      %v698 = vsel %vm681, %v695, %v697
      %v699 = vrot.slane %v396, 2
      %v700 = vsel %vm681, %v697, %v699
      %v701 = vrot.slane %v397, 2
      %v702 = vsel %vm681, %v699, %v701
      %v703 = vrot.slane %v398, 2
      %v704 = vsel %vm681, %v701, %v703
      %v705 = vrot.slane %v399, 2
      %v706 = vsel %vm681, %v703, %v705
      %v707 = vrot.slane %v400, 2
      %v708 = vsel %vm681, %v705, %v707
      %v709 = vrot.slane %v401, 2
      %v710 = vsel %vm681, %v707, %v709
      %v711 = vrot.slane %v402, 2
      %v712 = vsel %vm681, %v709, %v711
      %v713 = vrot.slane %v403, 2
      %v714 = vsel %vm681, %v711, %v713
      %v715 = vrot.slane %v404, 2
      %v716 = vsel %vm681, %v713, %v715
      %v717 = vrot.slane %v405, 2
      %v718 = vsel %vm681, %v715, %v717
      %v719 = vrot.slane %v406, 2
      %v720 = vsel %vm681, %v717, %v719
      %v721 = vrot.slane %v407, 2
      %v722 = vsel %vm681, %v719, %v721
      %v723 = vrot.slane %v408, 2
      %v724 = vsel %vm681, %v721, %v723
      %v725 = vrot.slane %v409, 2
      %v726 = vsel %vm681, %v723, %v725
      %v727 = vrot.slane %v410, 2
      %v728 = vsel %vm681, %v725, %v727
      %v729 = vrot.slane %v411, 2
      %v730 = vsel %vm681, %v727, %v729
      %v731 = vrot.slane %v412, 2
      %v732 = vsel %vm681, %v729, %v731
      %v733 = vrot.slane %v413, 2
      %v734 = vsel %vm681, %v731, %v733
      %v735 = vrot.slane %v414, 2
      %v736 = vsel %vm681, %v733, %v735
      %v737 = vrot.slane %v415, 2
      %v738 = vsel %vm681, %v735, %v737
      %v739 = vrot.slane %v416, 2
      %v740 = vsel %vm681, %v737, %v739
      %v741 = vrot.slane %v417, 2
      %v742 = vsel %vm681, %v739, %v741
      %v743 = vrot.slane %v418, 2
      %v744 = vsel %vm681, %v741, %v743
      %v745 = vrot.slane %v419, 2
      %v746 = vsel %vm681, %v743, %v745
      %v747 = vrot.slane %v420, 2
      %v748 = vsel %vm681, %v745, %v747
      %v749 = vrot.slane %v421, 2
      %v750 = vsel %vm681, %v747, %v749
      %v751 = vrot.slane %v422, 2
      %v752 = vsel %vm681, %v749, %v751
      %v753 = vrot.slane %v423, 2
      %v754 = vsel %vm681, %v751, %v753
      %v755 = vrot.slane %v424, 2
      %v756 = vsel %vm681, %v753, %v755
      %v757 = vrot.slane %v425, 2
      %v758 = vsel %vm681, %v755, %v757
      %v759 = vrot.slane %v426, 2
      %v760 = vsel %vm681, %v757, %v759
      %v761 = vrot.slane %v427, 2
      %v762 = vsel %vm681, %v759, %v761
      %v763 = vsel %vm681, %v761, %v682
      %764 = vrot.lane.b32.xlu0 %v684, 4
      %v765 = vpop.permute.xlu0 %764
      %766 = vrot.lane.b32.xlu0 %v686, 4
      %v767 = vpop.permute.xlu0 %766
      %768 = vrot.lane.b32.xlu0 %v688, 4
      %v769 = vpop.permute.xlu0 %768
      %770 = vrot.lane.b32.xlu0 %v690, 4
      %v771 = vpop.permute.xlu0 %770
      %772 = vrot.lane.b32.xlu0 %v692, 4
      %v773 = vpop.permute.xlu0 %772
      %774 = vrot.lane.b32.xlu0 %v694, 4
      %v775 = vpop.permute.xlu0 %774
      %776 = vrot.lane.b32.xlu0 %v696, 4
      %v777 = vpop.permute.xlu0 %776
      %778 = vrot.lane.b32.xlu0 %v698, 4
      %v779 = vpop.permute.xlu0 %778
      %780 = vrot.lane.b32.xlu0 %v700, 4
      %v781 = vpop.permute.xlu0 %780
      %782 = vrot.lane.b32.xlu0 %v702, 4
      %v783 = vpop.permute.xlu0 %782
      %784 = vrot.lane.b32.xlu0 %v704, 4
      %v785 = vpop.permute.xlu0 %784
      %786 = vrot.lane.b32.xlu0 %v706, 4
      %v787 = vpop.permute.xlu0 %786
      %788 = vrot.lane.b32.xlu0 %v708, 4
      %v789 = vpop.permute.xlu0 %788
      %790 = vrot.lane.b32.xlu0 %v710, 4
      %v791 = vpop.permute.xlu0 %790
      %792 = vrot.lane.b32.xlu0 %v712, 4
      %v793 = vpop.permute.xlu0 %792
      %794 = vrot.lane.b32.xlu0 %v714, 4
      %v795 = vpop.permute.xlu0 %794
      %796 = vrot.lane.b32.xlu0 %v716, 4
      %v797 = vpop.permute.xlu0 %796
      %798 = vrot.lane.b32.xlu0 %v718, 4
      %v799 = vpop.permute.xlu0 %798
      %800 = vrot.lane.b32.xlu0 %v720, 4
      %v801 = vpop.permute.xlu0 %800
      %802 = vrot.lane.b32.xlu0 %v722, 4
      %v803 = vpop.permute.xlu0 %802
      %804 = vrot.lane.b32.xlu0 %v724, 4
      %v805 = vpop.permute.xlu0 %804
      %806 = vrot.lane.b32.xlu0 %v726, 4
      %v807 = vpop.permute.xlu0 %806
      %808 = vrot.lane.b32.xlu0 %v728, 4
      %v809 = vpop.permute.xlu0 %808
      %810 = vrot.lane.b32.xlu0 %v730, 4
      %v811 = vpop.permute.xlu0 %810
      %812 = vrot.lane.b32.xlu0 %v732, 4
      %v813 = vpop.permute.xlu0 %812
      %814 = vrot.lane.b32.xlu0 %v734, 4
      %v815 = vpop.permute.xlu0 %814
      %816 = vrot.lane.b32.xlu0 %v736, 4
      %v817 = vpop.permute.xlu0 %816
      %818 = vrot.lane.b32.xlu0 %v738, 4
      %v819 = vpop.permute.xlu0 %818
      %820 = vrot.lane.b32.xlu0 %v740, 4
      %v821 = vpop.permute.xlu0 %820
      %822 = vrot.lane.b32.xlu0 %v742, 4
      %v823 = vpop.permute.xlu0 %822
      %824 = vrot.lane.b32.xlu0 %v744, 4
      %v825 = vpop.permute.xlu0 %824
      %826 = vrot.lane.b32.xlu0 %v746, 4
      %v827 = vpop.permute.xlu0 %826
      %828 = vrot.lane.b32.xlu0 %v748, 4
      %v829 = vpop.permute.xlu0 %828
      %830 = vrot.lane.b32.xlu0 %v750, 4
      %v831 = vpop.permute.xlu0 %830
      %832 = vrot.lane.b32.xlu0 %v752, 4
      %v833 = vpop.permute.xlu0 %832
      %834 = vrot.lane.b32.xlu0 %v754, 4
      %v835 = vpop.permute.xlu0 %834
      %836 = vrot.lane.b32.xlu0 %v756, 4
      %v837 = vpop.permute.xlu0 %836
      %838 = vrot.lane.b32.xlu0 %v758, 4
      %v839 = vpop.permute.xlu0 %838
      %840 = vrot.lane.b32.xlu0 %v760, 4
      %v841 = vpop.permute.xlu0 %840
      %842 = vrot.lane.b32.xlu0 %v762, 4
      %v843 = vpop.permute.xlu0 %842
      %844 = vrot.lane.b32.xlu0 %v763, 4
      %v845 = vpop.permute.xlu0 %844
      %846 = vrot.lane.b32.xlu0 %v682, 4
      %v847 = vpop.permute.xlu0 %846
      %890 = vrot.lane.b32.xlu0 %v688, 6
      %v891 = vpop.permute.xlu0 %890
      %892 = vrot.lane.b32.xlu0 %v690, 6
      %v893 = vpop.permute.xlu0 %892
      %894 = vrot.lane.b32.xlu0 %v692, 6
      %v895 = vpop.permute.xlu0 %894
      %896 = vrot.lane.b32.xlu0 %v694, 6
      %v897 = vpop.permute.xlu0 %896
      %898 = vrot.lane.b32.xlu0 %v696, 6
      %v899 = vpop.permute.xlu0 %898
      %900 = vrot.lane.b32.xlu0 %v698, 6
      %v901 = vpop.permute.xlu0 %900
      %902 = vrot.lane.b32.xlu0 %v700, 6
      %v903 = vpop.permute.xlu0 %902
      %904 = vrot.lane.b32.xlu0 %v702, 6
      %v905 = vpop.permute.xlu0 %904
      %906 = vrot.lane.b32.xlu0 %v704, 6
      %v907 = vpop.permute.xlu0 %906
      %908 = vrot.lane.b32.xlu0 %v706, 6
      %v909 = vpop.permute.xlu0 %908
      %910 = vrot.lane.b32.xlu0 %v708, 6
      %v911 = vpop.permute.xlu0 %910
      %912 = vrot.lane.b32.xlu0 %v710, 6
      %v913 = vpop.permute.xlu0 %912
      %914 = vrot.lane.b32.xlu0 %v712, 6
      %v915 = vpop.permute.xlu0 %914
      %916 = vrot.lane.b32.xlu0 %v714, 6
      %v917 = vpop.permute.xlu0 %916
      %918 = vrot.lane.b32.xlu0 %v716, 6
      %v919 = vpop.permute.xlu0 %918
      %920 = vrot.lane.b32.xlu0 %v718, 6
      %v921 = vpop.permute.xlu0 %920
      %922 = vrot.lane.b32.xlu0 %v720, 6
      %v923 = vpop.permute.xlu0 %922
      %924 = vrot.lane.b32.xlu0 %v722, 6
      %v925 = vpop.permute.xlu0 %924
      %926 = vrot.lane.b32.xlu0 %v724, 6
      %v927 = vpop.permute.xlu0 %926
      %928 = vrot.lane.b32.xlu0 %v726, 6
      %v929 = vpop.permute.xlu0 %928
      %930 = vrot.lane.b32.xlu0 %v728, 6
      %v931 = vpop.permute.xlu0 %930
      %932 = vrot.lane.b32.xlu0 %v730, 6
      %v933 = vpop.permute.xlu0 %932
      %934 = vrot.lane.b32.xlu0 %v732, 6
      %v935 = vpop.permute.xlu0 %934
      %936 = vrot.lane.b32.xlu0 %v734, 6
      %v937 = vpop.permute.xlu0 %936
      %938 = vrot.lane.b32.xlu0 %v736, 6
      %v939 = vpop.permute.xlu0 %938
      %940 = vrot.lane.b32.xlu0 %v738, 6
      %v941 = vpop.permute.xlu0 %940
      %942 = vrot.lane.b32.xlu0 %v740, 6
      %v943 = vpop.permute.xlu0 %942
      %944 = vrot.lane.b32.xlu0 %v742, 6
      %v945 = vpop.permute.xlu0 %944
      %946 = vrot.lane.b32.xlu0 %v744, 6
      %v947 = vpop.permute.xlu0 %946
      %948 = vrot.lane.b32.xlu0 %v746, 6
      %v949 = vpop.permute.xlu0 %948
      %950 = vrot.lane.b32.xlu0 %v748, 6
      %v951 = vpop.permute.xlu0 %950
      %952 = vrot.lane.b32.xlu0 %v750, 6
      %v953 = vpop.permute.xlu0 %952
      %954 = vrot.lane.b32.xlu0 %v752, 6
      %v955 = vpop.permute.xlu0 %954
      %956 = vrot.lane.b32.xlu0 %v754, 6
      %v957 = vpop.permute.xlu0 %956
      %958 = vrot.lane.b32.xlu0 %v756, 6
      %v959 = vpop.permute.xlu0 %958
      %960 = vrot.lane.b32.xlu0 %v758, 6
      %v961 = vpop.permute.xlu0 %960
      %962 = vrot.lane.b32.xlu0 %v760, 6
      %v963 = vpop.permute.xlu0 %962
      %964 = vrot.lane.b32.xlu0 %v762, 6
      %v965 = vpop.permute.xlu0 %964
      %966 = vrot.lane.b32.xlu0 %v763, 6
      %v967 = vpop.permute.xlu0 %966
      %968 = vrot.lane.b32.xlu0 %v684, 6
      %v969 = vpop.permute.xlu0 %968
      %970 = vrot.lane.b32.xlu0 %v686, 6
      %v971 = vpop.permute.xlu0 %970
      %972 = vrot.lane.b32.xlu0 %v685, 6
      %v973 = vpop.permute.xlu0 %972
      %vm1016 = vcmask 1044480
      %v1017 = vrot.slane %v390, 3
      %v1018 = vrot.slane %v391, 3
      %v1019 = vsel %vm1016, %v1017, %v1018
      %v1020 = vrot.slane %v392, 3
      %v1021 = vsel %vm1016, %v1018, %v1020
      %v1022 = vrot.slane %v393, 3
      %v1023 = vsel %vm1016, %v1020, %v1022
      %v1024 = vrot.slane %v394, 3
      %v1025 = vsel %vm1016, %v1022, %v1024
      %v1026 = vrot.slane %v395, 3
      %v1027 = vsel %vm1016, %v1024, %v1026
      %v1028 = vrot.slane %v396, 3
      %v1029 = vsel %vm1016, %v1026, %v1028
      %v1030 = vrot.slane %v397, 3
      %v1031 = vsel %vm1016, %v1028, %v1030
      %v1032 = vrot.slane %v398, 3
      %v1033 = vsel %vm1016, %v1030, %v1032
      %v1034 = vrot.slane %v399, 3
      %v1035 = vsel %vm1016, %v1032, %v1034
      %v1036 = vrot.slane %v400, 3
      %v1037 = vsel %vm1016, %v1034, %v1036
      %v1038 = vrot.slane %v401, 3
      %v1039 = vsel %vm1016, %v1036, %v1038
      %v1040 = vrot.slane %v402, 3
      %v1041 = vsel %vm1016, %v1038, %v1040
      %v1042 = vrot.slane %v403, 3
      %v1043 = vsel %vm1016, %v1040, %v1042
      %v1044 = vrot.slane %v404, 3
      %v1045 = vsel %vm1016, %v1042, %v1044
      %v1046 = vrot.slane %v405, 3
      %v1047 = vsel %vm1016, %v1044, %v1046
      %v1048 = vrot.slane %v406, 3
      %v1049 = vsel %vm1016, %v1046, %v1048
      %v1050 = vrot.slane %v407, 3
      %v1051 = vsel %vm1016, %v1048, %v1050
      %v1052 = vrot.slane %v408, 3
      %v1053 = vsel %vm1016, %v1050, %v1052
      %v1054 = vrot.slane %v409, 3
      %v1055 = vsel %vm1016, %v1052, %v1054
      %v1056 = vrot.slane %v410, 3
      %v1057 = vsel %vm1016, %v1054, %v1056
      %v1058 = vrot.slane %v411, 3
      %v1059 = vsel %vm1016, %v1056, %v1058
      %v1060 = vrot.slane %v412, 3
      %v1061 = vsel %vm1016, %v1058, %v1060
      %v1062 = vrot.slane %v413, 3
      %v1063 = vsel %vm1016, %v1060, %v1062
      %v1064 = vrot.slane %v414, 3
      %v1065 = vsel %vm1016, %v1062, %v1064
      %v1066 = vrot.slane %v415, 3
      %v1067 = vsel %vm1016, %v1064, %v1066
      %v1068 = vrot.slane %v416, 3
      %v1069 = vsel %vm1016, %v1066, %v1068
      %v1070 = vrot.slane %v417, 3
      %v1071 = vsel %vm1016, %v1068, %v1070
      %v1072 = vrot.slane %v418, 3
      %v1073 = vsel %vm1016, %v1070, %v1072
      %v1074 = vrot.slane %v419, 3
      %v1075 = vsel %vm1016, %v1072, %v1074
      %v1076 = vrot.slane %v420, 3
      %v1077 = vsel %vm1016, %v1074, %v1076
      %v1078 = vrot.slane %v421, 3
      %v1079 = vsel %vm1016, %v1076, %v1078
      %v1080 = vrot.slane %v422, 3
      %v1081 = vsel %vm1016, %v1078, %v1080
      %v1082 = vrot.slane %v423, 3
      %v1083 = vsel %vm1016, %v1080, %v1082
      %v1084 = vrot.slane %v424, 3
      %v1085 = vsel %vm1016, %v1082, %v1084
      %v1086 = vrot.slane %v425, 3
      %v1087 = vsel %vm1016, %v1084, %v1086
      %v1088 = vrot.slane %v426, 3
      %v1089 = vsel %vm1016, %v1086, %v1088
      %v1090 = vrot.slane %v427, 3
      %v1091 = vsel %vm1016, %v1088, %v1090
      %v1092 = vrot.slane %v428, 3
      %v1093 = vsel %vm1016, %v1090, %v1092
      %v1094 = vrot.slane %v429, 3
      %v1095 = vsel %vm1016, %v1092, %v1094
      %v1096 = vrot.slane %v430, 3
      %v1097 = vsel %vm1016, %v1094, %v1096
      %1098 = vrot.lane.b32.xlu0 %v1017, 8
      %v1099 = vpop.permute.xlu0 %1098
      %1100 = vrot.lane.b32.xlu0 %v1019, 8
      %v1101 = vpop.permute.xlu0 %1100
      %1102 = vrot.lane.b32.xlu0 %v1021, 8
      %v1103 = vpop.permute.xlu0 %1102
      %1104 = vrot.lane.b32.xlu0 %v1023, 8
      %v1105 = vpop.permute.xlu0 %1104
      %1106 = vrot.lane.b32.xlu0 %v1025, 8
      %v1107 = vpop.permute.xlu0 %1106
      %1108 = vrot.lane.b32.xlu0 %v1027, 8
      %v1109 = vpop.permute.xlu0 %1108
      %1110 = vrot.lane.b32.xlu0 %v1029, 8
      %v1111 = vpop.permute.xlu0 %1110
      %1112 = vrot.lane.b32.xlu0 %v1031, 8
      %v1113 = vpop.permute.xlu0 %1112
      %1114 = vrot.lane.b32.xlu0 %v1033, 8
      %v1115 = vpop.permute.xlu0 %1114
      %1116 = vrot.lane.b32.xlu0 %v1035, 8
      %v1117 = vpop.permute.xlu0 %1116
      %1118 = vrot.lane.b32.xlu0 %v1037, 8
      %v1119 = vpop.permute.xlu0 %1118
      %1120 = vrot.lane.b32.xlu0 %v1039, 8
      %v1121 = vpop.permute.xlu0 %1120
      %1122 = vrot.lane.b32.xlu0 %v1041, 8
      %v1123 = vpop.permute.xlu0 %1122
      %1124 = vrot.lane.b32.xlu0 %v1043, 8
      %v1125 = vpop.permute.xlu0 %1124
      %1126 = vrot.lane.b32.xlu0 %v1045, 8
      %v1127 = vpop.permute.xlu0 %1126
      %1128 = vrot.lane.b32.xlu0 %v1047, 8
      %v1129 = vpop.permute.xlu0 %1128
      %1130 = vrot.lane.b32.xlu0 %v1049, 8
      %v1131 = vpop.permute.xlu0 %1130
      %1132 = vrot.lane.b32.xlu0 %v1051, 8
      %v1133 = vpop.permute.xlu0 %1132
      %1134 = vrot.lane.b32.xlu0 %v1053, 8
      %v1135 = vpop.permute.xlu0 %1134
      %1136 = vrot.lane.b32.xlu0 %v1055, 8
      %v1137 = vpop.permute.xlu0 %1136
      %1138 = vrot.lane.b32.xlu0 %v1057, 8
      %v1139 = vpop.permute.xlu0 %1138
      %1140 = vrot.lane.b32.xlu0 %v1059, 8
      %v1141 = vpop.permute.xlu0 %1140
      %1142 = vrot.lane.b32.xlu0 %v1061, 8
      %v1143 = vpop.permute.xlu0 %1142
      %1144 = vrot.lane.b32.xlu0 %v1063, 8
      %v1145 = vpop.permute.xlu0 %1144
      %1146 = vrot.lane.b32.xlu0 %v1065, 8
      %v1147 = vpop.permute.xlu0 %1146
      %1148 = vrot.lane.b32.xlu0 %v1067, 8
      %v1149 = vpop.permute.xlu0 %1148
      %1150 = vrot.lane.b32.xlu0 %v1069, 8
      %v1151 = vpop.permute.xlu0 %1150
      %1152 = vrot.lane.b32.xlu0 %v1071, 8
      %v1153 = vpop.permute.xlu0 %1152
      %1154 = vrot.lane.b32.xlu0 %v1073, 8
      %v1155 = vpop.permute.xlu0 %1154
      %1156 = vrot.lane.b32.xlu0 %v1075, 8
      %v1157 = vpop.permute.xlu0 %1156
      %1158 = vrot.lane.b32.xlu0 %v1077, 8
      %v1159 = vpop.permute.xlu0 %1158
      %1160 = vrot.lane.b32.xlu0 %v1079, 8
      %v1161 = vpop.permute.xlu0 %1160
      %1162 = vrot.lane.b32.xlu0 %v1081, 8
      %v1163 = vpop.permute.xlu0 %1162
      %1164 = vrot.lane.b32.xlu0 %v1083, 8
      %v1165 = vpop.permute.xlu0 %1164
      %1166 = vrot.lane.b32.xlu0 %v1085, 8
      %v1167 = vpop.permute.xlu0 %1166
      %1168 = vrot.lane.b32.xlu0 %v1087, 8
      %v1169 = vpop.permute.xlu0 %1168
      %1170 = vrot.lane.b32.xlu0 %v1089, 8
      %v1171 = vpop.permute.xlu0 %1170
      %1172 = vrot.lane.b32.xlu0 %v1091, 8
      %v1173 = vpop.permute.xlu0 %1172
      %1174 = vrot.lane.b32.xlu0 %v1093, 8
      %v1175 = vpop.permute.xlu0 %1174
      %1176 = vrot.lane.b32.xlu0 %v1095, 8
      %v1177 = vpop.permute.xlu0 %1176
      %1178 = vrot.lane.b32.xlu0 %v1097, 8
      %v1179 = vpop.permute.xlu0 %1178
      %1180 = vrot.lane.b32.xlu0 %v1096, 8
      %v1181 = vpop.permute.xlu0 %1180
      %vm1224 = vcmask 1043456
      %v1225 = vrot.slane %v390, 4
      %v1226 = vrot.slane %v391, 4
      %v1227 = vsel %vm1224, %v1225, %v1226
      %v1228 = vrot.slane %v392, 4
      %v1229 = vsel %vm1224, %v1226, %v1228
      %v1230 = vrot.slane %v393, 4
      %v1231 = vsel %vm1224, %v1228, %v1230
      %v1232 = vrot.slane %v394, 4
      %v1233 = vsel %vm1224, %v1230, %v1232
      %v1234 = vrot.slane %v395, 4
      %v1235 = vsel %vm1224, %v1232, %v1234
      %v1236 = vrot.slane %v396, 4
      %v1237 = vsel %vm1224, %v1234, %v1236
      %v1238 = vrot.slane %v397, 4
      %v1239 = vsel %vm1224, %v1236, %v1238
      %v1240 = vrot.slane %v398, 4
      %v1241 = vsel %vm1224, %v1238, %v1240
      %v1242 = vrot.slane %v399, 4
      %v1243 = vsel %vm1224, %v1240, %v1242
      %v1244 = vrot.slane %v400, 4
      %v1245 = vsel %vm1224, %v1242, %v1244
      %v1246 = vrot.slane %v401, 4
      %v1247 = vsel %vm1224, %v1244, %v1246
      %v1248 = vrot.slane %v402, 4
      %v1249 = vsel %vm1224, %v1246, %v1248
      %v1250 = vrot.slane %v403, 4
      %v1251 = vsel %vm1224, %v1248, %v1250
      %v1252 = vrot.slane %v404, 4
      %v1253 = vsel %vm1224, %v1250, %v1252
      %v1254 = vrot.slane %v405, 4
      %v1255 = vsel %vm1224, %v1252, %v1254
      %v1256 = vrot.slane %v406, 4
      %v1257 = vsel %vm1224, %v1254, %v1256
      %v1258 = vrot.slane %v407, 4
      %v1259 = vsel %vm1224, %v1256, %v1258
      %v1260 = vrot.slane %v408, 4
      %v1261 = vsel %vm1224, %v1258, %v1260
      %v1262 = vrot.slane %v409, 4
      %v1263 = vsel %vm1224, %v1260, %v1262
      %v1264 = vrot.slane %v410, 4
      %v1265 = vsel %vm1224, %v1262, %v1264
      %v1266 = vrot.slane %v411, 4
      %v1267 = vsel %vm1224, %v1264, %v1266
      %v1268 = vrot.slane %v412, 4
      %v1269 = vsel %vm1224, %v1266, %v1268
      %v1270 = vrot.slane %v413, 4
      %v1271 = vsel %vm1224, %v1268, %v1270
      %v1272 = vrot.slane %v414, 4
      %v1273 = vsel %vm1224, %v1270, %v1272
      %v1274 = vrot.slane %v415, 4
      %v1275 = vsel %vm1224, %v1272, %v1274
      %v1276 = vrot.slane %v416, 4
      %v1277 = vsel %vm1224, %v1274, %v1276
      %v1278 = vrot.slane %v417, 4
      %v1279 = vsel %vm1224, %v1276, %v1278
      %v1280 = vrot.slane %v418, 4
      %v1281 = vsel %vm1224, %v1278, %v1280
      %v1282 = vrot.slane %v419, 4
      %v1283 = vsel %vm1224, %v1280, %v1282
      %v1284 = vrot.slane %v420, 4
      %v1285 = vsel %vm1224, %v1282, %v1284
      %v1286 = vrot.slane %v421, 4
      %v1287 = vsel %vm1224, %v1284, %v1286
      %v1288 = vrot.slane %v422, 4
      %v1289 = vsel %vm1224, %v1286, %v1288
      %v1290 = vrot.slane %v423, 4
      %v1291 = vsel %vm1224, %v1288, %v1290
      %v1292 = vrot.slane %v424, 4
      %v1293 = vsel %vm1224, %v1290, %v1292
      %v1294 = vrot.slane %v425, 4
      %v1295 = vsel %vm1224, %v1292, %v1294
      %v1296 = vrot.slane %v426, 4
      %v1297 = vsel %vm1224, %v1294, %v1296
      %v1298 = vrot.slane %v427, 4
      %v1299 = vsel %vm1224, %v1296, %v1298
      %v1300 = vrot.slane %v428, 4
      %v1301 = vsel %vm1224, %v1298, %v1300
      %v1302 = vrot.slane %v429, 4
      %v1303 = vsel %vm1224, %v1300, %v1302
      %v1304 = vrot.slane %v430, 4
      %v1305 = vsel %vm1224, %v1302, %v1304
      %v1306 = vsel %vm1224, %v1304, %v1225
      %1307 = vrot.lane.b32.xlu0 %v1225, 10
      %v1308 = vpop.permute.xlu0 %1307
      %1309 = vrot.lane.b32.xlu0 %v1227, 10
      %v1310 = vpop.permute.xlu0 %1309
      %1311 = vrot.lane.b32.xlu0 %v1229, 10
      %v1312 = vpop.permute.xlu0 %1311
      %1313 = vrot.lane.b32.xlu0 %v1231, 10
      %v1314 = vpop.permute.xlu0 %1313
      %1315 = vrot.lane.b32.xlu0 %v1233, 10
      %v1316 = vpop.permute.xlu0 %1315
      %1317 = vrot.lane.b32.xlu0 %v1235, 10
      %v1318 = vpop.permute.xlu0 %1317
      %1319 = vrot.lane.b32.xlu0 %v1237, 10
      %v1320 = vpop.permute.xlu0 %1319
      %1321 = vrot.lane.b32.xlu0 %v1239, 10
      %v1322 = vpop.permute.xlu0 %1321
      %1323 = vrot.lane.b32.xlu0 %v1241, 10
      %v1324 = vpop.permute.xlu0 %1323
      %1325 = vrot.lane.b32.xlu0 %v1243, 10
      %v1326 = vpop.permute.xlu0 %1325
      %1327 = vrot.lane.b32.xlu0 %v1245, 10
      %v1328 = vpop.permute.xlu0 %1327
      %1329 = vrot.lane.b32.xlu0 %v1247, 10
      %v1330 = vpop.permute.xlu0 %1329
      %1331 = vrot.lane.b32.xlu0 %v1249, 10
      %v1332 = vpop.permute.xlu0 %1331
      %1333 = vrot.lane.b32.xlu0 %v1251, 10
      %v1334 = vpop.permute.xlu0 %1333
      %1335 = vrot.lane.b32.xlu0 %v1253, 10
      %v1336 = vpop.permute.xlu0 %1335
      %1337 = vrot.lane.b32.xlu0 %v1255, 10
      %v1338 = vpop.permute.xlu0 %1337
      %1339 = vrot.lane.b32.xlu0 %v1257, 10
      %v1340 = vpop.permute.xlu0 %1339
      %1341 = vrot.lane.b32.xlu0 %v1259, 10
      %v1342 = vpop.permute.xlu0 %1341
      %1343 = vrot.lane.b32.xlu0 %v1261, 10
      %v1344 = vpop.permute.xlu0 %1343
      %1345 = vrot.lane.b32.xlu0 %v1263, 10
      %v1346 = vpop.permute.xlu0 %1345
      %1347 = vrot.lane.b32.xlu0 %v1265, 10
      %v1348 = vpop.permute.xlu0 %1347
      %1349 = vrot.lane.b32.xlu0 %v1267, 10
      %v1350 = vpop.permute.xlu0 %1349
      %1351 = vrot.lane.b32.xlu0 %v1269, 10
      %v1352 = vpop.permute.xlu0 %1351
      %1353 = vrot.lane.b32.xlu0 %v1271, 10
      %v1354 = vpop.permute.xlu0 %1353
      %1355 = vrot.lane.b32.xlu0 %v1273, 10
      %v1356 = vpop.permute.xlu0 %1355
      %1357 = vrot.lane.b32.xlu0 %v1275, 10
      %v1358 = vpop.permute.xlu0 %1357
      %1359 = vrot.lane.b32.xlu0 %v1277, 10
      %v1360 = vpop.permute.xlu0 %1359
      %1361 = vrot.lane.b32.xlu0 %v1279, 10
      %v1362 = vpop.permute.xlu0 %1361
      %1363 = vrot.lane.b32.xlu0 %v1281, 10
      %v1364 = vpop.permute.xlu0 %1363
      %1365 = vrot.lane.b32.xlu0 %v1283, 10
      %v1366 = vpop.permute.xlu0 %1365
      %1367 = vrot.lane.b32.xlu0 %v1285, 10
      %v1368 = vpop.permute.xlu0 %1367
      %1369 = vrot.lane.b32.xlu0 %v1287, 10
      %v1370 = vpop.permute.xlu0 %1369
      %1371 = vrot.lane.b32.xlu0 %v1289, 10
      %v1372 = vpop.permute.xlu0 %1371
      %1373 = vrot.lane.b32.xlu0 %v1291, 10
      %v1374 = vpop.permute.xlu0 %1373
      %1375 = vrot.lane.b32.xlu0 %v1293, 10
      %v1376 = vpop.permute.xlu0 %1375
      %1377 = vrot.lane.b32.xlu0 %v1295, 10
      %v1378 = vpop.permute.xlu0 %1377
      %1379 = vrot.lane.b32.xlu0 %v1297, 10
      %v1380 = vpop.permute.xlu0 %1379
      %1381 = vrot.lane.b32.xlu0 %v1299, 10
      %v1382 = vpop.permute.xlu0 %1381
      %1383 = vrot.lane.b32.xlu0 %v1301, 10
      %v1384 = vpop.permute.xlu0 %1383
      %1385 = vrot.lane.b32.xlu0 %v1303, 10
      %v1386 = vpop.permute.xlu0 %1385
      %1387 = vrot.lane.b32.xlu0 %v1305, 10
      %v1388 = vpop.permute.xlu0 %1387
      %1389 = vrot.lane.b32.xlu0 %v1306, 10
      %v1390 = vpop.permute.xlu0 %1389
      %1433 = vrot.lane.b32.xlu0 %v1228, 12
      %v1434 = vpop.permute.xlu0 %1433
      %1435 = vrot.lane.b32.xlu0 %v1231, 12
      %v1436 = vpop.permute.xlu0 %1435
      %1437 = vrot.lane.b32.xlu0 %v1233, 12
      %v1438 = vpop.permute.xlu0 %1437
      %1439 = vrot.lane.b32.xlu0 %v1235, 12
      %v1440 = vpop.permute.xlu0 %1439
      %1441 = vrot.lane.b32.xlu0 %v1237, 12
      %v1442 = vpop.permute.xlu0 %1441
      %1443 = vrot.lane.b32.xlu0 %v1239, 12
      %v1444 = vpop.permute.xlu0 %1443
      %1445 = vrot.lane.b32.xlu0 %v1241, 12
      %v1446 = vpop.permute.xlu0 %1445
      %1447 = vrot.lane.b32.xlu0 %v1243, 12
      %v1448 = vpop.permute.xlu0 %1447
      %1449 = vrot.lane.b32.xlu0 %v1245, 12
      %v1450 = vpop.permute.xlu0 %1449
      %1451 = vrot.lane.b32.xlu0 %v1247, 12
      %v1452 = vpop.permute.xlu0 %1451
      %1453 = vrot.lane.b32.xlu0 %v1249, 12
      %v1454 = vpop.permute.xlu0 %1453
      %1455 = vrot.lane.b32.xlu0 %v1251, 12
      %v1456 = vpop.permute.xlu0 %1455
      %1457 = vrot.lane.b32.xlu0 %v1253, 12
      %v1458 = vpop.permute.xlu0 %1457
      %1459 = vrot.lane.b32.xlu0 %v1255, 12
      %v1460 = vpop.permute.xlu0 %1459
      %1461 = vrot.lane.b32.xlu0 %v1257, 12
      %v1462 = vpop.permute.xlu0 %1461
      %1463 = vrot.lane.b32.xlu0 %v1259, 12
      %v1464 = vpop.permute.xlu0 %1463
      %1465 = vrot.lane.b32.xlu0 %v1261, 12
      %v1466 = vpop.permute.xlu0 %1465
      %1467 = vrot.lane.b32.xlu0 %v1263, 12
      %v1468 = vpop.permute.xlu0 %1467
      %1469 = vrot.lane.b32.xlu0 %v1265, 12
      %v1470 = vpop.permute.xlu0 %1469
      %1471 = vrot.lane.b32.xlu0 %v1267, 12
      %v1472 = vpop.permute.xlu0 %1471
      %1473 = vrot.lane.b32.xlu0 %v1269, 12
      %v1474 = vpop.permute.xlu0 %1473
      %1475 = vrot.lane.b32.xlu0 %v1271, 12
      %v1476 = vpop.permute.xlu0 %1475
      %1477 = vrot.lane.b32.xlu0 %v1273, 12
      %v1478 = vpop.permute.xlu0 %1477
      %1479 = vrot.lane.b32.xlu0 %v1275, 12
      %v1480 = vpop.permute.xlu0 %1479
      %1481 = vrot.lane.b32.xlu0 %v1277, 12
      %v1482 = vpop.permute.xlu0 %1481
      %1483 = vrot.lane.b32.xlu0 %v1279, 12
      %v1484 = vpop.permute.xlu0 %1483
      %1485 = vrot.lane.b32.xlu0 %v1281, 12
      %v1486 = vpop.permute.xlu0 %1485
      %1487 = vrot.lane.b32.xlu0 %v1283, 12
      %v1488 = vpop.permute.xlu0 %1487
      %1489 = vrot.lane.b32.xlu0 %v1285, 12
      %v1490 = vpop.permute.xlu0 %1489
      %1491 = vrot.lane.b32.xlu0 %v1287, 12
      %v1492 = vpop.permute.xlu0 %1491
      %1493 = vrot.lane.b32.xlu0 %v1289, 12
      %v1494 = vpop.permute.xlu0 %1493
      %1495 = vrot.lane.b32.xlu0 %v1291, 12
      %v1496 = vpop.permute.xlu0 %1495
      %1497 = vrot.lane.b32.xlu0 %v1293, 12
      %v1498 = vpop.permute.xlu0 %1497
      %1499 = vrot.lane.b32.xlu0 %v1295, 12
      %v1500 = vpop.permute.xlu0 %1499
      %1501 = vrot.lane.b32.xlu0 %v1297, 12
      %v1502 = vpop.permute.xlu0 %1501
      %1503 = vrot.lane.b32.xlu0 %v1299, 12
      %v1504 = vpop.permute.xlu0 %1503
      %1505 = vrot.lane.b32.xlu0 %v1301, 12
      %v1506 = vpop.permute.xlu0 %1505
      %1507 = vrot.lane.b32.xlu0 %v1303, 12
      %v1508 = vpop.permute.xlu0 %1507
      %1509 = vrot.lane.b32.xlu0 %v1305, 12
      %v1510 = vpop.permute.xlu0 %1509
      %1511 = vrot.lane.b32.xlu0 %v1306, 12
      %v1512 = vpop.permute.xlu0 %1511
      %1513 = vrot.lane.b32.xlu0 %v1227, 12
      %v1514 = vpop.permute.xlu0 %1513
      %1515 = vrot.lane.b32.xlu0 %v1229, 12
      %v1516 = vpop.permute.xlu0 %1515
      %vm1559 = vcmask 1042432
      %v1560 = vrot.slane %v392, 5
      %v1561 = vrot.slane %v393, 5
      %v1562 = vsel %vm1559, %v1560, %v1561
      %v1563 = vrot.slane %v394, 5
      %v1564 = vsel %vm1559, %v1561, %v1563
      %v1565 = vrot.slane %v395, 5
      %v1566 = vsel %vm1559, %v1563, %v1565
      %v1567 = vrot.slane %v396, 5
      %v1568 = vsel %vm1559, %v1565, %v1567
      %v1569 = vrot.slane %v397, 5
      %v1570 = vsel %vm1559, %v1567, %v1569
      %v1571 = vrot.slane %v398, 5
      %v1572 = vsel %vm1559, %v1569, %v1571
      %v1573 = vrot.slane %v399, 5
      %v1574 = vsel %vm1559, %v1571, %v1573
      %v1575 = vrot.slane %v400, 5
      %v1576 = vsel %vm1559, %v1573, %v1575
      %v1577 = vrot.slane %v401, 5
      %v1578 = vsel %vm1559, %v1575, %v1577
      %v1579 = vrot.slane %v402, 5
      %v1580 = vsel %vm1559, %v1577, %v1579
      %v1581 = vrot.slane %v403, 5
      %v1582 = vsel %vm1559, %v1579, %v1581
      %v1583 = vrot.slane %v404, 5
      %v1584 = vsel %vm1559, %v1581, %v1583
      %v1585 = vrot.slane %v405, 5
      %v1586 = vsel %vm1559, %v1583, %v1585
      %v1587 = vrot.slane %v406, 5
      %v1588 = vsel %vm1559, %v1585, %v1587
      %v1589 = vrot.slane %v407, 5
      %v1590 = vsel %vm1559, %v1587, %v1589
      %v1591 = vrot.slane %v408, 5
      %v1592 = vsel %vm1559, %v1589, %v1591
      %v1593 = vrot.slane %v409, 5
      %v1594 = vsel %vm1559, %v1591, %v1593
      %v1595 = vrot.slane %v410, 5
      %v1596 = vsel %vm1559, %v1593, %v1595
      %v1597 = vrot.slane %v411, 5
      %v1598 = vsel %vm1559, %v1595, %v1597
      %v1599 = vrot.slane %v412, 5
      %v1600 = vsel %vm1559, %v1597, %v1599
      %v1601 = vrot.slane %v413, 5
      %v1602 = vsel %vm1559, %v1599, %v1601
      %v1603 = vrot.slane %v414, 5
      %v1604 = vsel %vm1559, %v1601, %v1603
      %v1605 = vrot.slane %v415, 5
      %v1606 = vsel %vm1559, %v1603, %v1605
      %v1607 = vrot.slane %v416, 5
      %v1608 = vsel %vm1559, %v1605, %v1607
      %v1609 = vrot.slane %v417, 5
      %v1610 = vsel %vm1559, %v1607, %v1609
      %v1611 = vrot.slane %v418, 5
      %v1612 = vsel %vm1559, %v1609, %v1611
      %v1613 = vrot.slane %v419, 5
      %v1614 = vsel %vm1559, %v1611, %v1613
      %v1615 = vrot.slane %v420, 5
      %v1616 = vsel %vm1559, %v1613, %v1615
      %v1617 = vrot.slane %v421, 5
      %v1618 = vsel %vm1559, %v1615, %v1617
      %v1619 = vrot.slane %v422, 5
      %v1620 = vsel %vm1559, %v1617, %v1619
      %v1621 = vrot.slane %v423, 5
      %v1622 = vsel %vm1559, %v1619, %v1621
      %v1623 = vrot.slane %v424, 5
      %v1624 = vsel %vm1559, %v1621, %v1623
      %v1625 = vrot.slane %v425, 5
      %v1626 = vsel %vm1559, %v1623, %v1625
      %v1627 = vrot.slane %v426, 5
      %v1628 = vsel %vm1559, %v1625, %v1627
      %v1629 = vrot.slane %v427, 5
      %v1630 = vsel %vm1559, %v1627, %v1629
      %v1631 = vrot.slane %v428, 5
      %v1632 = vsel %vm1559, %v1629, %v1631
      %v1633 = vrot.slane %v429, 5
      %v1634 = vsel %vm1559, %v1631, %v1633
      %v1635 = vrot.slane %v430, 5
      %v1636 = vsel %vm1559, %v1633, %v1635
      %v1637 = vrot.slane %v390, 5
      %v1638 = vsel %vm1559, %v1635, %v1637
      %v1639 = vrot.slane %v391, 5
      %v1640 = vsel %vm1559, %v1637, %v1639
      %v1641 = vsel %vm1559, %v1639, %v1560
      %1642 = vrot.lane.b32.xlu0 %v1560, 14
      %v1643 = vpop.permute.xlu0 %1642
      %1644 = vrot.lane.b32.xlu0 %v1562, 14
      %v1645 = vpop.permute.xlu0 %1644
      %1646 = vrot.lane.b32.xlu0 %v1564, 14
      %v1647 = vpop.permute.xlu0 %1646
      %1648 = vrot.lane.b32.xlu0 %v1566, 14
      %v1649 = vpop.permute.xlu0 %1648
      %1650 = vrot.lane.b32.xlu0 %v1568, 14
      %v1651 = vpop.permute.xlu0 %1650
      %1652 = vrot.lane.b32.xlu0 %v1570, 14
      %v1653 = vpop.permute.xlu0 %1652
      %1654 = vrot.lane.b32.xlu0 %v1572, 14
      %v1655 = vpop.permute.xlu0 %1654
      %1656 = vrot.lane.b32.xlu0 %v1574, 14
      %v1657 = vpop.permute.xlu0 %1656
      %1658 = vrot.lane.b32.xlu0 %v1576, 14
      %v1659 = vpop.permute.xlu0 %1658
      %1660 = vrot.lane.b32.xlu0 %v1578, 14
      %v1661 = vpop.permute.xlu0 %1660
      %1662 = vrot.lane.b32.xlu0 %v1580, 14
      %v1663 = vpop.permute.xlu0 %1662
      %1664 = vrot.lane.b32.xlu0 %v1582, 14
      %v1665 = vpop.permute.xlu0 %1664
      %1666 = vrot.lane.b32.xlu0 %v1584, 14
      %v1667 = vpop.permute.xlu0 %1666
      %1668 = vrot.lane.b32.xlu0 %v1586, 14
      %v1669 = vpop.permute.xlu0 %1668
      %1670 = vrot.lane.b32.xlu0 %v1588, 14
      %v1671 = vpop.permute.xlu0 %1670
      %1672 = vrot.lane.b32.xlu0 %v1590, 14
      %v1673 = vpop.permute.xlu0 %1672
      %1674 = vrot.lane.b32.xlu0 %v1592, 14
      %v1675 = vpop.permute.xlu0 %1674
      %1676 = vrot.lane.b32.xlu0 %v1594, 14
      %v1677 = vpop.permute.xlu0 %1676
      %1678 = vrot.lane.b32.xlu0 %v1596, 14
      %v1679 = vpop.permute.xlu0 %1678
      %1680 = vrot.lane.b32.xlu0 %v1598, 14
      %v1681 = vpop.permute.xlu0 %1680
      %1682 = vrot.lane.b32.xlu0 %v1600, 14
      %v1683 = vpop.permute.xlu0 %1682
      %1684 = vrot.lane.b32.xlu0 %v1602, 14
      %v1685 = vpop.permute.xlu0 %1684
      %1686 = vrot.lane.b32.xlu0 %v1604, 14
      %v1687 = vpop.permute.xlu0 %1686
      %1688 = vrot.lane.b32.xlu0 %v1606, 14
      %v1689 = vpop.permute.xlu0 %1688
      %1690 = vrot.lane.b32.xlu0 %v1608, 14
      %v1691 = vpop.permute.xlu0 %1690
      %1692 = vrot.lane.b32.xlu0 %v1610, 14
      %v1693 = vpop.permute.xlu0 %1692
      %1694 = vrot.lane.b32.xlu0 %v1612, 14
      %v1695 = vpop.permute.xlu0 %1694
      %1696 = vrot.lane.b32.xlu0 %v1614, 14
      %v1697 = vpop.permute.xlu0 %1696
      %1698 = vrot.lane.b32.xlu0 %v1616, 14
      %v1699 = vpop.permute.xlu0 %1698
      %1700 = vrot.lane.b32.xlu0 %v1618, 14
      %v1701 = vpop.permute.xlu0 %1700
      %1702 = vrot.lane.b32.xlu0 %v1620, 14
      %v1703 = vpop.permute.xlu0 %1702
      %1704 = vrot.lane.b32.xlu0 %v1622, 14
      %v1705 = vpop.permute.xlu0 %1704
      %1706 = vrot.lane.b32.xlu0 %v1624, 14
      %v1707 = vpop.permute.xlu0 %1706
      %1708 = vrot.lane.b32.xlu0 %v1626, 14
      %v1709 = vpop.permute.xlu0 %1708
      %1710 = vrot.lane.b32.xlu0 %v1628, 14
      %v1711 = vpop.permute.xlu0 %1710
      %1712 = vrot.lane.b32.xlu0 %v1630, 14
      %v1713 = vpop.permute.xlu0 %1712
      %1714 = vrot.lane.b32.xlu0 %v1632, 14
      %v1715 = vpop.permute.xlu0 %1714
      %1716 = vrot.lane.b32.xlu0 %v1634, 14
      %v1717 = vpop.permute.xlu0 %1716
      %1718 = vrot.lane.b32.xlu0 %v1636, 14
      %v1719 = vpop.permute.xlu0 %1718
      %1720 = vrot.lane.b32.xlu0 %v1638, 14
      %v1721 = vpop.permute.xlu0 %1720
      %1722 = vrot.lane.b32.xlu0 %v1640, 14
      %v1723 = vpop.permute.xlu0 %1722
      %1724 = vrot.lane.b32.xlu0 %v1641, 14
      %v1725 = vpop.permute.xlu0 %1724
      %vm1768 = vcmask 1041408
      %v1769 = vrot.slane %v392, 6
      %v1770 = vrot.slane %v393, 6
      %v1771 = vsel %vm1768, %v1769, %v1770
      %v1772 = vrot.slane %v394, 6
      %v1773 = vsel %vm1768, %v1770, %v1772
      %v1774 = vrot.slane %v395, 6
      %v1775 = vsel %vm1768, %v1772, %v1774
      %v1776 = vrot.slane %v396, 6
      %v1777 = vsel %vm1768, %v1774, %v1776
      %v1778 = vrot.slane %v397, 6
      %v1779 = vsel %vm1768, %v1776, %v1778
      %v1780 = vrot.slane %v398, 6
      %v1781 = vsel %vm1768, %v1778, %v1780
      %v1782 = vrot.slane %v399, 6
      %v1783 = vsel %vm1768, %v1780, %v1782
      %v1784 = vrot.slane %v400, 6
      %v1785 = vsel %vm1768, %v1782, %v1784
      %v1786 = vrot.slane %v401, 6
      %v1787 = vsel %vm1768, %v1784, %v1786
      %v1788 = vrot.slane %v402, 6
      %v1789 = vsel %vm1768, %v1786, %v1788
      %v1790 = vrot.slane %v403, 6
      %v1791 = vsel %vm1768, %v1788, %v1790
      %v1792 = vrot.slane %v404, 6
      %v1793 = vsel %vm1768, %v1790, %v1792
      %v1794 = vrot.slane %v405, 6
      %v1795 = vsel %vm1768, %v1792, %v1794
      %v1796 = vrot.slane %v406, 6
      %v1797 = vsel %vm1768, %v1794, %v1796
      %v1798 = vrot.slane %v407, 6
      %v1799 = vsel %vm1768, %v1796, %v1798
      %v1800 = vrot.slane %v408, 6
      %v1801 = vsel %vm1768, %v1798, %v1800
      %v1802 = vrot.slane %v409, 6
      %v1803 = vsel %vm1768, %v1800, %v1802
      %v1804 = vrot.slane %v410, 6
      %v1805 = vsel %vm1768, %v1802, %v1804
      %v1806 = vrot.slane %v411, 6
      %v1807 = vsel %vm1768, %v1804, %v1806
      %v1808 = vrot.slane %v412, 6
      %v1809 = vsel %vm1768, %v1806, %v1808
      %v1810 = vrot.slane %v413, 6
      %v1811 = vsel %vm1768, %v1808, %v1810
      %v1812 = vrot.slane %v414, 6
      %v1813 = vsel %vm1768, %v1810, %v1812
      %v1814 = vrot.slane %v415, 6
      %v1815 = vsel %vm1768, %v1812, %v1814
      %v1816 = vrot.slane %v416, 6
      %v1817 = vsel %vm1768, %v1814, %v1816
      %v1818 = vrot.slane %v417, 6
      %v1819 = vsel %vm1768, %v1816, %v1818
      %v1820 = vrot.slane %v418, 6
      %v1821 = vsel %vm1768, %v1818, %v1820
      %v1822 = vrot.slane %v419, 6
      %v1823 = vsel %vm1768, %v1820, %v1822
      %v1824 = vrot.slane %v420, 6
      %v1825 = vsel %vm1768, %v1822, %v1824
      %v1826 = vrot.slane %v421, 6
      %v1827 = vsel %vm1768, %v1824, %v1826
      %v1828 = vrot.slane %v422, 6
      %v1829 = vsel %vm1768, %v1826, %v1828
      %v1830 = vrot.slane %v423, 6
      %v1831 = vsel %vm1768, %v1828, %v1830
      %v1832 = vrot.slane %v424, 6
      %v1833 = vsel %vm1768, %v1830, %v1832
      %v1834 = vrot.slane %v425, 6
      %v1835 = vsel %vm1768, %v1832, %v1834
      %v1836 = vrot.slane %v426, 6
      %v1837 = vsel %vm1768, %v1834, %v1836
      %v1838 = vrot.slane %v427, 6
      %v1839 = vsel %vm1768, %v1836, %v1838
      %v1840 = vrot.slane %v428, 6
      %v1841 = vsel %vm1768, %v1838, %v1840
      %v1842 = vrot.slane %v429, 6
      %v1843 = vsel %vm1768, %v1840, %v1842
      %v1844 = vrot.slane %v430, 6
      %v1845 = vsel %vm1768, %v1842, %v1844
      %v1846 = vrot.slane %v390, 6
      %v1847 = vsel %vm1768, %v1844, %v1846
      %v1848 = vrot.slane %v391, 6
      %v1849 = vsel %vm1768, %v1846, %v1848
      %v1850 = vsel %vm1768, %v1848, %v1769
      %1851 = vrot.lane.b32.xlu0 %v1769, 16
      %v1852 = vpop.permute.xlu0 %1851
      %1853 = vrot.lane.b32.xlu0 %v1771, 16
      %v1854 = vpop.permute.xlu0 %1853
      %1855 = vrot.lane.b32.xlu0 %v1773, 16
      %v1856 = vpop.permute.xlu0 %1855
      %1857 = vrot.lane.b32.xlu0 %v1775, 16
      %v1858 = vpop.permute.xlu0 %1857
      %1859 = vrot.lane.b32.xlu0 %v1777, 16
      %v1860 = vpop.permute.xlu0 %1859
      %1861 = vrot.lane.b32.xlu0 %v1779, 16
      %v1862 = vpop.permute.xlu0 %1861
      %1863 = vrot.lane.b32.xlu0 %v1781, 16
      %v1864 = vpop.permute.xlu0 %1863
      %1865 = vrot.lane.b32.xlu0 %v1783, 16
      %v1866 = vpop.permute.xlu0 %1865
      %1867 = vrot.lane.b32.xlu0 %v1785, 16
      %v1868 = vpop.permute.xlu0 %1867
      %1869 = vrot.lane.b32.xlu0 %v1787, 16
      %v1870 = vpop.permute.xlu0 %1869
      %1871 = vrot.lane.b32.xlu0 %v1789, 16
      %v1872 = vpop.permute.xlu0 %1871
      %1873 = vrot.lane.b32.xlu0 %v1791, 16
      %v1874 = vpop.permute.xlu0 %1873
      %1875 = vrot.lane.b32.xlu0 %v1793, 16
      %v1876 = vpop.permute.xlu0 %1875
      %1877 = vrot.lane.b32.xlu0 %v1795, 16
      %v1878 = vpop.permute.xlu0 %1877
      %1879 = vrot.lane.b32.xlu0 %v1797, 16
      %v1880 = vpop.permute.xlu0 %1879
      %1881 = vrot.lane.b32.xlu0 %v1799, 16
      %v1882 = vpop.permute.xlu0 %1881
      %1883 = vrot.lane.b32.xlu0 %v1801, 16
      %v1884 = vpop.permute.xlu0 %1883
      %1885 = vrot.lane.b32.xlu0 %v1803, 16
      %v1886 = vpop.permute.xlu0 %1885
      %1887 = vrot.lane.b32.xlu0 %v1805, 16
      %v1888 = vpop.permute.xlu0 %1887
      %1889 = vrot.lane.b32.xlu0 %v1807, 16
      %v1890 = vpop.permute.xlu0 %1889
      %1891 = vrot.lane.b32.xlu0 %v1809, 16
      %v1892 = vpop.permute.xlu0 %1891
      %1893 = vrot.lane.b32.xlu0 %v1811, 16
      %v1894 = vpop.permute.xlu0 %1893
      %1895 = vrot.lane.b32.xlu0 %v1813, 16
      %v1896 = vpop.permute.xlu0 %1895
      %1897 = vrot.lane.b32.xlu0 %v1815, 16
      %v1898 = vpop.permute.xlu0 %1897
      %1899 = vrot.lane.b32.xlu0 %v1817, 16
      %v1900 = vpop.permute.xlu0 %1899
      %1901 = vrot.lane.b32.xlu0 %v1819, 16
      %v1902 = vpop.permute.xlu0 %1901
      %1903 = vrot.lane.b32.xlu0 %v1821, 16
      %v1904 = vpop.permute.xlu0 %1903
      %1905 = vrot.lane.b32.xlu0 %v1823, 16
      %v1906 = vpop.permute.xlu0 %1905
      %1907 = vrot.lane.b32.xlu0 %v1825, 16
      %v1908 = vpop.permute.xlu0 %1907
      %1909 = vrot.lane.b32.xlu0 %v1827, 16
      %v1910 = vpop.permute.xlu0 %1909
      %1911 = vrot.lane.b32.xlu0 %v1829, 16
      %v1912 = vpop.permute.xlu0 %1911
      %1913 = vrot.lane.b32.xlu0 %v1831, 16
      %v1914 = vpop.permute.xlu0 %1913
      %1915 = vrot.lane.b32.xlu0 %v1833, 16
      %v1916 = vpop.permute.xlu0 %1915
      %1917 = vrot.lane.b32.xlu0 %v1835, 16
      %v1918 = vpop.permute.xlu0 %1917
      %1919 = vrot.lane.b32.xlu0 %v1837, 16
      %v1920 = vpop.permute.xlu0 %1919
      %1921 = vrot.lane.b32.xlu0 %v1839, 16
      %v1922 = vpop.permute.xlu0 %1921
      %1923 = vrot.lane.b32.xlu0 %v1841, 16
      %v1924 = vpop.permute.xlu0 %1923
      %1925 = vrot.lane.b32.xlu0 %v1843, 16
      %v1926 = vpop.permute.xlu0 %1925
      %1927 = vrot.lane.b32.xlu0 %v1845, 16
      %v1928 = vpop.permute.xlu0 %1927
      %1929 = vrot.lane.b32.xlu0 %v1847, 16
      %v1930 = vpop.permute.xlu0 %1929
      %1931 = vrot.lane.b32.xlu0 %v1849, 16
      %v1932 = vpop.permute.xlu0 %1931
      %1933 = vrot.lane.b32.xlu0 %v1850, 16
      %v1934 = vpop.permute.xlu0 %1933
      %vm1977 = vcmask 15360
      %v1978 = vsel %vm1977, %v428, %v556
      %v1979 = vsel %vm1977, %v429, %v558
      %v1980 = vsel %vm1977, %v430, %v560
      %v1981 = vsel %vm1977, %v390, %v562
      %v1982 = vsel %vm1977, %v391, %v564
      %v1983 = vsel %vm1977, %v392, %v566
      %v1984 = vsel %vm1977, %v393, %v568
      %v1985 = vsel %vm1977, %v394, %v570
      %v1986 = vsel %vm1977, %v395, %v572
      %v1987 = vsel %vm1977, %v396, %v574
      %v1988 = vsel %vm1977, %v397, %v576
      %v1989 = vsel %vm1977, %v398, %v578
      %v1990 = vsel %vm1977, %v399, %v580
      %v1991 = vsel %vm1977, %v400, %v582
      %v1992 = vsel %vm1977, %v401, %v584
      %v1993 = vsel %vm1977, %v402, %v586
      %v1994 = vsel %vm1977, %v403, %v588
      %v1995 = vsel %vm1977, %v404, %v590
      %v1996 = vsel %vm1977, %v405, %v592
      %v1997 = vsel %vm1977, %v406, %v594
      %v1998 = vsel %vm1977, %v407, %v596
      %v1999 = vsel %vm1977, %v408, %v598
      %v2000 = vsel %vm1977, %v409, %v600
      %v2001 = vsel %vm1977, %v410, %v602
      %v2002 = vsel %vm1977, %v411, %v604
      %v2003 = vsel %vm1977, %v412, %v606
      %v2004 = vsel %vm1977, %v413, %v608
      %v2005 = vsel %vm1977, %v414, %v610
      %v2006 = vsel %vm1977, %v415, %v612
      %v2007 = vsel %vm1977, %v416, %v614
      %v2008 = vsel %vm1977, %v417, %v616
      %v2009 = vsel %vm1977, %v418, %v618
      %v2010 = vsel %vm1977, %v419, %v620
      %v2011 = vsel %vm1977, %v420, %v622
      %v2012 = vsel %vm1977, %v421, %v624
      %v2013 = vsel %vm1977, %v422, %v626
      %v2014 = vsel %vm1977, %v423, %v628
      %v2015 = vsel %vm1977, %v424, %v630
      %v2016 = vsel %vm1977, %v425, %v632
      %v2017 = vsel %vm1977, %v426, %v634
      %v2018 = vsel %vm1977, %v427, %v636
      %v2019 = vsel %vm1977, %v428, %v638
      %vm2020 = vcmask 31744
      %v2021 = vsel %vm2020, %v1978, %v765
      %v2022 = vsel %vm2020, %v1979, %v767
      %v2023 = vsel %vm2020, %v1980, %v769
      %v2024 = vsel %vm2020, %v1981, %v771
      %v2025 = vsel %vm2020, %v1982, %v773
      %v2026 = vsel %vm2020, %v1983, %v775
      %v2027 = vsel %vm2020, %v1984, %v777
      %v2028 = vsel %vm2020, %v1985, %v779
      %v2029 = vsel %vm2020, %v1986, %v781
      %v2030 = vsel %vm2020, %v1987, %v783
      %v2031 = vsel %vm2020, %v1988, %v785
      %v2032 = vsel %vm2020, %v1989, %v787
      %v2033 = vsel %vm2020, %v1990, %v789
      %v2034 = vsel %vm2020, %v1991, %v791
      %v2035 = vsel %vm2020, %v1992, %v793
      %v2036 = vsel %vm2020, %v1993, %v795
      %v2037 = vsel %vm2020, %v1994, %v797
      %v2038 = vsel %vm2020, %v1995, %v799
      %v2039 = vsel %vm2020, %v1996, %v801
      %v2040 = vsel %vm2020, %v1997, %v803
      %v2041 = vsel %vm2020, %v1998, %v805
      %v2042 = vsel %vm2020, %v1999, %v807
      %v2043 = vsel %vm2020, %v2000, %v809
      %v2044 = vsel %vm2020, %v2001, %v811
      %v2045 = vsel %vm2020, %v2002, %v813
      %v2046 = vsel %vm2020, %v2003, %v815
      %v2047 = vsel %vm2020, %v2004, %v817
      %v2048 = vsel %vm2020, %v2005, %v819
      %v2049 = vsel %vm2020, %v2006, %v821
      %v2050 = vsel %vm2020, %v2007, %v823
      %v2051 = vsel %vm2020, %v2008, %v825
      %v2052 = vsel %vm2020, %v2009, %v827
      %v2053 = vsel %vm2020, %v2010, %v829
      %v2054 = vsel %vm2020, %v2011, %v831
      %v2055 = vsel %vm2020, %v2012, %v833
      %v2056 = vsel %vm2020, %v2013, %v835
      %v2057 = vsel %vm2020, %v2014, %v837
      %v2058 = vsel %vm2020, %v2015, %v839
      %v2059 = vsel %vm2020, %v2016, %v841
      %v2060 = vsel %vm2020, %v2017, %v843
      %v2061 = vsel %vm2020, %v2018, %v845
      %v2062 = vsel %vm2020, %v2019, %v847
      %vm2063 = vcmask 48128
      %v2064 = vsel %vm2063, %v2021, %v891
      %v2065 = vsel %vm2063, %v2022, %v893
      %v2066 = vsel %vm2063, %v2023, %v895
      %v2067 = vsel %vm2063, %v2024, %v897
      %v2068 = vsel %vm2063, %v2025, %v899
      %v2069 = vsel %vm2063, %v2026, %v901
      %v2070 = vsel %vm2063, %v2027, %v903
      %v2071 = vsel %vm2063, %v2028, %v905
      %v2072 = vsel %vm2063, %v2029, %v907
      %v2073 = vsel %vm2063, %v2030, %v909
      %v2074 = vsel %vm2063, %v2031, %v911
      %v2075 = vsel %vm2063, %v2032, %v913
      %v2076 = vsel %vm2063, %v2033, %v915
      %v2077 = vsel %vm2063, %v2034, %v917
      %v2078 = vsel %vm2063, %v2035, %v919
      %v2079 = vsel %vm2063, %v2036, %v921
      %v2080 = vsel %vm2063, %v2037, %v923
      %v2081 = vsel %vm2063, %v2038, %v925
      %v2082 = vsel %vm2063, %v2039, %v927
      %v2083 = vsel %vm2063, %v2040, %v929
      %v2084 = vsel %vm2063, %v2041, %v931
      %v2085 = vsel %vm2063, %v2042, %v933
      %v2086 = vsel %vm2063, %v2043, %v935
      %v2087 = vsel %vm2063, %v2044, %v937
      %v2088 = vsel %vm2063, %v2045, %v939
      %v2089 = vsel %vm2063, %v2046, %v941
      %v2090 = vsel %vm2063, %v2047, %v943
      %v2091 = vsel %vm2063, %v2048, %v945
      %v2092 = vsel %vm2063, %v2049, %v947
      %v2093 = vsel %vm2063, %v2050, %v949
      %v2094 = vsel %vm2063, %v2051, %v951
      %v2095 = vsel %vm2063, %v2052, %v953
      %v2096 = vsel %vm2063, %v2053, %v955
      %v2097 = vsel %vm2063, %v2054, %v957
      %v2098 = vsel %vm2063, %v2055, %v959
      %v2099 = vsel %vm2063, %v2056, %v961
      %v2100 = vsel %vm2063, %v2057, %v963
      %v2101 = vsel %vm2063, %v2058, %v965
      %v2102 = vsel %vm2063, %v2059, %v967
      %v2103 = vsel %vm2063, %v2060, %v969
      %v2104 = vsel %vm2063, %v2061, %v971
      %v2105 = vsel %vm2063, %v2062, %v973
      %vm2106 = vcmask 64512
      %v2107 = vsel %vm2106, %v2064, %v1099
      %v2108 = vsel %vm2106, %v2065, %v1101
      %v2109 = vsel %vm2106, %v2066, %v1103
      %v2110 = vsel %vm2106, %v2067, %v1105
      %v2111 = vsel %vm2106, %v2068, %v1107
      %v2112 = vsel %vm2106, %v2069, %v1109
      %v2113 = vsel %vm2106, %v2070, %v1111
      %v2114 = vsel %vm2106, %v2071, %v1113
      %v2115 = vsel %vm2106, %v2072, %v1115
      %v2116 = vsel %vm2106, %v2073, %v1117
      %v2117 = vsel %vm2106, %v2074, %v1119
      %v2118 = vsel %vm2106, %v2075, %v1121
      %v2119 = vsel %vm2106, %v2076, %v1123
      %v2120 = vsel %vm2106, %v2077, %v1125
      %v2121 = vsel %vm2106, %v2078, %v1127
      %v2122 = vsel %vm2106, %v2079, %v1129
      %v2123 = vsel %vm2106, %v2080, %v1131
      %v2124 = vsel %vm2106, %v2081, %v1133
      %v2125 = vsel %vm2106, %v2082, %v1135
      %v2126 = vsel %vm2106, %v2083, %v1137
      %v2127 = vsel %vm2106, %v2084, %v1139
      %v2128 = vsel %vm2106, %v2085, %v1141
      %v2129 = vsel %vm2106, %v2086, %v1143
      %v2130 = vsel %vm2106, %v2087, %v1145
      %v2131 = vsel %vm2106, %v2088, %v1147
      %v2132 = vsel %vm2106, %v2089, %v1149
      %v2133 = vsel %vm2106, %v2090, %v1151
      %v2134 = vsel %vm2106, %v2091, %v1153
      %v2135 = vsel %vm2106, %v2092, %v1155
      %v2136 = vsel %vm2106, %v2093, %v1157
      %v2137 = vsel %vm2106, %v2094, %v1159
      %v2138 = vsel %vm2106, %v2095, %v1161
      %v2139 = vsel %vm2106, %v2096, %v1163
      %v2140 = vsel %vm2106, %v2097, %v1165
      %v2141 = vsel %vm2106, %v2098, %v1167
      %v2142 = vsel %vm2106, %v2099, %v1169
      %v2143 = vsel %vm2106, %v2100, %v1171
      %v2144 = vsel %vm2106, %v2101, %v1173
      %v2145 = vsel %vm2106, %v2102, %v1175
      %v2146 = vsel %vm2106, %v2103, %v1177
      %v2147 = vsel %vm2106, %v2104, %v1179
      %v2148 = vsel %vm2106, %v2105, %v1181
      %vm2149 = vcmask 80896
      %v2150 = vsel %vm2149, %v2107, %v1308
      %v2151 = vsel %vm2149, %v2108, %v1310
      %v2152 = vsel %vm2149, %v2109, %v1312
      %v2153 = vsel %vm2149, %v2110, %v1314
      %v2154 = vsel %vm2149, %v2111, %v1316
      %v2155 = vsel %vm2149, %v2112, %v1318
      %v2156 = vsel %vm2149, %v2113, %v1320
      %v2157 = vsel %vm2149, %v2114, %v1322
      %v2158 = vsel %vm2149, %v2115, %v1324
      %v2159 = vsel %vm2149, %v2116, %v1326
      %v2160 = vsel %vm2149, %v2117, %v1328
      %v2161 = vsel %vm2149, %v2118, %v1330
      %v2162 = vsel %vm2149, %v2119, %v1332
      %v2163 = vsel %vm2149, %v2120, %v1334
      %v2164 = vsel %vm2149, %v2121, %v1336
      %v2165 = vsel %vm2149, %v2122, %v1338
      %v2166 = vsel %vm2149, %v2123, %v1340
      %v2167 = vsel %vm2149, %v2124, %v1342
      %v2168 = vsel %vm2149, %v2125, %v1344
      %v2169 = vsel %vm2149, %v2126, %v1346
      %v2170 = vsel %vm2149, %v2127, %v1348
      %v2171 = vsel %vm2149, %v2128, %v1350
      %v2172 = vsel %vm2149, %v2129, %v1352
      %v2173 = vsel %vm2149, %v2130, %v1354
      %v2174 = vsel %vm2149, %v2131, %v1356
      %v2175 = vsel %vm2149, %v2132, %v1358
      %v2176 = vsel %vm2149, %v2133, %v1360
      %v2177 = vsel %vm2149, %v2134, %v1362
      %v2178 = vsel %vm2149, %v2135, %v1364
      %v2179 = vsel %vm2149, %v2136, %v1366
      %v2180 = vsel %vm2149, %v2137, %v1368
      %v2181 = vsel %vm2149, %v2138, %v1370
      %v2182 = vsel %vm2149, %v2139, %v1372
      %v2183 = vsel %vm2149, %v2140, %v1374
      %v2184 = vsel %vm2149, %v2141, %v1376
      %v2185 = vsel %vm2149, %v2142, %v1378
      %v2186 = vsel %vm2149, %v2143, %v1380
      %v2187 = vsel %vm2149, %v2144, %v1382
      %v2188 = vsel %vm2149, %v2145, %v1384
      %v2189 = vsel %vm2149, %v2146, %v1386
      %v2190 = vsel %vm2149, %v2147, %v1388
      %v2191 = vsel %vm2149, %v2148, %v1390
      %vm2192 = vcmask 97280
      %v2193 = vsel %vm2192, %v2150, %v1434
      %v2194 = vsel %vm2192, %v2151, %v1436
      %v2195 = vsel %vm2192, %v2152, %v1438
      %v2196 = vsel %vm2192, %v2153, %v1440
      %v2197 = vsel %vm2192, %v2154, %v1442
      %v2198 = vsel %vm2192, %v2155, %v1444
      %v2199 = vsel %vm2192, %v2156, %v1446
      %v2200 = vsel %vm2192, %v2157, %v1448
      %v2201 = vsel %vm2192, %v2158, %v1450
      %v2202 = vsel %vm2192, %v2159, %v1452
      %v2203 = vsel %vm2192, %v2160, %v1454
      %v2204 = vsel %vm2192, %v2161, %v1456
      %v2205 = vsel %vm2192, %v2162, %v1458
      %v2206 = vsel %vm2192, %v2163, %v1460
      %v2207 = vsel %vm2192, %v2164, %v1462
      %v2208 = vsel %vm2192, %v2165, %v1464
      %v2209 = vsel %vm2192, %v2166, %v1466
      %v2210 = vsel %vm2192, %v2167, %v1468
      %v2211 = vsel %vm2192, %v2168, %v1470
      %v2212 = vsel %vm2192, %v2169, %v1472
      %v2213 = vsel %vm2192, %v2170, %v1474
      %v2214 = vsel %vm2192, %v2171, %v1476
      %v2215 = vsel %vm2192, %v2172, %v1478
      %v2216 = vsel %vm2192, %v2173, %v1480
      %v2217 = vsel %vm2192, %v2174, %v1482
      %v2218 = vsel %vm2192, %v2175, %v1484
      %v2219 = vsel %vm2192, %v2176, %v1486
      %v2220 = vsel %vm2192, %v2177, %v1488
      %v2221 = vsel %vm2192, %v2178, %v1490
      %v2222 = vsel %vm2192, %v2179, %v1492
      %v2223 = vsel %vm2192, %v2180, %v1494
      %v2224 = vsel %vm2192, %v2181, %v1496
      %v2225 = vsel %vm2192, %v2182, %v1498
      %v2226 = vsel %vm2192, %v2183, %v1500
      %v2227 = vsel %vm2192, %v2184, %v1502
      %v2228 = vsel %vm2192, %v2185, %v1504
      %v2229 = vsel %vm2192, %v2186, %v1506
      %v2230 = vsel %vm2192, %v2187, %v1508
      %v2231 = vsel %vm2192, %v2188, %v1510
      %v2232 = vsel %vm2192, %v2189, %v1512
      %v2233 = vsel %vm2192, %v2190, %v1514
      %v2234 = vsel %vm2192, %v2191, %v1516
      %vm2235 = vcmask 113664
      %v2236 = vsel %vm2235, %v2193, %v1643
      %v2237 = vsel %vm2235, %v2194, %v1645
      %v2238 = vsel %vm2235, %v2195, %v1647
      %v2239 = vsel %vm2235, %v2196, %v1649
      %v2240 = vsel %vm2235, %v2197, %v1651
      %v2241 = vsel %vm2235, %v2198, %v1653
      %v2242 = vsel %vm2235, %v2199, %v1655
      %v2243 = vsel %vm2235, %v2200, %v1657
      %v2244 = vsel %vm2235, %v2201, %v1659
      %v2245 = vsel %vm2235, %v2202, %v1661
      %v2246 = vsel %vm2235, %v2203, %v1663
      %v2247 = vsel %vm2235, %v2204, %v1665
      %v2248 = vsel %vm2235, %v2205, %v1667
      %v2249 = vsel %vm2235, %v2206, %v1669
      %v2250 = vsel %vm2235, %v2207, %v1671
      %v2251 = vsel %vm2235, %v2208, %v1673
      %v2252 = vsel %vm2235, %v2209, %v1675
      %v2253 = vsel %vm2235, %v2210, %v1677
      %v2254 = vsel %vm2235, %v2211, %v1679
      %v2255 = vsel %vm2235, %v2212, %v1681
      %v2256 = vsel %vm2235, %v2213, %v1683
      %v2257 = vsel %vm2235, %v2214, %v1685
      %v2258 = vsel %vm2235, %v2215, %v1687
      %v2259 = vsel %vm2235, %v2216, %v1689
      %v2260 = vsel %vm2235, %v2217, %v1691
      %v2261 = vsel %vm2235, %v2218, %v1693
      %v2262 = vsel %vm2235, %v2219, %v1695
      %v2263 = vsel %vm2235, %v2220, %v1697
      %v2264 = vsel %vm2235, %v2221, %v1699
      %v2265 = vsel %vm2235, %v2222, %v1701
      %v2266 = vsel %vm2235, %v2223, %v1703
      %v2267 = vsel %vm2235, %v2224, %v1705
      %v2268 = vsel %vm2235, %v2225, %v1707
      %v2269 = vsel %vm2235, %v2226, %v1709
      %v2270 = vsel %vm2235, %v2227, %v1711
      %v2271 = vsel %vm2235, %v2228, %v1713
      %v2272 = vsel %vm2235, %v2229, %v1715
      %v2273 = vsel %vm2235, %v2230, %v1717
      %v2274 = vsel %vm2235, %v2231, %v1719
      %v2275 = vsel %vm2235, %v2232, %v1721
      %v2276 = vsel %vm2235, %v2233, %v1723
      %v2277 = vsel %vm2235, %v2234, %v1725
      %vm2278 = vcmask 130048
      %v2279 = vsel %vm2278, %v2236, %v1852
      %v2280 = vsel %vm2278, %v2237, %v1854
      %v2281 = vsel %vm2278, %v2238, %v1856
      %v2282 = vsel %vm2278, %v2239, %v1858
      %v2283 = vsel %vm2278, %v2240, %v1860
      %v2284 = vsel %vm2278, %v2241, %v1862
      %v2285 = vsel %vm2278, %v2242, %v1864
      %v2286 = vsel %vm2278, %v2243, %v1866
      %v2287 = vsel %vm2278, %v2244, %v1868
      %v2288 = vsel %vm2278, %v2245, %v1870
      %v2289 = vsel %vm2278, %v2246, %v1872
      %v2290 = vsel %vm2278, %v2247, %v1874
      %v2291 = vsel %vm2278, %v2248, %v1876
      %v2292 = vsel %vm2278, %v2249, %v1878
      %v2293 = vsel %vm2278, %v2250, %v1880
      %v2294 = vsel %vm2278, %v2251, %v1882
      %v2295 = vsel %vm2278, %v2252, %v1884
      %v2296 = vsel %vm2278, %v2253, %v1886
      %v2297 = vsel %vm2278, %v2254, %v1888
      %v2298 = vsel %vm2278, %v2255, %v1890
      %v2299 = vsel %vm2278, %v2256, %v1892
      %v2300 = vsel %vm2278, %v2257, %v1894
      %v2301 = vsel %vm2278, %v2258, %v1896
      %v2302 = vsel %vm2278, %v2259, %v1898
      %v2303 = vsel %vm2278, %v2260, %v1900
      %v2304 = vsel %vm2278, %v2261, %v1902
      %v2305 = vsel %vm2278, %v2262, %v1904
      %v2306 = vsel %vm2278, %v2263, %v1906
      %v2307 = vsel %vm2278, %v2264, %v1908
      %v2308 = vsel %vm2278, %v2265, %v1910
      %v2309 = vsel %vm2278, %v2266, %v1912
      %v2310 = vsel %vm2278, %v2267, %v1914
      %v2311 = vsel %vm2278, %v2268, %v1916
      %v2312 = vsel %vm2278, %v2269, %v1918
      %v2313 = vsel %vm2278, %v2270, %v1920
      %v2314 = vsel %vm2278, %v2271, %v1922
      %v2315 = vsel %vm2278, %v2272, %v1924
      %v2316 = vsel %vm2278, %v2273, %v1926
      %v2317 = vsel %vm2278, %v2274, %v1928
      %v2318 = vsel %vm2278, %v2275, %v1930
      %v2319 = vsel %vm2278, %v2276, %v1932
      %v2320 = vsel %vm2278, %v2277, %v1934
      %v2321 = vpack.c.bf16 %v2280, %v2279
      %v2322 = vpack.c.bf16 %v2282, %v2281
      %v2323 = vpack.c.bf16 %v2284, %v2283
      %v2324 = vpack.c.bf16 %v2286, %v2285
      %v2325 = vpack.c.bf16 %v2288, %v2287
      %v2326 = vpack.c.bf16 %v2290, %v2289
      %v2327 = vpack.c.bf16 %v2292, %v2291
      %v2328 = vpack.c.bf16 %v2294, %v2293
      %v2329 = vpack.c.bf16 %v2296, %v2295
      %v2330 = vpack.c.bf16 %v2298, %v2297
      %v2331 = vpack.c.bf16 %v2300, %v2299
      %v2332 = vpack.c.bf16 %v2302, %v2301
      %v2333 = vpack.c.bf16 %v2304, %v2303
      %v2334 = vpack.c.bf16 %v2306, %v2305
      %v2335 = vpack.c.bf16 %v2308, %v2307
      %v2336 = vpack.c.bf16 %v2310, %v2309
      %v2337 = vpack.c.bf16 %v2312, %v2311
      %v2338 = vpack.c.bf16 %v2314, %v2313
      %v2339 = vpack.c.bf16 %v2316, %v2315
      %v2340 = vpack.c.bf16 %v2318, %v2317
      %v2341 = vpack.c.bf16 %v2320, %v2319
      %v2342 = vld [vmem:[%s3] sm:$0xf]
      %v2343 = vld [vmem:[%s3 + $0x4] sm:$0xf]
      %v2344 = vld [vmem:[%s3 + $0x8] sm:$0x1]
      %v2345 = vld [vmem:[%s4] sm:$0x1]
      %v2347 = vlaneseq
      %v2348 = vshrl.u32 %v2347, 7
      %v2349 = vsub.s32 0, %v2348
      %v2350 = vrot.slane %v2345, %v2349
      %vm2352 = vsmask.f32 5376
      %v2354 = vshrl.u32 %v2321, 16
      %v2356 = vrot.slane %v2354, 2
      %v2357 = vshll.u32 %v2321, 16
      %v2359 = vrot.slane %v2357, 3
      %v2360 = vor.u32 %v2356, %v2359
      %v2362 = vshrl.u32 %v2322, 16
      %v2364 = vrot.slane %v2362, 2
      %v2365 = vshll.u32 %v2322, 16
      %v2367 = vrot.slane %v2365, 3
      %v2368 = vor.u32 %v2364, %v2367
      %v2369 = vsel %vm2352, %v2360, %v2368
      %v2371 = vshrl.u32 %v2323, 16
      %v2373 = vrot.slane %v2371, 2
      %v2374 = vshll.u32 %v2323, 16
      %v2376 = vrot.slane %v2374, 3
      %v2377 = vor.u32 %v2373, %v2376
      %v2378 = vsel %vm2352, %v2368, %v2377
      %v2380 = vshrl.u32 %v2324, 16
      %v2382 = vrot.slane %v2380, 2
      %v2383 = vshll.u32 %v2324, 16
      %v2385 = vrot.slane %v2383, 3
      %v2386 = vor.u32 %v2382, %v2385
      %v2387 = vsel %vm2352, %v2377, %v2386
      %v2389 = vshrl.u32 %v2325, 16
      %v2391 = vrot.slane %v2389, 2
      %v2392 = vshll.u32 %v2325, 16
      %v2394 = vrot.slane %v2392, 3
      %v2395 = vor.u32 %v2391, %v2394
      %v2396 = vsel %vm2352, %v2386, %v2395
      %v2398 = vshrl.u32 %v2326, 16
      %v2400 = vrot.slane %v2398, 2
      %v2401 = vshll.u32 %v2326, 16
      %v2403 = vrot.slane %v2401, 3
      %v2404 = vor.u32 %v2400, %v2403
      %v2405 = vsel %vm2352, %v2395, %v2404
      %v2407 = vshrl.u32 %v2327, 16
      %v2409 = vrot.slane %v2407, 2
      %v2410 = vshll.u32 %v2327, 16
      %v2412 = vrot.slane %v2410, 3
      %v2413 = vor.u32 %v2409, %v2412
      %v2414 = vsel %vm2352, %v2404, %v2413
      %v2416 = vshrl.u32 %v2328, 16
      %v2418 = vrot.slane %v2416, 2
      %v2419 = vshll.u32 %v2328, 16
      %v2421 = vrot.slane %v2419, 3
      %v2422 = vor.u32 %v2418, %v2421
      %v2423 = vsel %vm2352, %v2413, %v2422
      %v2425 = vshrl.u32 %v2329, 16
      %v2427 = vrot.slane %v2425, 2
      %v2428 = vshll.u32 %v2329, 16
      %v2430 = vrot.slane %v2428, 3
      %v2431 = vor.u32 %v2427, %v2430
      %v2432 = vsel %vm2352, %v2422, %v2431
      %v2434 = vshrl.u32 %v2330, 16
      %v2436 = vrot.slane %v2434, 2
      %v2437 = vshll.u32 %v2330, 16
      %v2439 = vrot.slane %v2437, 3
      %v2440 = vor.u32 %v2436, %v2439
      %v2441 = vsel %vm2352, %v2431, %v2440
      %v2443 = vshrl.u32 %v2331, 16
      %v2445 = vrot.slane %v2443, 2
      %v2446 = vshll.u32 %v2331, 16
      %v2448 = vrot.slane %v2446, 3
      %v2449 = vor.u32 %v2445, %v2448
      %v2450 = vsel %vm2352, %v2440, %v2449
      %v2452 = vshrl.u32 %v2332, 16
      %v2454 = vrot.slane %v2452, 2
      %v2455 = vshll.u32 %v2332, 16
      %v2457 = vrot.slane %v2455, 3
      %v2458 = vor.u32 %v2454, %v2457
      %v2459 = vsel %vm2352, %v2449, %v2458
      %v2461 = vshrl.u32 %v2333, 16
      %v2463 = vrot.slane %v2461, 2
      %v2464 = vshll.u32 %v2333, 16
      %v2466 = vrot.slane %v2464, 3
      %v2467 = vor.u32 %v2463, %v2466
      %v2468 = vsel %vm2352, %v2458, %v2467
      %v2470 = vshrl.u32 %v2334, 16
      %v2472 = vrot.slane %v2470, 2
      %v2473 = vshll.u32 %v2334, 16
      %v2475 = vrot.slane %v2473, 3
      %v2476 = vor.u32 %v2472, %v2475
      %v2477 = vsel %vm2352, %v2467, %v2476
      %v2479 = vshrl.u32 %v2335, 16
      %v2481 = vrot.slane %v2479, 2
      %v2482 = vshll.u32 %v2335, 16
      %v2484 = vrot.slane %v2482, 3
      %v2485 = vor.u32 %v2481, %v2484
      %v2486 = vsel %vm2352, %v2476, %v2485
      %v2488 = vshrl.u32 %v2336, 16
      %v2490 = vrot.slane %v2488, 2
      %v2491 = vshll.u32 %v2336, 16
      %v2493 = vrot.slane %v2491, 3
      %v2494 = vor.u32 %v2490, %v2493
      %v2495 = vsel %vm2352, %v2485, %v2494
      %v2497 = vshrl.u32 %v2337, 16
      %v2499 = vrot.slane %v2497, 2
      %v2500 = vshll.u32 %v2337, 16
      %v2502 = vrot.slane %v2500, 3
      %v2503 = vor.u32 %v2499, %v2502
      %v2504 = vsel %vm2352, %v2494, %v2503
      %v2506 = vshrl.u32 %v2338, 16
      %v2508 = vrot.slane %v2506, 2
      %v2509 = vshll.u32 %v2338, 16
      %v2511 = vrot.slane %v2509, 3
      %v2512 = vor.u32 %v2508, %v2511
      %v2513 = vsel %vm2352, %v2503, %v2512
      %v2515 = vshrl.u32 %v2339, 16
      %v2517 = vrot.slane %v2515, 2
      %v2518 = vshll.u32 %v2339, 16
      %v2520 = vrot.slane %v2518, 3
      %v2521 = vor.u32 %v2517, %v2520
      %v2522 = vsel %vm2352, %v2512, %v2521
      %v2524 = vshrl.u32 %v2340, 16
      %v2526 = vrot.slane %v2524, 2
      %v2527 = vshll.u32 %v2340, 16
      %v2529 = vrot.slane %v2527, 3
      %v2530 = vor.u32 %v2526, %v2529
      %v2531 = vsel %vm2352, %v2521, %v2530
      %v2533 = vshrl.u32 %v2341, 16
      %v2535 = vrot.slane %v2533, 2
      %v2536 = vshll.u32 %v2341, 16
      %v2538 = vrot.slane %v2536, 3
      %v2539 = vor.u32 %v2535, %v2538
      %v2540 = vsel %vm2352, %v2530, %v2539
      %v2544 = vunpack.c.l.b16 %v2342
      %v2545 = vunpack.c.l.b16 %v2343
      %v2546 = vunpack.c.l.b16 %v2344
      %v2547 = vpack.c.b16 %v2545, %v2544
      %v2548 = vpack.c.b16 %v2546, %v2546
      %vm2550 = vcmask 146432
      %v2552 = vsel %vm2550, %v2369, 0
      %v2555 = vsel %vm2550, %v2378, 0
      %v2558 = vsel %vm2550, %v2387, 0
      %v2561 = vsel %vm2550, %v2396, 0
      %v2564 = vsel %vm2550, %v2405, 0
      %v2567 = vsel %vm2550, %v2414, 0
      %v2570 = vsel %vm2550, %v2423, 0
      %v2573 = vsel %vm2550, %v2432, 0
      %v2576 = vsel %vm2550, %v2441, 0
      %v2579 = vsel %vm2550, %v2450, 0
      %v2582 = vsel %vm2550, %v2459, 0
      %v2585 = vsel %vm2550, %v2468, 0
      %v2588 = vsel %vm2550, %v2477, 0
      %v2591 = vsel %vm2550, %v2486, 0
      %v2594 = vsel %vm2550, %v2495, 0
      %v2597 = vsel %vm2550, %v2504, 0
      %v2600 = vsel %vm2550, %v2513, 0
      %v2603 = vsel %vm2550, %v2522, 0
      %v2606 = vsel %vm2550, %v2531, 0
      %v2609 = vsel %vm2550, %v2540, 0
      %v2612 = vsel %vm2550, %v2539, 0
      %vm2614 = vcmask 1040384
      %v2616 = vsel %vm2614, %v2548, 0
      %2618 = vmatprep.subr.bf16.mxu0 0
      %2619 = vmatpush1.bf16.msra.mxu0 %v2547
      %2620 = vmatprep.subr.bf16.mxu0 0
      %2621 = vmatpush1.bf16.msra.mxu0 %v2616
      %2622 = vmatprep.subr.bf16.mxu0 0
      %2623 = vmatpush1.bf16.msra.mxu0 0
      %2624 = vmatprep.subr.bf16.mxu0 0
      %2625 = vmatpush1.bf16.msra.mxu0 0
      %2626 = vmatprep.subr.bf16.mxu0 0
      %2627 = vmatpush1.bf16.msra.mxu0 0
      %2628 = vmatprep.subr.bf16.mxu0 0
      %2629 = vmatpush1.bf16.msra.mxu0 0
      %2630 = vmatprep.subr.bf16.mxu0 0
      %2631 = vmatpush1.bf16.msra.mxu0 0
      %2632 = vmatprep.subr.bf16.mxu0 0
      %2633 = vmatpush1.bf16.msra.mxu0 0
      %2634 = vmatprep.subr.bf16.mxu0 0
      %2635 = vmatpush1.bf16.msra.mxu0 0
      %2636 = vmatprep.subr.bf16.mxu0 0
      %2637 = vmatpush1.bf16.msra.mxu0 0
      %2638 = vmatprep.subr.bf16.mxu0 0
      %2639 = vmatpush1.bf16.msra.mxu0 0
      %2640 = vmatprep.subr.bf16.mxu0 0
      %2641 = vmatpush1.bf16.msra.mxu0 0
      %2642 = vmatprep.subr.bf16.mxu0 0
      %2643 = vmatpush1.bf16.msra.mxu0 0
      %2644 = vmatprep.subr.bf16.mxu0 0
      %2645 = vmatpush1.bf16.msra.mxu0 0
      %2646 = vmatprep.subr.bf16.mxu0 0
      %2647 = vmatpush1.bf16.msra.mxu0 0
      %2648 = vmatprep.subr.bf16.mxu0 0
      %2649 = vmatpush1.bf16.msra.mxu0 0
      %2650 = vmatprep.mubr.bf16.mxu0 0
      %2651 = vmatmul.mubr.bf16.gmra.mrb[0].mxu0 %v2552
      %v2652 = vpop.f32.mrb[0].mxu0
      %v2653 = vadd.f32 %v2350, %v2652
      %v2654 = vpop.f32.mrb[0].mxu0
      %v2655 = vpop.f32.mrb[0].mxu0
      %v2656 = vadd.f32 %v2350, %v2655
      %v2657 = vpop.f32.mrb[0].mxu0
      %2658 = vmatprep.mubr.bf16.mxu0 0
      %2659 = vmatmul.mubr.bf16.gmra.mrb[0].mxu0 %v2555
      %v2660 = vpop.f32.mrb[0].mxu0
      %v2661 = vadd.f32 %v2350, %v2660
      %v2662 = vpop.f32.mrb[0].mxu0
      %v2663 = vpop.f32.mrb[0].mxu0
      %v2664 = vadd.f32 %v2350, %v2663
      %v2665 = vpop.f32.mrb[0].mxu0
      %2666 = vmatprep.mubr.bf16.mxu0 0
      %2667 = vmatmul.mubr.bf16.gmra.mrb[0].mxu0 %v2558
      %v2668 = vpop.f32.mrb[0].mxu0
      %v2669 = vadd.f32 %v2350, %v2668
      %v2670 = vpop.f32.mrb[0].mxu0
      %v2671 = vpop.f32.mrb[0].mxu0
      %v2672 = vadd.f32 %v2350, %v2671
      %v2673 = vpop.f32.mrb[0].mxu0
      %2674 = vmatprep.mubr.bf16.mxu0 0
      %2675 = vmatmul.mubr.bf16.gmra.mrb[0].mxu0 %v2561
      %v2676 = vpop.f32.mrb[0].mxu0
      %v2677 = vadd.f32 %v2350, %v2676
      %v2678 = vpop.f32.mrb[0].mxu0
      %v2679 = vpop.f32.mrb[0].mxu0
      %v2680 = vadd.f32 %v2350, %v2679
      %v2681 = vpop.f32.mrb[0].mxu0
      %2682 = vmatprep.mubr.bf16.mxu0 0
      %2683 = vmatmul.mubr.bf16.gmra.mrb[0].mxu0 %v2564
      %v2684 = vpop.f32.mrb[0].mxu0
      %v2685 = vadd.f32 %v2350, %v2684
      %v2686 = vpop.f32.mrb[0].mxu0
      %v2687 = vpop.f32.mrb[0].mxu0
      %v2688 = vadd.f32 %v2350, %v2687
      %v2689 = vpop.f32.mrb[0].mxu0
      %2690 = vmatprep.mubr.bf16.mxu0 0
      %2691 = vmatmul.mubr.bf16.gmra.mrb[0].mxu0 %v2567
      %v2692 = vpop.f32.mrb[0].mxu0
      %v2693 = vadd.f32 %v2350, %v2692
      %v2694 = vpop.f32.mrb[0].mxu0
      %v2695 = vpop.f32.mrb[0].mxu0
      %v2696 = vadd.f32 %v2350, %v2695
      %v2697 = vpop.f32.mrb[0].mxu0
      %2698 = vmatprep.mubr.bf16.mxu0 0
      %2699 = vmatmul.mubr.bf16.gmra.mrb[0].mxu0 %v2570
      %v2700 = vpop.f32.mrb[0].mxu0
      %v2701 = vadd.f32 %v2350, %v2700
      %v2702 = vpop.f32.mrb[0].mxu0
      %v2703 = vpop.f32.mrb[0].mxu0
      %v2704 = vadd.f32 %v2350, %v2703
      %v2705 = vpop.f32.mrb[0].mxu0
      %2706 = vmatprep.mubr.bf16.mxu0 0
      %2707 = vmatmul.mubr.bf16.gmra.mrb[0].mxu0 %v2573
      %v2708 = vpop.f32.mrb[0].mxu0
      %v2709 = vadd.f32 %v2350, %v2708
      %v2710 = vpop.f32.mrb[0].mxu0
      %v2711 = vpop.f32.mrb[0].mxu0
      %v2712 = vadd.f32 %v2350, %v2711
      %v2713 = vpop.f32.mrb[0].mxu0
      %2714 = vmatprep.mubr.bf16.mxu0 0
      %2715 = vmatmul.mubr.bf16.gmra.mrb[0].mxu0 %v2576
      %v2716 = vpop.f32.mrb[0].mxu0
      %v2717 = vadd.f32 %v2350, %v2716
      %v2718 = vpop.f32.mrb[0].mxu0
      %v2719 = vpop.f32.mrb[0].mxu0
      %v2720 = vadd.f32 %v2350, %v2719
      %v2721 = vpop.f32.mrb[0].mxu0
      %2722 = vmatprep.mubr.bf16.mxu0 0
      %2723 = vmatmul.mubr.bf16.gmra.mrb[0].mxu0 %v2579
      %v2724 = vpop.f32.mrb[0].mxu0
      %v2725 = vadd.f32 %v2350, %v2724
      %v2726 = vpop.f32.mrb[0].mxu0
      %v2727 = vpop.f32.mrb[0].mxu0
      %v2728 = vadd.f32 %v2350, %v2727
      %v2729 = vpop.f32.mrb[0].mxu0
      %2730 = vmatprep.mubr.bf16.mxu0 0
      %2731 = vmatmul.mubr.bf16.gmra.mrb[0].mxu0 %v2582
      %v2732 = vpop.f32.mrb[0].mxu0
      %v2733 = vadd.f32 %v2350, %v2732
      %v2734 = vpop.f32.mrb[0].mxu0
      %v2735 = vpop.f32.mrb[0].mxu0
      %v2736 = vadd.f32 %v2350, %v2735
      %v2737 = vpop.f32.mrb[0].mxu0
      %2738 = vmatprep.mubr.bf16.mxu0 0
      %2739 = vmatmul.mubr.bf16.gmra.mrb[0].mxu0 %v2585
      %v2740 = vpop.f32.mrb[0].mxu0
      %v2741 = vadd.f32 %v2350, %v2740
      %v2742 = vpop.f32.mrb[0].mxu0
      %v2743 = vpop.f32.mrb[0].mxu0
      %v2744 = vadd.f32 %v2350, %v2743
      %v2745 = vpop.f32.mrb[0].mxu0
      %2746 = vmatprep.mubr.bf16.mxu0 0
      %2747 = vmatmul.mubr.bf16.gmra.mrb[0].mxu0 %v2588
      %v2748 = vpop.f32.mrb[0].mxu0
      %v2749 = vadd.f32 %v2350, %v2748
      %v2750 = vpop.f32.mrb[0].mxu0
      %v2751 = vpop.f32.mrb[0].mxu0
      %v2752 = vadd.f32 %v2350, %v2751
      %v2753 = vpop.f32.mrb[0].mxu0
      %2754 = vmatprep.mubr.bf16.mxu0 0
      %2755 = vmatmul.mubr.bf16.gmra.mrb[0].mxu0 %v2591
      %v2756 = vpop.f32.mrb[0].mxu0
      %v2757 = vadd.f32 %v2350, %v2756
      %v2758 = vpop.f32.mrb[0].mxu0
      %v2759 = vpop.f32.mrb[0].mxu0
      %v2760 = vadd.f32 %v2350, %v2759
      %v2761 = vpop.f32.mrb[0].mxu0
      %2762 = vmatprep.mubr.bf16.mxu0 0
      %2763 = vmatmul.mubr.bf16.gmra.mrb[0].mxu0 %v2594
      %v2764 = vpop.f32.mrb[0].mxu0
      %v2765 = vadd.f32 %v2350, %v2764
      %v2766 = vpop.f32.mrb[0].mxu0
      %v2767 = vpop.f32.mrb[0].mxu0
      %v2768 = vadd.f32 %v2350, %v2767
      %v2769 = vpop.f32.mrb[0].mxu0
      %2770 = vmatprep.mubr.bf16.mxu0 0
      %2771 = vmatmul.mubr.bf16.gmra.mrb[0].mxu0 %v2597
      %v2772 = vpop.f32.mrb[0].mxu0
      %v2773 = vadd.f32 %v2350, %v2772
      %v2774 = vpop.f32.mrb[0].mxu0
      %v2775 = vpop.f32.mrb[0].mxu0
      %v2776 = vadd.f32 %v2350, %v2775
      %v2777 = vpop.f32.mrb[0].mxu0
      %2778 = vmatprep.mubr.bf16.mxu0 0
      %2779 = vmatmul.mubr.bf16.gmra.mrb[0].mxu0 %v2600
      %v2780 = vpop.f32.mrb[0].mxu0
      %v2781 = vadd.f32 %v2350, %v2780
      %v2782 = vpop.f32.mrb[0].mxu0
      %v2783 = vpop.f32.mrb[0].mxu0
      %v2784 = vadd.f32 %v2350, %v2783
      %v2785 = vpop.f32.mrb[0].mxu0
      %2786 = vmatprep.mubr.bf16.mxu0 0
      %2787 = vmatmul.mubr.bf16.gmra.mrb[0].mxu0 %v2603
      %v2788 = vpop.f32.mrb[0].mxu0
      %v2789 = vadd.f32 %v2350, %v2788
      %v2790 = vpop.f32.mrb[0].mxu0
      %v2791 = vpop.f32.mrb[0].mxu0
      %v2792 = vadd.f32 %v2350, %v2791
      %v2793 = vpop.f32.mrb[0].mxu0
      %2794 = vmatprep.mubr.bf16.mxu0 0
      %2795 = vmatmul.mubr.bf16.gmra.mrb[0].mxu0 %v2606
      %v2796 = vpop.f32.mrb[0].mxu0
      %v2797 = vadd.f32 %v2350, %v2796
      %v2798 = vpop.f32.mrb[0].mxu0
      %v2799 = vpop.f32.mrb[0].mxu0
      %v2800 = vadd.f32 %v2350, %v2799
      %v2801 = vpop.f32.mrb[0].mxu0
      %2802 = vmatprep.mubr.bf16.mxu0 0
      %2803 = vmatmul.mubr.bf16.gmra.mrb[0].mxu0 %v2609
      %v2804 = vpop.f32.mrb[0].mxu0
      %v2805 = vadd.f32 %v2350, %v2804
      %v2806 = vpop.f32.mrb[0].mxu0
      %v2807 = vpop.f32.mrb[0].mxu0
      %v2808 = vadd.f32 %v2350, %v2807
      %v2809 = vpop.f32.mrb[0].mxu0
      %2810 = vmatprep.mubr.bf16.mxu0 0
      %2811 = vmatmul.mubr.bf16.gmra.mrb[0].mxu0 %v2612
      %v2812 = vpop.f32.mrb[0].mxu0
      %v2813 = vadd.f32 %v2350, %v2812
      %v2814 = vpop.f32.mrb[0].mxu0
      %v2815 = vpop.f32.mrb[0].mxu0
      %v2816 = vpop.f32.mrb[0].mxu0
      %2817 = vdwg.mxu0
      %v2818 = vmax.f32 %v2653, 0.0
      %v2819 = vmax.f32 %v2656, 0.0
      %v2820 = vmax.f32 %v2661, 0.0
      %v2821 = vmax.f32 %v2664, 0.0
      %v2822 = vmax.f32 %v2669, 0.0
      %v2823 = vmax.f32 %v2672, 0.0
      %v2824 = vmax.f32 %v2677, 0.0
      %v2825 = vmax.f32 %v2680, 0.0
      %v2826 = vmax.f32 %v2685, 0.0
      %v2827 = vmax.f32 %v2688, 0.0
      %v2828 = vmax.f32 %v2693, 0.0
      %v2829 = vmax.f32 %v2696, 0.0
      %v2830 = vmax.f32 %v2701, 0.0
      %v2831 = vmax.f32 %v2704, 0.0
      %v2832 = vmax.f32 %v2709, 0.0
      %v2833 = vmax.f32 %v2712, 0.0
      %v2834 = vmax.f32 %v2717, 0.0
      %v2835 = vmax.f32 %v2720, 0.0
      %v2836 = vmax.f32 %v2725, 0.0
      %v2837 = vmax.f32 %v2728, 0.0
      %v2838 = vmax.f32 %v2733, 0.0
      %v2839 = vmax.f32 %v2736, 0.0
      %v2840 = vmax.f32 %v2741, 0.0
      %v2841 = vmax.f32 %v2744, 0.0
      %v2842 = vmax.f32 %v2749, 0.0
      %v2843 = vmax.f32 %v2752, 0.0
      %v2844 = vmax.f32 %v2757, 0.0
      %v2845 = vmax.f32 %v2760, 0.0
      %v2846 = vmax.f32 %v2765, 0.0
      %v2847 = vmax.f32 %v2768, 0.0
      %v2848 = vmax.f32 %v2773, 0.0
      %v2849 = vmax.f32 %v2776, 0.0
      %v2850 = vmax.f32 %v2781, 0.0
      %v2851 = vmax.f32 %v2784, 0.0
      %v2852 = vmax.f32 %v2789, 0.0
      %v2853 = vmax.f32 %v2792, 0.0
      %v2854 = vmax.f32 %v2797, 0.0
      %v2855 = vmax.f32 %v2800, 0.0
      %v2856 = vmax.f32 %v2805, 0.0
      %v2857 = vmax.f32 %v2808, 0.0
      %v2858 = vmax.f32 %v2813, 0.0
      %v2859 = vpack.c.bf16 %v2819, %v2818
      %v2860 = vpack.c.bf16 %v2821, %v2820
      %v2861 = vpack.c.bf16 %v2823, %v2822
      %v2862 = vpack.c.bf16 %v2825, %v2824
      %v2863 = vpack.c.bf16 %v2827, %v2826
      %v2864 = vpack.c.bf16 %v2829, %v2828
      %v2865 = vpack.c.bf16 %v2831, %v2830
      %v2866 = vpack.c.bf16 %v2833, %v2832
      %v2867 = vpack.c.bf16 %v2835, %v2834
      %v2868 = vpack.c.bf16 %v2837, %v2836
      %v2869 = vpack.c.bf16 %v2839, %v2838
      %v2870 = vpack.c.bf16 %v2841, %v2840
      %v2871 = vpack.c.bf16 %v2843, %v2842
      %v2872 = vpack.c.bf16 %v2845, %v2844
      %v2873 = vpack.c.bf16 %v2847, %v2846
      %v2874 = vpack.c.bf16 %v2849, %v2848
      %v2875 = vpack.c.bf16 %v2851, %v2850
      %v2876 = vpack.c.bf16 %v2853, %v2852
      %v2877 = vpack.c.bf16 %v2855, %v2854
      %v2878 = vpack.c.bf16 %v2857, %v2856
      %v2879 = vpack.c.bf16 %v2858, %v2858
      %v2880 = vld [vmem:[%s5] sm:$0xf]
      %v2881 = vld [vmem:[%s5 + $0x4] sm:$0xf]
      %v2882 = vld [vmem:[%s5 + $0x8] sm:$0xf]
      %v2883 = vld [vmem:[%s5 + $0xc] sm:$0xf]
      %v2884 = vld [vmem:[%s6] sm:$0x1]
      %v2886 = vlaneseq
      %v2887 = vshrl.u32 %v2886, 7
      %v2888 = vsub.s32 0, %v2887
      %v2889 = vrot.slane %v2884, %v2888
      %v2895 = vunpack.c.l.b16 %v2880
      %v2896 = vunpack.c.l.b16 %v2881
      %v2897 = vunpack.c.l.b16 %v2882
      %v2898 = vunpack.c.l.b16 %v2883
      %v2899 = vpack.c.b16 %v2896, %v2895
      %v2900 = vpack.c.b16 %v2898, %v2897
      %vm2903 = vcmask 261120
      %v2905 = vsel %vm2903, %v2859, 0
      %v2908 = vsel %vm2903, %v2860, 0
      %v2911 = vsel %vm2903, %v2861, 0
      %v2914 = vsel %vm2903, %v2862, 0
      %v2917 = vsel %vm2903, %v2863, 0
      %v2920 = vsel %vm2903, %v2864, 0
      %v2923 = vsel %vm2903, %v2865, 0
      %v2926 = vsel %vm2903, %v2866, 0
      %v2929 = vsel %vm2903, %v2867, 0
      %v2932 = vsel %vm2903, %v2868, 0
      %v2935 = vsel %vm2903, %v2869, 0
      %v2938 = vsel %vm2903, %v2870, 0
      %v2941 = vsel %vm2903, %v2871, 0
      %v2944 = vsel %vm2903, %v2872, 0
      %v2947 = vsel %vm2903, %v2873, 0
      %v2950 = vsel %vm2903, %v2874, 0
      %v2953 = vsel %vm2903, %v2875, 0
      %v2956 = vsel %vm2903, %v2876, 0
      %v2959 = vsel %vm2903, %v2877, 0
      %v2962 = vsel %vm2903, %v2878, 0
      %v2965 = vsel %vm2903, %v2879, 0
      %2967 = vmatprep.subr.bf16.mxu0 0
      %2968 = vmatpush1.bf16.msra.mxu0 %v2899
      %2969 = vmatprep.subr.bf16.mxu0 0
      %2970 = vmatpush1.bf16.msra.mxu0 %v2900
      %2971 = vmatprep.subr.bf16.mxu0 0
      %2972 = vmatpush1.bf16.msra.mxu0 0
      %2973 = vmatprep.subr.bf16.mxu0 0
      %2974 = vmatpush1.bf16.msra.mxu0 0
      %2975 = vmatprep.subr.bf16.mxu0 0
      %2976 = vmatpush1.bf16.msra.mxu0 0
      %2977 = vmatprep.subr.bf16.mxu0 0
      %2978 = vmatpush1.bf16.msra.mxu0 0
      %2979 = vmatprep.subr.bf16.mxu0 0
      %2980 = vmatpush1.bf16.msra.mxu0 0
      %2981 = vmatprep.subr.bf16.mxu0 0
      %2982 = vmatpush1.bf16.msra.mxu0 0
      %2983 = vmatprep.subr.bf16.mxu0 0
      %2984 = vmatpush1.bf16.msra.mxu0 0
      %2985 = vmatprep.subr.bf16.mxu0 0
      %2986 = vmatpush1.bf16.msra.mxu0 0
      %2987 = vmatprep.subr.bf16.mxu0 0
      %2988 = vmatpush1.bf16.msra.mxu0 0
      %2989 = vmatprep.subr.bf16.mxu0 0
      %2990 = vmatpush1.bf16.msra.mxu0 0
      %2991 = vmatprep.subr.bf16.mxu0 0
      %2992 = vmatpush1.bf16.msra.mxu0 0
      %2993 = vmatprep.subr.bf16.mxu0 0
      %2994 = vmatpush1.bf16.msra.mxu0 0
      %2995 = vmatprep.subr.bf16.mxu0 0
      %2996 = vmatpush1.bf16.msra.mxu0 0
      %2997 = vmatprep.subr.bf16.mxu0 0
      %2998 = vmatpush1.bf16.msra.mxu0 0
      %2999 = vmatprep.mubr.bf16.mxu0 0
      %3000 = vmatmul.mubr.bf16.gmra.mrb[0].mxu0 %v2905
      %v3001 = vpop.f32.mrb[0].mxu0
      %v3002 = vadd.f32 %v2889, %v3001
      %v3003 = vpop.f32.mrb[0].mxu0
      %v3004 = vpop.f32.mrb[0].mxu0
      %v3005 = vadd.f32 %v2889, %v3004
      %v3006 = vpop.f32.mrb[0].mxu0
      %3007 = vmatprep.mubr.bf16.mxu0 0
      %3008 = vmatmul.mubr.bf16.gmra.mrb[0].mxu0 %v2908
      %v3009 = vpop.f32.mrb[0].mxu0
      %v3010 = vadd.f32 %v2889, %v3009
      %v3011 = vpop.f32.mrb[0].mxu0
      %v3012 = vpop.f32.mrb[0].mxu0
      %v3013 = vadd.f32 %v2889, %v3012
      %v3014 = vpop.f32.mrb[0].mxu0
      %3015 = vmatprep.mubr.bf16.mxu0 0
      %3016 = vmatmul.mubr.bf16.gmra.mrb[0].mxu0 %v2911
      %v3017 = vpop.f32.mrb[0].mxu0
      %v3018 = vadd.f32 %v2889, %v3017
      %v3019 = vpop.f32.mrb[0].mxu0
      %v3020 = vpop.f32.mrb[0].mxu0
      %v3021 = vadd.f32 %v2889, %v3020
      %v3022 = vpop.f32.mrb[0].mxu0
      %3023 = vmatprep.mubr.bf16.mxu0 0
      %3024 = vmatmul.mubr.bf16.gmra.mrb[0].mxu0 %v2914
      %v3025 = vpop.f32.mrb[0].mxu0
      %v3026 = vadd.f32 %v2889, %v3025
      %v3027 = vpop.f32.mrb[0].mxu0
      %v3028 = vpop.f32.mrb[0].mxu0
      %v3029 = vadd.f32 %v2889, %v3028
      %v3030 = vpop.f32.mrb[0].mxu0
      %3031 = vmatprep.mubr.bf16.mxu0 0
      %3032 = vmatmul.mubr.bf16.gmra.mrb[0].mxu0 %v2917
      %v3033 = vpop.f32.mrb[0].mxu0
      %v3034 = vadd.f32 %v2889, %v3033
      %v3035 = vpop.f32.mrb[0].mxu0
      %v3036 = vpop.f32.mrb[0].mxu0
      %v3037 = vadd.f32 %v2889, %v3036
      %v3038 = vpop.f32.mrb[0].mxu0
      %3039 = vmatprep.mubr.bf16.mxu0 0
      %3040 = vmatmul.mubr.bf16.gmra.mrb[0].mxu0 %v2920
      %v3041 = vpop.f32.mrb[0].mxu0
      %v3042 = vadd.f32 %v2889, %v3041
      %v3043 = vpop.f32.mrb[0].mxu0
      %v3044 = vpop.f32.mrb[0].mxu0
      %v3045 = vadd.f32 %v2889, %v3044
      %v3046 = vpop.f32.mrb[0].mxu0
      %3047 = vmatprep.mubr.bf16.mxu0 0
      %3048 = vmatmul.mubr.bf16.gmra.mrb[0].mxu0 %v2923
      %v3049 = vpop.f32.mrb[0].mxu0
      %v3050 = vadd.f32 %v2889, %v3049
      %v3051 = vpop.f32.mrb[0].mxu0
      %v3052 = vpop.f32.mrb[0].mxu0
      %v3053 = vadd.f32 %v2889, %v3052
      %v3054 = vpop.f32.mrb[0].mxu0
      %3055 = vmatprep.mubr.bf16.mxu0 0
      %3056 = vmatmul.mubr.bf16.gmra.mrb[0].mxu0 %v2926
      %v3057 = vpop.f32.mrb[0].mxu0
      %v3058 = vadd.f32 %v2889, %v3057
      %v3059 = vpop.f32.mrb[0].mxu0
      %v3060 = vpop.f32.mrb[0].mxu0
      %v3061 = vadd.f32 %v2889, %v3060
      %v3062 = vpop.f32.mrb[0].mxu0
      %3063 = vmatprep.mubr.bf16.mxu0 0
      %3064 = vmatmul.mubr.bf16.gmra.mrb[0].mxu0 %v2929
      %v3065 = vpop.f32.mrb[0].mxu0
      %v3066 = vadd.f32 %v2889, %v3065
      %v3067 = vpop.f32.mrb[0].mxu0
      %v3068 = vpop.f32.mrb[0].mxu0
      %v3069 = vadd.f32 %v2889, %v3068
      %v3070 = vpop.f32.mrb[0].mxu0
      %3071 = vmatprep.mubr.bf16.mxu0 0
      %3072 = vmatmul.mubr.bf16.gmra.mrb[0].mxu0 %v2932
      %v3073 = vpop.f32.mrb[0].mxu0
      %v3074 = vadd.f32 %v2889, %v3073
      %v3075 = vpop.f32.mrb[0].mxu0
      %v3076 = vpop.f32.mrb[0].mxu0
      %v3077 = vadd.f32 %v2889, %v3076
      %v3078 = vpop.f32.mrb[0].mxu0
      %3079 = vmatprep.mubr.bf16.mxu0 0
      %3080 = vmatmul.mubr.bf16.gmra.mrb[0].mxu0 %v2935
      %v3081 = vpop.f32.mrb[0].mxu0
      %v3082 = vadd.f32 %v2889, %v3081
      %v3083 = vpop.f32.mrb[0].mxu0
      %v3084 = vpop.f32.mrb[0].mxu0
      %v3085 = vadd.f32 %v2889, %v3084
      %v3086 = vpop.f32.mrb[0].mxu0
      %3087 = vmatprep.mubr.bf16.mxu0 0
      %3088 = vmatmul.mubr.bf16.gmra.mrb[0].mxu0 %v2938
      %v3089 = vpop.f32.mrb[0].mxu0
      %v3090 = vadd.f32 %v2889, %v3089
      %v3091 = vpop.f32.mrb[0].mxu0
      %v3092 = vpop.f32.mrb[0].mxu0
      %v3093 = vadd.f32 %v2889, %v3092
      %v3094 = vpop.f32.mrb[0].mxu0
      %3095 = vmatprep.mubr.bf16.mxu0 0
      %3096 = vmatmul.mubr.bf16.gmra.mrb[0].mxu0 %v2941
      %v3097 = vpop.f32.mrb[0].mxu0
      %v3098 = vadd.f32 %v2889, %v3097
      %v3099 = vpop.f32.mrb[0].mxu0
      %v3100 = vpop.f32.mrb[0].mxu0
      %v3101 = vadd.f32 %v2889, %v3100
      %v3102 = vpop.f32.mrb[0].mxu0
      %3103 = vmatprep.mubr.bf16.mxu0 0
      %3104 = vmatmul.mubr.bf16.gmra.mrb[0].mxu0 %v2944
      %v3105 = vpop.f32.mrb[0].mxu0
      %v3106 = vadd.f32 %v2889, %v3105
      %v3107 = vpop.f32.mrb[0].mxu0
      %v3108 = vpop.f32.mrb[0].mxu0
      %v3109 = vadd.f32 %v2889, %v3108
      %v3110 = vpop.f32.mrb[0].mxu0
      %3111 = vmatprep.mubr.bf16.mxu0 0
      %3112 = vmatmul.mubr.bf16.gmra.mrb[0].mxu0 %v2947
      %v3113 = vpop.f32.mrb[0].mxu0
      %v3114 = vadd.f32 %v2889, %v3113
      %v3115 = vpop.f32.mrb[0].mxu0
      %v3116 = vpop.f32.mrb[0].mxu0
      %v3117 = vadd.f32 %v2889, %v3116
      %v3118 = vpop.f32.mrb[0].mxu0
      %3119 = vmatprep.mubr.bf16.mxu0 0
      %3120 = vmatmul.mubr.bf16.gmra.mrb[0].mxu0 %v2950
      %v3121 = vpop.f32.mrb[0].mxu0
      %v3122 = vadd.f32 %v2889, %v3121
      %v3123 = vpop.f32.mrb[0].mxu0
      %v3124 = vpop.f32.mrb[0].mxu0
      %v3125 = vadd.f32 %v2889, %v3124
      %v3126 = vpop.f32.mrb[0].mxu0
      %3127 = vmatprep.mubr.bf16.mxu0 0
      %3128 = vmatmul.mubr.bf16.gmra.mrb[0].mxu0 %v2953
      %v3129 = vpop.f32.mrb[0].mxu0
      %v3130 = vadd.f32 %v2889, %v3129
      %v3131 = vpop.f32.mrb[0].mxu0
      %v3132 = vpop.f32.mrb[0].mxu0
      %v3133 = vadd.f32 %v2889, %v3132
      %v3134 = vpop.f32.mrb[0].mxu0
      %3135 = vmatprep.mubr.bf16.mxu0 0
      %3136 = vmatmul.mubr.bf16.gmra.mrb[0].mxu0 %v2956
      %v3137 = vpop.f32.mrb[0].mxu0
      %v3138 = vadd.f32 %v2889, %v3137
      %v3139 = vpop.f32.mrb[0].mxu0
      %v3140 = vpop.f32.mrb[0].mxu0
      %v3141 = vadd.f32 %v2889, %v3140
      %v3142 = vpop.f32.mrb[0].mxu0
      %3143 = vmatprep.mubr.bf16.mxu0 0
      %3144 = vmatmul.mubr.bf16.gmra.mrb[0].mxu0 %v2959
      %v3145 = vpop.f32.mrb[0].mxu0
      %v3146 = vadd.f32 %v2889, %v3145
      %v3147 = vpop.f32.mrb[0].mxu0
      %v3148 = vpop.f32.mrb[0].mxu0
      %v3149 = vadd.f32 %v2889, %v3148
      %v3150 = vpop.f32.mrb[0].mxu0
      %3151 = vmatprep.mubr.bf16.mxu0 0
      %3152 = vmatmul.mubr.bf16.gmra.mrb[0].mxu0 %v2962
      %v3153 = vpop.f32.mrb[0].mxu0
      %v3154 = vadd.f32 %v2889, %v3153
      %v3155 = vpop.f32.mrb[0].mxu0
      %v3156 = vpop.f32.mrb[0].mxu0
      %v3157 = vadd.f32 %v2889, %v3156
      %v3158 = vpop.f32.mrb[0].mxu0
      %3159 = vmatprep.mubr.bf16.mxu0 0
      %3160 = vmatmul.mubr.bf16.gmra.mrb[0].mxu0 %v2965
      %v3161 = vpop.f32.mrb[0].mxu0
      %v3162 = vadd.f32 %v2889, %v3161
      %v3163 = vpop.f32.mrb[0].mxu0
      %v3164 = vpop.f32.mrb[0].mxu0
      %v3165 = vpop.f32.mrb[0].mxu0
      %3166 = vdwg.mxu0
      %v3167 = vmax.f32 %v3002, 0.0
      %v3168 = vmax.f32 %v3005, 0.0
      %v3169 = vmax.f32 %v3010, 0.0
      %v3170 = vmax.f32 %v3013, 0.0
      %v3171 = vmax.f32 %v3018, 0.0
      %v3172 = vmax.f32 %v3021, 0.0
      %v3173 = vmax.f32 %v3026, 0.0
      %v3174 = vmax.f32 %v3029, 0.0
      %v3175 = vmax.f32 %v3034, 0.0
      %v3176 = vmax.f32 %v3037, 0.0
      %v3177 = vmax.f32 %v3042, 0.0
      %v3178 = vmax.f32 %v3045, 0.0
      %v3179 = vmax.f32 %v3050, 0.0
      %v3180 = vmax.f32 %v3053, 0.0
      %v3181 = vmax.f32 %v3058, 0.0
      %v3182 = vmax.f32 %v3061, 0.0
      %v3183 = vmax.f32 %v3066, 0.0
      %v3184 = vmax.f32 %v3069, 0.0
      %v3185 = vmax.f32 %v3074, 0.0
      %v3186 = vmax.f32 %v3077, 0.0
      %v3187 = vmax.f32 %v3082, 0.0
      %v3188 = vmax.f32 %v3085, 0.0
      %v3189 = vmax.f32 %v3090, 0.0
      %v3190 = vmax.f32 %v3093, 0.0
      %v3191 = vmax.f32 %v3098, 0.0
      %v3192 = vmax.f32 %v3101, 0.0
      %v3193 = vmax.f32 %v3106, 0.0
      %v3194 = vmax.f32 %v3109, 0.0
      %v3195 = vmax.f32 %v3114, 0.0
      %v3196 = vmax.f32 %v3117, 0.0
      %v3197 = vmax.f32 %v3122, 0.0
      %v3198 = vmax.f32 %v3125, 0.0
      %v3199 = vmax.f32 %v3130, 0.0
      %v3200 = vmax.f32 %v3133, 0.0
      %v3201 = vmax.f32 %v3138, 0.0
      %v3202 = vmax.f32 %v3141, 0.0
      %v3203 = vmax.f32 %v3146, 0.0
      %v3204 = vmax.f32 %v3149, 0.0
      %v3205 = vmax.f32 %v3154, 0.0
      %v3206 = vmax.f32 %v3157, 0.0
      %v3207 = vmax.f32 %v3162, 0.0
      %v3208 = vld [vmem:[%s2] sm:$0xff]
      %v3209 = vld [vmem:[%s2 + $0x8] sm:$0xff]
      %v3210 = vld [vmem:[%s2 + $0x10] sm:$0xff]
      %v3211 = vld [vmem:[%s2 + $0x18] sm:$0xff]
      %v3212 = vld [vmem:[%s2 + $0x20] sm:$0xff]
      %v3213 = vld [vmem:[%s2 + $0x28] sm:$0xff]
      %v3214 = vld [vmem:[%s2 + $0x30] sm:$0xff]
      %v3215 = vld [vmem:[%s2 + $0x38] sm:$0xff]
      %v3216 = vld [vmem:[%s2 + $0x40] sm:$0xff]
      %v3217 = vld [vmem:[%s2 + $0x48] sm:$0xff]
      %v3218 = vld [vmem:[%s2 + $0x50] sm:$0xff]
      %v3219 = vld [vmem:[%s2 + $0x58] sm:$0xff]
      %v3220 = vld [vmem:[%s2 + $0x60] sm:$0xff]
      %v3221 = vld [vmem:[%s2 + $0x68] sm:$0xff]
      %v3222 = vld [vmem:[%s2 + $0x70] sm:$0xff]
      %v3223 = vld [vmem:[%s2 + $0x78] sm:$0xff]
      %v3224 = vld [vmem:[%s2 + $0x80] sm:$0xff]
      %v3225 = vld [vmem:[%s2 + $0x88] sm:$0xff]
      %v3226 = vld [vmem:[%s2 + $0x90] sm:$0xff]
      %v3227 = vld [vmem:[%s2 + $0x98] sm:$0xff]
      %v3228 = vld [vmem:[%s2 + $0xa0] sm:$0xff]
      %v3229 = vld [vmem:[%s2 + $0xa8] sm:$0xff]
      %v3230 = vld [vmem:[%s2 + $0xb0] sm:$0xff]
      %v3231 = vld [vmem:[%s2 + $0xb8] sm:$0xff]
      %v3232 = vld [vmem:[%s2 + $0xc0] sm:$0xff]
      %v3233 = vld [vmem:[%s2 + $0xc8] sm:$0xff]
      %v3234 = vld [vmem:[%s2 + $0xd0] sm:$0xff]
      %v3235 = vld [vmem:[%s2 + $0xd8] sm:$0xff]
      %v3236 = vld [vmem:[%s2 + $0xe0] sm:$0xff]
      %v3237 = vld [vmem:[%s2 + $0xe8] sm:$0xff]
      %v3238 = vld [vmem:[%s2 + $0xf0] sm:$0xff]
      %v3239 = vld [vmem:[%s2 + $0xf8] sm:$0xff]
      %v3240 = vld [vmem:[%s2 + $0x100] sm:$0xff]
      %v3241 = vld [vmem:[%s2 + $0x108] sm:$0xff]
      %v3242 = vld [vmem:[%s2 + $0x110] sm:$0xff]
      %v3243 = vld [vmem:[%s2 + $0x118] sm:$0xff]
      %v3244 = vld [vmem:[%s2 + $0x120] sm:$0xff]
      %v3245 = vld [vmem:[%s2 + $0x128] sm:$0xff]
      %v3246 = vld [vmem:[%s2 + $0x130] sm:$0xff]
      %v3247 = vld [vmem:[%s2 + $0x138] sm:$0xff]
      %v3248 = vld [vmem:[%s2 + $0x140] sm:$0xff]
      %vm3249 = vcmp.gt.f32.partialorder %v3208, 0.5
      %vm3250 = vcmp.gt.f32.partialorder %v3209, 0.5
      %vm3251 = vcmp.gt.f32.partialorder %v3210, 0.5
      %vm3252 = vcmp.gt.f32.partialorder %v3211, 0.5
      %vm3253 = vcmp.gt.f32.partialorder %v3212, 0.5
      %vm3254 = vcmp.gt.f32.partialorder %v3213, 0.5
      %vm3255 = vcmp.gt.f32.partialorder %v3214, 0.5
      %vm3256 = vcmp.gt.f32.partialorder %v3215, 0.5
      %vm3257 = vcmp.gt.f32.partialorder %v3216, 0.5
      %vm3258 = vcmp.gt.f32.partialorder %v3217, 0.5
      %vm3259 = vcmp.gt.f32.partialorder %v3218, 0.5
      %vm3260 = vcmp.gt.f32.partialorder %v3219, 0.5
      %vm3261 = vcmp.gt.f32.partialorder %v3220, 0.5
      %vm3262 = vcmp.gt.f32.partialorder %v3221, 0.5
      %vm3263 = vcmp.gt.f32.partialorder %v3222, 0.5
      %vm3264 = vcmp.gt.f32.partialorder %v3223, 0.5
      %vm3265 = vcmp.gt.f32.partialorder %v3224, 0.5
      %vm3266 = vcmp.gt.f32.partialorder %v3225, 0.5
      %vm3267 = vcmp.gt.f32.partialorder %v3226, 0.5
      %vm3268 = vcmp.gt.f32.partialorder %v3227, 0.5
      %vm3269 = vcmp.gt.f32.partialorder %v3228, 0.5
      %vm3270 = vcmp.gt.f32.partialorder %v3229, 0.5
      %vm3271 = vcmp.gt.f32.partialorder %v3230, 0.5
      %vm3272 = vcmp.gt.f32.partialorder %v3231, 0.5
      %vm3273 = vcmp.gt.f32.partialorder %v3232, 0.5
      %vm3274 = vcmp.gt.f32.partialorder %v3233, 0.5
      %vm3275 = vcmp.gt.f32.partialorder %v3234, 0.5
      %vm3276 = vcmp.gt.f32.partialorder %v3235, 0.5
      %vm3277 = vcmp.gt.f32.partialorder %v3236, 0.5
      %vm3278 = vcmp.gt.f32.partialorder %v3237, 0.5
      %vm3279 = vcmp.gt.f32.partialorder %v3238, 0.5
      %vm3280 = vcmp.gt.f32.partialorder %v3239, 0.5
      %vm3281 = vcmp.gt.f32.partialorder %v3240, 0.5
      %vm3282 = vcmp.gt.f32.partialorder %v3241, 0.5
      %vm3283 = vcmp.gt.f32.partialorder %v3242, 0.5
      %vm3284 = vcmp.gt.f32.partialorder %v3243, 0.5
      %vm3285 = vcmp.gt.f32.partialorder %v3244, 0.5
      %vm3286 = vcmp.gt.f32.partialorder %v3245, 0.5
      %vm3287 = vcmp.gt.f32.partialorder %v3246, 0.5
      %vm3288 = vcmp.gt.f32.partialorder %v3247, 0.5
      %vm3289 = vcmp.gt.f32.partialorder %v3248, 0.5
      %v3290 = vsel %vm3249, 1, 0
      %v3291 = vsel %vm3250, 1, 0
      %v3292 = vsel %vm3251, 1, 0
      %v3293 = vsel %vm3252, 1, 0
      %v3294 = vsel %vm3253, 1, 0
      %v3295 = vsel %vm3254, 1, 0
      %v3296 = vsel %vm3255, 1, 0
      %v3297 = vsel %vm3256, 1, 0
      %v3298 = vsel %vm3257, 1, 0
      %v3299 = vsel %vm3258, 1, 0
      %v3300 = vsel %vm3259, 1, 0
      %v3301 = vsel %vm3260, 1, 0
      %v3302 = vsel %vm3261, 1, 0
      %v3303 = vsel %vm3262, 1, 0
      %v3304 = vsel %vm3263, 1, 0
      %v3305 = vsel %vm3264, 1, 0
      %v3306 = vsel %vm3265, 1, 0
      %v3307 = vsel %vm3266, 1, 0
      %v3308 = vsel %vm3267, 1, 0
      %v3309 = vsel %vm3268, 1, 0
      %v3310 = vsel %vm3269, 1, 0
      %v3311 = vsel %vm3270, 1, 0
      %v3312 = vsel %vm3271, 1, 0
      %v3313 = vsel %vm3272, 1, 0
      %v3314 = vsel %vm3273, 1, 0
      %v3315 = vsel %vm3274, 1, 0
      %v3316 = vsel %vm3275, 1, 0
      %v3317 = vsel %vm3276, 1, 0
      %v3318 = vsel %vm3277, 1, 0
      %v3319 = vsel %vm3278, 1, 0
      %v3320 = vsel %vm3279, 1, 0
      %v3321 = vsel %vm3280, 1, 0
      %v3322 = vsel %vm3281, 1, 0
      %v3323 = vsel %vm3282, 1, 0
      %v3324 = vsel %vm3283, 1, 0
      %v3325 = vsel %vm3284, 1, 0
      %v3326 = vsel %vm3285, 1, 0
      %v3327 = vsel %vm3286, 1, 0
      %v3328 = vsel %vm3287, 1, 0
      %v3329 = vsel %vm3288, 1, 0
      %v3330 = vsel %vm3289, 1, 0
      %3331 = vset.pattern.permute.xlu0 0
      %3332 = vperm.xlu0 %3331, %v3290
      %v3333 = vpop.permute.xlu0 %3332
      %3334 = vset.pattern.permute.xlu0 0
      %3335 = vperm.xlu0 %3334, %v3291
      %v3336 = vpop.permute.xlu0 %3335
      %3337 = vset.pattern.permute.xlu0 0
      %3338 = vperm.xlu0 %3337, %v3292
      %v3339 = vpop.permute.xlu0 %3338
      %3340 = vset.pattern.permute.xlu0 0
      %3341 = vperm.xlu0 %3340, %v3293
      %v3342 = vpop.permute.xlu0 %3341
      %3343 = vset.pattern.permute.xlu0 0
      %3344 = vperm.xlu0 %3343, %v3294
      %v3345 = vpop.permute.xlu0 %3344
      %3346 = vset.pattern.permute.xlu0 0
      %3347 = vperm.xlu0 %3346, %v3295
      %v3348 = vpop.permute.xlu0 %3347
      %3349 = vset.pattern.permute.xlu0 0
      %3350 = vperm.xlu0 %3349, %v3296
      %v3351 = vpop.permute.xlu0 %3350
      %3352 = vset.pattern.permute.xlu0 0
      %3353 = vperm.xlu0 %3352, %v3297
      %v3354 = vpop.permute.xlu0 %3353
      %3355 = vset.pattern.permute.xlu0 0
      %3356 = vperm.xlu0 %3355, %v3298
      %v3357 = vpop.permute.xlu0 %3356
      %3358 = vset.pattern.permute.xlu0 0
      %3359 = vperm.xlu0 %3358, %v3299
      %v3360 = vpop.permute.xlu0 %3359
      %3361 = vset.pattern.permute.xlu0 0
      %3362 = vperm.xlu0 %3361, %v3300
      %v3363 = vpop.permute.xlu0 %3362
      %3364 = vset.pattern.permute.xlu0 0
      %3365 = vperm.xlu0 %3364, %v3301
      %v3366 = vpop.permute.xlu0 %3365
      %3367 = vset.pattern.permute.xlu0 0
      %3368 = vperm.xlu0 %3367, %v3302
      %v3369 = vpop.permute.xlu0 %3368
      %3370 = vset.pattern.permute.xlu0 0
      %3371 = vperm.xlu0 %3370, %v3303
      %v3372 = vpop.permute.xlu0 %3371
      %3373 = vset.pattern.permute.xlu0 0
      %3374 = vperm.xlu0 %3373, %v3304
      %v3375 = vpop.permute.xlu0 %3374
      %3376 = vset.pattern.permute.xlu0 0
      %3377 = vperm.xlu0 %3376, %v3305
      %v3378 = vpop.permute.xlu0 %3377
      %3379 = vset.pattern.permute.xlu0 0
      %3380 = vperm.xlu0 %3379, %v3306
      %v3381 = vpop.permute.xlu0 %3380
      %3382 = vset.pattern.permute.xlu0 0
      %3383 = vperm.xlu0 %3382, %v3307
      %v3384 = vpop.permute.xlu0 %3383
      %3385 = vset.pattern.permute.xlu0 0
      %3386 = vperm.xlu0 %3385, %v3308
      %v3387 = vpop.permute.xlu0 %3386
      %3388 = vset.pattern.permute.xlu0 0
      %3389 = vperm.xlu0 %3388, %v3309
      %v3390 = vpop.permute.xlu0 %3389
      %3391 = vset.pattern.permute.xlu0 0
      %3392 = vperm.xlu0 %3391, %v3310
      %v3393 = vpop.permute.xlu0 %3392
      %3394 = vset.pattern.permute.xlu0 0
      %3395 = vperm.xlu0 %3394, %v3311
      %v3396 = vpop.permute.xlu0 %3395
      %3397 = vset.pattern.permute.xlu0 0
      %3398 = vperm.xlu0 %3397, %v3312
      %v3399 = vpop.permute.xlu0 %3398
      %3400 = vset.pattern.permute.xlu0 0
      %3401 = vperm.xlu0 %3400, %v3313
      %v3402 = vpop.permute.xlu0 %3401
      %3403 = vset.pattern.permute.xlu0 0
      %3404 = vperm.xlu0 %3403, %v3314
      %v3405 = vpop.permute.xlu0 %3404
      %3406 = vset.pattern.permute.xlu0 0
      %3407 = vperm.xlu0 %3406, %v3315
      %v3408 = vpop.permute.xlu0 %3407
      %3409 = vset.pattern.permute.xlu0 0
      %3410 = vperm.xlu0 %3409, %v3316
      %v3411 = vpop.permute.xlu0 %3410
      %3412 = vset.pattern.permute.xlu0 0
      %3413 = vperm.xlu0 %3412, %v3317
      %v3414 = vpop.permute.xlu0 %3413
      %3415 = vset.pattern.permute.xlu0 0
      %3416 = vperm.xlu0 %3415, %v3318
      %v3417 = vpop.permute.xlu0 %3416
      %3418 = vset.pattern.permute.xlu0 0
      %3419 = vperm.xlu0 %3418, %v3319
      %v3420 = vpop.permute.xlu0 %3419
      %3421 = vset.pattern.permute.xlu0 0
      %3422 = vperm.xlu0 %3421, %v3320
      %v3423 = vpop.permute.xlu0 %3422
      %3424 = vset.pattern.permute.xlu0 0
      %3425 = vperm.xlu0 %3424, %v3321
      %v3426 = vpop.permute.xlu0 %3425
      %3427 = vset.pattern.permute.xlu0 0
      %3428 = vperm.xlu0 %3427, %v3322
      %v3429 = vpop.permute.xlu0 %3428
      %3430 = vset.pattern.permute.xlu0 0
      %3431 = vperm.xlu0 %3430, %v3323
      %v3432 = vpop.permute.xlu0 %3431
      %3433 = vset.pattern.permute.xlu0 0
      %3434 = vperm.xlu0 %3433, %v3324
      %v3435 = vpop.permute.xlu0 %3434
      %3436 = vset.pattern.permute.xlu0 0
      %3437 = vperm.xlu0 %3436, %v3325
      %v3438 = vpop.permute.xlu0 %3437
      %3439 = vset.pattern.permute.xlu0 0
      %3440 = vperm.xlu0 %3439, %v3326
      %v3441 = vpop.permute.xlu0 %3440
      %3442 = vset.pattern.permute.xlu0 0
      %3443 = vperm.xlu0 %3442, %v3327
      %v3444 = vpop.permute.xlu0 %3443
      %3445 = vset.pattern.permute.xlu0 0
      %3446 = vperm.xlu0 %3445, %v3328
      %v3447 = vpop.permute.xlu0 %3446
      %3448 = vset.pattern.permute.xlu0 0
      %3449 = vperm.xlu0 %3448, %v3329
      %v3450 = vpop.permute.xlu0 %3449
      %3451 = vset.pattern.permute.xlu0 0
      %3452 = vperm.xlu0 %3451, %v3330
      %v3453 = vpop.permute.xlu0 %3452
      %vm3454 = vcmp.eq.s32.totalorder %v3333, 1
      %vm3455 = vcmp.eq.s32.totalorder %v3336, 1
      %vm3456 = vcmp.eq.s32.totalorder %v3339, 1
      %vm3457 = vcmp.eq.s32.totalorder %v3342, 1
      %vm3458 = vcmp.eq.s32.totalorder %v3345, 1
      %vm3459 = vcmp.eq.s32.totalorder %v3348, 1
      %vm3460 = vcmp.eq.s32.totalorder %v3351, 1
      %vm3461 = vcmp.eq.s32.totalorder %v3354, 1
      %vm3462 = vcmp.eq.s32.totalorder %v3357, 1
      %vm3463 = vcmp.eq.s32.totalorder %v3360, 1
      %vm3464 = vcmp.eq.s32.totalorder %v3363, 1
      %vm3465 = vcmp.eq.s32.totalorder %v3366, 1
      %vm3466 = vcmp.eq.s32.totalorder %v3369, 1
      %vm3467 = vcmp.eq.s32.totalorder %v3372, 1
      %vm3468 = vcmp.eq.s32.totalorder %v3375, 1
      %vm3469 = vcmp.eq.s32.totalorder %v3378, 1
      %vm3470 = vcmp.eq.s32.totalorder %v3381, 1
      %vm3471 = vcmp.eq.s32.totalorder %v3384, 1
      %vm3472 = vcmp.eq.s32.totalorder %v3387, 1
      %vm3473 = vcmp.eq.s32.totalorder %v3390, 1
      %vm3474 = vcmp.eq.s32.totalorder %v3393, 1
      %vm3475 = vcmp.eq.s32.totalorder %v3396, 1
      %vm3476 = vcmp.eq.s32.totalorder %v3399, 1
      %vm3477 = vcmp.eq.s32.totalorder %v3402, 1
      %vm3478 = vcmp.eq.s32.totalorder %v3405, 1
      %vm3479 = vcmp.eq.s32.totalorder %v3408, 1
      %vm3480 = vcmp.eq.s32.totalorder %v3411, 1
      %vm3481 = vcmp.eq.s32.totalorder %v3414, 1
      %vm3482 = vcmp.eq.s32.totalorder %v3417, 1
      %vm3483 = vcmp.eq.s32.totalorder %v3420, 1
      %vm3484 = vcmp.eq.s32.totalorder %v3423, 1
      %vm3485 = vcmp.eq.s32.totalorder %v3426, 1
      %vm3486 = vcmp.eq.s32.totalorder %v3429, 1
      %vm3487 = vcmp.eq.s32.totalorder %v3432, 1
      %vm3488 = vcmp.eq.s32.totalorder %v3435, 1
      %vm3489 = vcmp.eq.s32.totalorder %v3438, 1
      %vm3490 = vcmp.eq.s32.totalorder %v3441, 1
      %vm3491 = vcmp.eq.s32.totalorder %v3444, 1
      %vm3492 = vcmp.eq.s32.totalorder %v3447, 1
      %vm3493 = vcmp.eq.s32.totalorder %v3450, 1
      %vm3494 = vcmp.eq.s32.totalorder %v3453, 1
      %v3495 = vsel %vm3454, %v3167, 1.0
      %v3496 = vsel %vm3455, %v3168, 1.0
      %v3497 = vsel %vm3456, %v3169, 1.0
      %v3498 = vsel %vm3457, %v3170, 1.0
      %v3499 = vsel %vm3458, %v3171, 1.0
      %v3500 = vsel %vm3459, %v3172, 1.0
      %v3501 = vsel %vm3460, %v3173, 1.0
      %v3502 = vsel %vm3461, %v3174, 1.0
      %v3503 = vsel %vm3462, %v3175, 1.0
      %v3504 = vsel %vm3463, %v3176, 1.0
      %v3505 = vsel %vm3464, %v3177, 1.0
      %v3506 = vsel %vm3465, %v3178, 1.0
      %v3507 = vsel %vm3466, %v3179, 1.0
      %v3508 = vsel %vm3467, %v3180, 1.0
      %v3509 = vsel %vm3468, %v3181, 1.0
      %v3510 = vsel %vm3469, %v3182, 1.0
      %v3511 = vsel %vm3470, %v3183, 1.0
      %v3512 = vsel %vm3471, %v3184, 1.0
      %v3513 = vsel %vm3472, %v3185, 1.0
      %v3514 = vsel %vm3473, %v3186, 1.0
      %v3515 = vsel %vm3474, %v3187, 1.0
      %v3516 = vsel %vm3475, %v3188, 1.0
      %v3517 = vsel %vm3476, %v3189, 1.0
      %v3518 = vsel %vm3477, %v3190, 1.0
      %v3519 = vsel %vm3478, %v3191, 1.0
      %v3520 = vsel %vm3479, %v3192, 1.0
      %v3521 = vsel %vm3480, %v3193, 1.0
      %v3522 = vsel %vm3481, %v3194, 1.0
      %v3523 = vsel %vm3482, %v3195, 1.0
      %v3524 = vsel %vm3483, %v3196, 1.0
      %v3525 = vsel %vm3484, %v3197, 1.0
      %v3526 = vsel %vm3485, %v3198, 1.0
      %v3527 = vsel %vm3486, %v3199, 1.0
      %v3528 = vsel %vm3487, %v3200, 1.0
      %v3529 = vsel %vm3488, %v3201, 1.0
      %v3530 = vsel %vm3489, %v3202, 1.0
      %v3531 = vsel %vm3490, %v3203, 1.0
      %v3532 = vsel %vm3491, %v3204, 1.0
      %v3533 = vsel %vm3492, %v3205, 1.0
      %v3534 = vsel %vm3493, %v3206, 1.0
      %v3535 = vsel %vm3494, %v3207, 1.0
      %v3536 = vpack.c.bf16 %v3496, %v3495
      %v3537 = vpack.c.bf16 %v3498, %v3497
      %v3538 = vpack.c.bf16 %v3500, %v3499
      %v3539 = vpack.c.bf16 %v3502, %v3501
      %v3540 = vpack.c.bf16 %v3504, %v3503
      %v3541 = vpack.c.bf16 %v3506, %v3505
      %v3542 = vpack.c.bf16 %v3508, %v3507
      %v3543 = vpack.c.bf16 %v3510, %v3509
      %v3544 = vpack.c.bf16 %v3512, %v3511
      %v3545 = vpack.c.bf16 %v3514, %v3513
      %v3546 = vpack.c.bf16 %v3516, %v3515
      %v3547 = vpack.c.bf16 %v3518, %v3517
      %v3548 = vpack.c.bf16 %v3520, %v3519
      %v3549 = vpack.c.bf16 %v3522, %v3521
      %v3550 = vpack.c.bf16 %v3524, %v3523
      %v3551 = vpack.c.bf16 %v3526, %v3525
      %v3552 = vpack.c.bf16 %v3528, %v3527
      %v3553 = vpack.c.bf16 %v3530, %v3529
      %v3554 = vpack.c.bf16 %v3532, %v3531
      %v3555 = vpack.c.bf16 %v3534, %v3533
      %v3556 = vpack.c.bf16 %v3535, %v3535
      %v3557 = vld [vmem:[%s7] sm:$0xf]
      %v3558 = vld [vmem:[%s7 + $0x4] sm:$0xf]
      %v3559 = vld [vmem:[%s7 + $0x8] sm:$0xf]
      %v3560 = vld [vmem:[%s7 + $0xc] sm:$0xf]
      %v3565 = vunpack.c.l.b16 %v3557
      %v3566 = vunpack.c.l.b16 %v3558
      %v3567 = vunpack.c.l.b16 %v3559
      %v3568 = vunpack.c.l.b16 %v3560
      %v3569 = vpack.c.b16 %v3566, %v3565
      %v3570 = vpack.c.b16 %v3568, %v3567
      %v3574 = vsel %vm2903, %v3536, 0
      %v3577 = vsel %vm2903, %v3537, 0
      %v3580 = vsel %vm2903, %v3538, 0
      %v3583 = vsel %vm2903, %v3539, 0
      %v3586 = vsel %vm2903, %v3540, 0
      %v3589 = vsel %vm2903, %v3541, 0
      %v3592 = vsel %vm2903, %v3542, 0
      %v3595 = vsel %vm2903, %v3543, 0
      %v3598 = vsel %vm2903, %v3544, 0
      %v3601 = vsel %vm2903, %v3545, 0
      %v3604 = vsel %vm2903, %v3546, 0
      %v3607 = vsel %vm2903, %v3547, 0
      %v3610 = vsel %vm2903, %v3548, 0
      %v3613 = vsel %vm2903, %v3549, 0
      %v3616 = vsel %vm2903, %v3550, 0
      %v3619 = vsel %vm2903, %v3551, 0
      %v3622 = vsel %vm2903, %v3552, 0
      %v3625 = vsel %vm2903, %v3553, 0
      %v3628 = vsel %vm2903, %v3554, 0
      %v3631 = vsel %vm2903, %v3555, 0
      %v3634 = vsel %vm2903, %v3556, 0
      %3636 = vmatprep.subr.bf16.mxu0 0
      %3637 = vmatpush1.bf16.msra.mxu0 %v3569
      %3638 = vmatprep.subr.bf16.mxu0 0
      %3639 = vmatpush1.bf16.msra.mxu0 %v3570
      %3640 = vmatprep.subr.bf16.mxu0 0
      %3641 = vmatpush1.bf16.msra.mxu0 0
      %3642 = vmatprep.subr.bf16.mxu0 0
      %3643 = vmatpush1.bf16.msra.mxu0 0
      %3644 = vmatprep.subr.bf16.mxu0 0
      %3645 = vmatpush1.bf16.msra.mxu0 0
      %3646 = vmatprep.subr.bf16.mxu0 0
      %3647 = vmatpush1.bf16.msra.mxu0 0
      %3648 = vmatprep.subr.bf16.mxu0 0
      %3649 = vmatpush1.bf16.msra.mxu0 0
      %3650 = vmatprep.subr.bf16.mxu0 0
      %3651 = vmatpush1.bf16.msra.mxu0 0
      %3652 = vmatprep.subr.bf16.mxu0 0
      %3653 = vmatpush1.bf16.msra.mxu0 0
      %3654 = vmatprep.subr.bf16.mxu0 0
      %3655 = vmatpush1.bf16.msra.mxu0 0
      %3656 = vmatprep.subr.bf16.mxu0 0
      %3657 = vmatpush1.bf16.msra.mxu0 0
      %3658 = vmatprep.subr.bf16.mxu0 0
      %3659 = vmatpush1.bf16.msra.mxu0 0
      %3660 = vmatprep.subr.bf16.mxu0 0
      %3661 = vmatpush1.bf16.msra.mxu0 0
      %3662 = vmatprep.subr.bf16.mxu0 0
      %3663 = vmatpush1.bf16.msra.mxu0 0
      %3664 = vmatprep.subr.bf16.mxu0 0
      %3665 = vmatpush1.bf16.msra.mxu0 0
      %3666 = vmatprep.subr.bf16.mxu0 0
      %3667 = vmatpush1.bf16.msra.mxu0 0
      %3668 = vmatprep.mubr.bf16.mxu0 0
      %3669 = vmatmul.mubr.bf16.gmra.mrb[0].mxu0 %v3574
      %v3670 = vpop.f32.mrb[0].mxu0
      %v3671 = vadd.f32 0.0, %v3670
      %v3672 = vpop.f32.mrb[0].mxu0
      %v3673 = vpop.f32.mrb[0].mxu0
      %v3674 = vadd.f32 0.0, %v3673
      %v3675 = vpop.f32.mrb[0].mxu0
      %3676 = vmatprep.mubr.bf16.mxu0 0
      %3677 = vmatmul.mubr.bf16.gmra.mrb[0].mxu0 %v3577
      %v3678 = vpop.f32.mrb[0].mxu0
      %v3679 = vadd.f32 0.0, %v3678
      %v3680 = vpop.f32.mrb[0].mxu0
      %v3681 = vpop.f32.mrb[0].mxu0
      %v3682 = vadd.f32 0.0, %v3681
      %v3683 = vpop.f32.mrb[0].mxu0
      %3684 = vmatprep.mubr.bf16.mxu0 0
      %3685 = vmatmul.mubr.bf16.gmra.mrb[0].mxu0 %v3580
      %v3686 = vpop.f32.mrb[0].mxu0
      %v3687 = vadd.f32 0.0, %v3686
      %v3688 = vpop.f32.mrb[0].mxu0
      %v3689 = vpop.f32.mrb[0].mxu0
      %v3690 = vadd.f32 0.0, %v3689
      %v3691 = vpop.f32.mrb[0].mxu0
      %3692 = vmatprep.mubr.bf16.mxu0 0
      %3693 = vmatmul.mubr.bf16.gmra.mrb[0].mxu0 %v3583
      %v3694 = vpop.f32.mrb[0].mxu0
      %v3695 = vadd.f32 0.0, %v3694
      %v3696 = vpop.f32.mrb[0].mxu0
      %v3697 = vpop.f32.mrb[0].mxu0
      %v3698 = vadd.f32 0.0, %v3697
      %v3699 = vpop.f32.mrb[0].mxu0
      %3700 = vmatprep.mubr.bf16.mxu0 0
      %3701 = vmatmul.mubr.bf16.gmra.mrb[0].mxu0 %v3586
      %v3702 = vpop.f32.mrb[0].mxu0
      %v3703 = vadd.f32 0.0, %v3702
      %v3704 = vpop.f32.mrb[0].mxu0
      %v3705 = vpop.f32.mrb[0].mxu0
      %v3706 = vadd.f32 0.0, %v3705
      %v3707 = vpop.f32.mrb[0].mxu0
      %3708 = vmatprep.mubr.bf16.mxu0 0
      %3709 = vmatmul.mubr.bf16.gmra.mrb[0].mxu0 %v3589
      %v3710 = vpop.f32.mrb[0].mxu0
      %v3711 = vadd.f32 0.0, %v3710
      %v3712 = vpop.f32.mrb[0].mxu0
      %v3713 = vpop.f32.mrb[0].mxu0
      %v3714 = vadd.f32 0.0, %v3713
      %v3715 = vpop.f32.mrb[0].mxu0
      %3716 = vmatprep.mubr.bf16.mxu0 0
      %3717 = vmatmul.mubr.bf16.gmra.mrb[0].mxu0 %v3592
      %v3718 = vpop.f32.mrb[0].mxu0
      %v3719 = vadd.f32 0.0, %v3718
      %v3720 = vpop.f32.mrb[0].mxu0
      %v3721 = vpop.f32.mrb[0].mxu0
      %v3722 = vadd.f32 0.0, %v3721
      %v3723 = vpop.f32.mrb[0].mxu0
      %3724 = vmatprep.mubr.bf16.mxu0 0
      %3725 = vmatmul.mubr.bf16.gmra.mrb[0].mxu0 %v3595
      %v3726 = vpop.f32.mrb[0].mxu0
      %v3727 = vadd.f32 0.0, %v3726
      %v3728 = vpop.f32.mrb[0].mxu0
      %v3729 = vpop.f32.mrb[0].mxu0
      %v3730 = vadd.f32 0.0, %v3729
      %v3731 = vpop.f32.mrb[0].mxu0
      %3732 = vmatprep.mubr.bf16.mxu0 0
      %3733 = vmatmul.mubr.bf16.gmra.mrb[0].mxu0 %v3598
      %v3734 = vpop.f32.mrb[0].mxu0
      %v3735 = vadd.f32 0.0, %v3734
      %v3736 = vpop.f32.mrb[0].mxu0
      %v3737 = vpop.f32.mrb[0].mxu0
      %v3738 = vadd.f32 0.0, %v3737
      %v3739 = vpop.f32.mrb[0].mxu0
      %3740 = vmatprep.mubr.bf16.mxu0 0
      %3741 = vmatmul.mubr.bf16.gmra.mrb[0].mxu0 %v3601
      %v3742 = vpop.f32.mrb[0].mxu0
      %v3743 = vadd.f32 0.0, %v3742
      %v3744 = vpop.f32.mrb[0].mxu0
      %v3745 = vpop.f32.mrb[0].mxu0
      %v3746 = vadd.f32 0.0, %v3745
      %v3747 = vpop.f32.mrb[0].mxu0
      %3748 = vmatprep.mubr.bf16.mxu0 0
      %3749 = vmatmul.mubr.bf16.gmra.mrb[0].mxu0 %v3604
      %v3750 = vpop.f32.mrb[0].mxu0
      %v3751 = vadd.f32 0.0, %v3750
      %v3752 = vpop.f32.mrb[0].mxu0
      %v3753 = vpop.f32.mrb[0].mxu0
      %v3754 = vadd.f32 0.0, %v3753
      %v3755 = vpop.f32.mrb[0].mxu0
      %3756 = vmatprep.mubr.bf16.mxu0 0
      %3757 = vmatmul.mubr.bf16.gmra.mrb[0].mxu0 %v3607
      %v3758 = vpop.f32.mrb[0].mxu0
      %v3759 = vadd.f32 0.0, %v3758
      %v3760 = vpop.f32.mrb[0].mxu0
      %v3761 = vpop.f32.mrb[0].mxu0
      %v3762 = vadd.f32 0.0, %v3761
      %v3763 = vpop.f32.mrb[0].mxu0
      %3764 = vmatprep.mubr.bf16.mxu0 0
      %3765 = vmatmul.mubr.bf16.gmra.mrb[0].mxu0 %v3610
      %v3766 = vpop.f32.mrb[0].mxu0
      %v3767 = vadd.f32 0.0, %v3766
      %v3768 = vpop.f32.mrb[0].mxu0
      %v3769 = vpop.f32.mrb[0].mxu0
      %v3770 = vadd.f32 0.0, %v3769
      %v3771 = vpop.f32.mrb[0].mxu0
      %3772 = vmatprep.mubr.bf16.mxu0 0
      %3773 = vmatmul.mubr.bf16.gmra.mrb[0].mxu0 %v3613
      %v3774 = vpop.f32.mrb[0].mxu0
      %v3775 = vadd.f32 0.0, %v3774
      %v3776 = vpop.f32.mrb[0].mxu0
      %v3777 = vpop.f32.mrb[0].mxu0
      %v3778 = vadd.f32 0.0, %v3777
      %v3779 = vpop.f32.mrb[0].mxu0
      %3780 = vmatprep.mubr.bf16.mxu0 0
      %3781 = vmatmul.mubr.bf16.gmra.mrb[0].mxu0 %v3616
      %v3782 = vpop.f32.mrb[0].mxu0
      %v3783 = vadd.f32 0.0, %v3782
      %v3784 = vpop.f32.mrb[0].mxu0
      %v3785 = vpop.f32.mrb[0].mxu0
      %v3786 = vadd.f32 0.0, %v3785
      %v3787 = vpop.f32.mrb[0].mxu0
      %3788 = vmatprep.mubr.bf16.mxu0 0
      %3789 = vmatmul.mubr.bf16.gmra.mrb[0].mxu0 %v3619
      %v3790 = vpop.f32.mrb[0].mxu0
      %v3791 = vadd.f32 0.0, %v3790
      %v3792 = vpop.f32.mrb[0].mxu0
      %v3793 = vpop.f32.mrb[0].mxu0
      %v3794 = vadd.f32 0.0, %v3793
      %v3795 = vpop.f32.mrb[0].mxu0
      %3796 = vmatprep.mubr.bf16.mxu0 0
      %3797 = vmatmul.mubr.bf16.gmra.mrb[0].mxu0 %v3622
      %v3798 = vpop.f32.mrb[0].mxu0
      %v3799 = vadd.f32 0.0, %v3798
      %v3800 = vpop.f32.mrb[0].mxu0
      %v3801 = vpop.f32.mrb[0].mxu0
      %v3802 = vadd.f32 0.0, %v3801
      %v3803 = vpop.f32.mrb[0].mxu0
      %3804 = vmatprep.mubr.bf16.mxu0 0
      %3805 = vmatmul.mubr.bf16.gmra.mrb[0].mxu0 %v3625
      %v3806 = vpop.f32.mrb[0].mxu0
      %v3807 = vadd.f32 0.0, %v3806
      %v3808 = vpop.f32.mrb[0].mxu0
      %v3809 = vpop.f32.mrb[0].mxu0
      %v3810 = vadd.f32 0.0, %v3809
      %v3811 = vpop.f32.mrb[0].mxu0
      %3812 = vmatprep.mubr.bf16.mxu0 0
      %3813 = vmatmul.mubr.bf16.gmra.mrb[0].mxu0 %v3628
      %v3814 = vpop.f32.mrb[0].mxu0
      %v3815 = vadd.f32 0.0, %v3814
      %v3816 = vpop.f32.mrb[0].mxu0
      %v3817 = vpop.f32.mrb[0].mxu0
      %v3818 = vadd.f32 0.0, %v3817
      %v3819 = vpop.f32.mrb[0].mxu0
      %3820 = vmatprep.mubr.bf16.mxu0 0
      %3821 = vmatmul.mubr.bf16.gmra.mrb[0].mxu0 %v3631
      %v3822 = vpop.f32.mrb[0].mxu0
      %v3823 = vadd.f32 0.0, %v3822
      %v3824 = vpop.f32.mrb[0].mxu0
      %v3825 = vpop.f32.mrb[0].mxu0
      %v3826 = vadd.f32 0.0, %v3825
      %v3827 = vpop.f32.mrb[0].mxu0
      %3828 = vmatprep.mubr.bf16.mxu0 0
      %3829 = vmatmul.mubr.bf16.gmra.mrb[0].mxu0 %v3634
      %v3830 = vpop.f32.mrb[0].mxu0
      %v3831 = vadd.f32 0.0, %v3830
      %v3832 = vpop.f32.mrb[0].mxu0
      %v3833 = vpop.f32.mrb[0].mxu0
      %v3834 = vpop.f32.mrb[0].mxu0
      %3835 = vdwg.mxu0
      %v3836 = vadd.f32 %v3823, 0.0
      %v3837 = vadd.f32 %v3826, 0.0
      %v3838 = vadd.f32 %v3831, 0.0
      %v3839 = vadd.f32 %v3671, 0.0
      %v3840 = vadd.f32 %v3674, 0.0
      %v3841 = vadd.f32 %v3679, 0.0
      %v3842 = vadd.f32 %v3682, 0.0
      %v3843 = vadd.f32 %v3687, 0.0
      %v3844 = vadd.f32 %v3690, 0.0
      %v3845 = vadd.f32 %v3695, 0.0
      %v3846 = vadd.f32 %v3698, 0.0
      %v3847 = vadd.f32 %v3703, 0.0
      %v3848 = vadd.f32 %v3706, 0.0
      %v3849 = vadd.f32 %v3711, 0.0
      %v3850 = vadd.f32 %v3714, 0.0
      %v3851 = vadd.f32 %v3719, 0.0
      %v3852 = vadd.f32 %v3722, 0.0
      %v3853 = vadd.f32 %v3727, 0.0
      %v3854 = vadd.f32 %v3730, 0.0
      %v3855 = vadd.f32 %v3735, 0.0
      %v3856 = vadd.f32 %v3738, 0.0
      %v3857 = vadd.f32 %v3743, 0.0
      %v3858 = vadd.f32 %v3746, 0.0
      %v3859 = vadd.f32 %v3751, 0.0
      %v3860 = vadd.f32 %v3754, 0.0
      %v3861 = vadd.f32 %v3759, 0.0
      %v3862 = vadd.f32 %v3762, 0.0
      %v3863 = vadd.f32 %v3767, 0.0
      %v3864 = vadd.f32 %v3770, 0.0
      %v3865 = vadd.f32 %v3775, 0.0
      %v3866 = vadd.f32 %v3778, 0.0
      %v3867 = vadd.f32 %v3783, 0.0
      %v3868 = vadd.f32 %v3786, 0.0
      %v3869 = vadd.f32 %v3791, 0.0
      %v3870 = vadd.f32 %v3794, 0.0
      %v3871 = vadd.f32 %v3799, 0.0
      %v3872 = vadd.f32 %v3802, 0.0
      %v3873 = vadd.f32 %v3807, 0.0
      %v3874 = vadd.f32 %v3810, 0.0
      %v3875 = vadd.f32 %v3815, 0.0
      %v3876 = vadd.f32 %v3818, 0.0
      %v3918 = vrot.slane %v3823, 1
      %v3919 = vrot.slane %v3826, 1
      %v3920 = vsel %vm472, %v3918, %v3919
      %v3921 = vrot.slane %v3831, 1
      %v3922 = vsel %vm472, %v3919, %v3921
      %v3923 = vrot.slane %v3671, 1
      %v3924 = vsel %vm472, %v3921, %v3923
      %v3925 = vrot.slane %v3674, 1
      %v3926 = vsel %vm472, %v3923, %v3925
      %v3927 = vrot.slane %v3679, 1
      %v3928 = vsel %vm472, %v3925, %v3927
      %v3929 = vrot.slane %v3682, 1
      %v3930 = vsel %vm472, %v3927, %v3929
      %v3931 = vrot.slane %v3687, 1
      %v3932 = vsel %vm472, %v3929, %v3931
      %v3933 = vrot.slane %v3690, 1
      %v3934 = vsel %vm472, %v3931, %v3933
      %v3935 = vrot.slane %v3695, 1
      %v3936 = vsel %vm472, %v3933, %v3935
      %v3937 = vrot.slane %v3698, 1
      %v3938 = vsel %vm472, %v3935, %v3937
      %v3939 = vrot.slane %v3703, 1
      %v3940 = vsel %vm472, %v3937, %v3939
      %v3941 = vrot.slane %v3706, 1
      %v3942 = vsel %vm472, %v3939, %v3941
      %v3943 = vrot.slane %v3711, 1
      %v3944 = vsel %vm472, %v3941, %v3943
      %v3945 = vrot.slane %v3714, 1
      %v3946 = vsel %vm472, %v3943, %v3945
      %v3947 = vrot.slane %v3719, 1
      %v3948 = vsel %vm472, %v3945, %v3947
      %v3949 = vrot.slane %v3722, 1
      %v3950 = vsel %vm472, %v3947, %v3949
      %v3951 = vrot.slane %v3727, 1
      %v3952 = vsel %vm472, %v3949, %v3951
      %v3953 = vrot.slane %v3730, 1
      %v3954 = vsel %vm472, %v3951, %v3953
      %v3955 = vrot.slane %v3735, 1
      %v3956 = vsel %vm472, %v3953, %v3955
      %v3957 = vrot.slane %v3738, 1
      %v3958 = vsel %vm472, %v3955, %v3957
      %v3959 = vrot.slane %v3743, 1
      %v3960 = vsel %vm472, %v3957, %v3959
      %v3961 = vrot.slane %v3746, 1
      %v3962 = vsel %vm472, %v3959, %v3961
      %v3963 = vrot.slane %v3751, 1
      %v3964 = vsel %vm472, %v3961, %v3963
      %v3965 = vrot.slane %v3754, 1
      %v3966 = vsel %vm472, %v3963, %v3965
      %v3967 = vrot.slane %v3759, 1
      %v3968 = vsel %vm472, %v3965, %v3967
      %v3969 = vrot.slane %v3762, 1
      %v3970 = vsel %vm472, %v3967, %v3969
      %v3971 = vrot.slane %v3767, 1
      %v3972 = vsel %vm472, %v3969, %v3971
      %v3973 = vrot.slane %v3770, 1
      %v3974 = vsel %vm472, %v3971, %v3973
      %v3975 = vrot.slane %v3775, 1
      %v3976 = vsel %vm472, %v3973, %v3975
      %v3977 = vrot.slane %v3778, 1
      %v3978 = vsel %vm472, %v3975, %v3977
      %v3979 = vrot.slane %v3783, 1
      %v3980 = vsel %vm472, %v3977, %v3979
      %v3981 = vrot.slane %v3786, 1
      %v3982 = vsel %vm472, %v3979, %v3981
      %v3983 = vrot.slane %v3791, 1
      %v3984 = vsel %vm472, %v3981, %v3983
      %v3985 = vrot.slane %v3794, 1
      %v3986 = vsel %vm472, %v3983, %v3985
      %v3987 = vrot.slane %v3799, 1
      %v3988 = vsel %vm472, %v3985, %v3987
      %v3989 = vrot.slane %v3802, 1
      %v3990 = vsel %vm472, %v3987, %v3989
      %v3991 = vrot.slane %v3807, 1
      %v3992 = vsel %vm472, %v3989, %v3991
      %v3993 = vrot.slane %v3810, 1
      %v3994 = vsel %vm472, %v3991, %v3993
      %v3995 = vrot.slane %v3815, 1
      %v3996 = vsel %vm472, %v3993, %v3995
      %v3997 = vrot.slane %v3818, 1
      %v3998 = vsel %vm472, %v3995, %v3997
      %v3999 = vsel %vm472, %v3997, %v3918
      %4000 = vrot.lane.b32.xlu0 %v3920, 124
      %v4001 = vpop.permute.xlu0 %4000
      %4002 = vrot.lane.b32.xlu0 %v3922, 124
      %v4003 = vpop.permute.xlu0 %4002
      %4004 = vrot.lane.b32.xlu0 %v3924, 124
      %v4005 = vpop.permute.xlu0 %4004
      %4006 = vrot.lane.b32.xlu0 %v3926, 124
      %v4007 = vpop.permute.xlu0 %4006
      %4008 = vrot.lane.b32.xlu0 %v3928, 124
      %v4009 = vpop.permute.xlu0 %4008
      %4010 = vrot.lane.b32.xlu0 %v3930, 124
      %v4011 = vpop.permute.xlu0 %4010
      %4012 = vrot.lane.b32.xlu0 %v3932, 124
      %v4013 = vpop.permute.xlu0 %4012
      %4014 = vrot.lane.b32.xlu0 %v3934, 124
      %v4015 = vpop.permute.xlu0 %4014
      %4016 = vrot.lane.b32.xlu0 %v3936, 124
      %v4017 = vpop.permute.xlu0 %4016
      %4018 = vrot.lane.b32.xlu0 %v3938, 124
      %v4019 = vpop.permute.xlu0 %4018
      %4020 = vrot.lane.b32.xlu0 %v3940, 124
      %v4021 = vpop.permute.xlu0 %4020
      %4022 = vrot.lane.b32.xlu0 %v3942, 124
      %v4023 = vpop.permute.xlu0 %4022
      %4024 = vrot.lane.b32.xlu0 %v3944, 124
      %v4025 = vpop.permute.xlu0 %4024
      %4026 = vrot.lane.b32.xlu0 %v3946, 124
      %v4027 = vpop.permute.xlu0 %4026
      %4028 = vrot.lane.b32.xlu0 %v3948, 124
      %v4029 = vpop.permute.xlu0 %4028
      %4030 = vrot.lane.b32.xlu0 %v3950, 124
      %v4031 = vpop.permute.xlu0 %4030
      %4032 = vrot.lane.b32.xlu0 %v3952, 124
      %v4033 = vpop.permute.xlu0 %4032
      %4034 = vrot.lane.b32.xlu0 %v3954, 124
      %v4035 = vpop.permute.xlu0 %4034
      %4036 = vrot.lane.b32.xlu0 %v3956, 124
      %v4037 = vpop.permute.xlu0 %4036
      %4038 = vrot.lane.b32.xlu0 %v3958, 124
      %v4039 = vpop.permute.xlu0 %4038
      %4040 = vrot.lane.b32.xlu0 %v3960, 124
      %v4041 = vpop.permute.xlu0 %4040
      %4042 = vrot.lane.b32.xlu0 %v3962, 124
      %v4043 = vpop.permute.xlu0 %4042
      %4044 = vrot.lane.b32.xlu0 %v3964, 124
      %v4045 = vpop.permute.xlu0 %4044
      %4046 = vrot.lane.b32.xlu0 %v3966, 124
      %v4047 = vpop.permute.xlu0 %4046
      %4048 = vrot.lane.b32.xlu0 %v3968, 124
      %v4049 = vpop.permute.xlu0 %4048
      %4050 = vrot.lane.b32.xlu0 %v3970, 124
      %v4051 = vpop.permute.xlu0 %4050
      %4052 = vrot.lane.b32.xlu0 %v3972, 124
      %v4053 = vpop.permute.xlu0 %4052
      %4054 = vrot.lane.b32.xlu0 %v3974, 124
      %v4055 = vpop.permute.xlu0 %4054
      %4056 = vrot.lane.b32.xlu0 %v3976, 124
      %v4057 = vpop.permute.xlu0 %4056
      %4058 = vrot.lane.b32.xlu0 %v3978, 124
      %v4059 = vpop.permute.xlu0 %4058
      %4060 = vrot.lane.b32.xlu0 %v3980, 124
      %v4061 = vpop.permute.xlu0 %4060
      %4062 = vrot.lane.b32.xlu0 %v3982, 124
      %v4063 = vpop.permute.xlu0 %4062
      %4064 = vrot.lane.b32.xlu0 %v3984, 124
      %v4065 = vpop.permute.xlu0 %4064
      %4066 = vrot.lane.b32.xlu0 %v3986, 124
      %v4067 = vpop.permute.xlu0 %4066
      %4068 = vrot.lane.b32.xlu0 %v3988, 124
      %v4069 = vpop.permute.xlu0 %4068
      %4070 = vrot.lane.b32.xlu0 %v3990, 124
      %v4071 = vpop.permute.xlu0 %4070
      %4072 = vrot.lane.b32.xlu0 %v3992, 124
      %v4073 = vpop.permute.xlu0 %4072
      %4074 = vrot.lane.b32.xlu0 %v3994, 124
      %v4075 = vpop.permute.xlu0 %4074
      %4076 = vrot.lane.b32.xlu0 %v3996, 124
      %v4077 = vpop.permute.xlu0 %4076
      %4078 = vrot.lane.b32.xlu0 %v3998, 124
      %v4079 = vpop.permute.xlu0 %4078
      %4080 = vrot.lane.b32.xlu0 %v3999, 124
      %v4081 = vpop.permute.xlu0 %4080
      %4082 = vrot.lane.b32.xlu0 %v3918, 124
      %v4083 = vpop.permute.xlu0 %4082
      %v4126 = vadd.f32 %v3836, %v4001
      %v4127 = vadd.f32 %v3837, %v4003
      %v4128 = vadd.f32 %v3838, %v4005
      %v4129 = vadd.f32 %v3839, %v4007
      %v4130 = vadd.f32 %v3840, %v4009
      %v4131 = vadd.f32 %v3841, %v4011
      %v4132 = vadd.f32 %v3842, %v4013
      %v4133 = vadd.f32 %v3843, %v4015
      %v4134 = vadd.f32 %v3844, %v4017
      %v4135 = vadd.f32 %v3845, %v4019
      %v4136 = vadd.f32 %v3846, %v4021
      %v4137 = vadd.f32 %v3847, %v4023
      %v4138 = vadd.f32 %v3848, %v4025
      %v4139 = vadd.f32 %v3849, %v4027
      %v4140 = vadd.f32 %v3850, %v4029
      %v4141 = vadd.f32 %v3851, %v4031
      %v4142 = vadd.f32 %v3852, %v4033
      %v4143 = vadd.f32 %v3853, %v4035
      %v4144 = vadd.f32 %v3854, %v4037
      %v4145 = vadd.f32 %v3855, %v4039
      %v4146 = vadd.f32 %v3856, %v4041
      %v4147 = vadd.f32 %v3857, %v4043
      %v4148 = vadd.f32 %v3858, %v4045
      %v4149 = vadd.f32 %v3859, %v4047
      %v4150 = vadd.f32 %v3860, %v4049
      %v4151 = vadd.f32 %v3861, %v4051
      %v4152 = vadd.f32 %v3862, %v4053
      %v4153 = vadd.f32 %v3863, %v4055
      %v4154 = vadd.f32 %v3864, %v4057
      %v4155 = vadd.f32 %v3865, %v4059
      %v4156 = vadd.f32 %v3866, %v4061
      %v4157 = vadd.f32 %v3867, %v4063
      %v4158 = vadd.f32 %v3868, %v4065
      %v4159 = vadd.f32 %v3869, %v4067
      %v4160 = vadd.f32 %v3870, %v4069
      %v4161 = vadd.f32 %v3871, %v4071
      %v4162 = vadd.f32 %v3872, %v4073
      %v4163 = vadd.f32 %v3873, %v4075
      %v4164 = vadd.f32 %v3874, %v4077
      %v4165 = vadd.f32 %v3875, %v4079
      %v4166 = vadd.f32 %v3876, %v4081
      %v4167 = vadd.f32 %v3836, %v4083
      %v4168 = vrot.slane %v3823, 2
      %v4169 = vrot.slane %v3826, 2
      %v4170 = vsel %vm681, %v4168, %v4169
      %v4171 = vrot.slane %v3831, 2
      %v4172 = vsel %vm681, %v4169, %v4171
      %v4173 = vrot.slane %v3671, 2
      %v4174 = vsel %vm681, %v4171, %v4173
      %v4175 = vrot.slane %v3674, 2
      %v4176 = vsel %vm681, %v4173, %v4175
      %v4177 = vrot.slane %v3679, 2
      %v4178 = vsel %vm681, %v4175, %v4177
      %v4179 = vrot.slane %v3682, 2
      %v4180 = vsel %vm681, %v4177, %v4179
      %v4181 = vrot.slane %v3687, 2
      %v4182 = vsel %vm681, %v4179, %v4181
      %v4183 = vrot.slane %v3690, 2
      %v4184 = vsel %vm681, %v4181, %v4183
      %v4185 = vrot.slane %v3695, 2
      %v4186 = vsel %vm681, %v4183, %v4185
      %v4187 = vrot.slane %v3698, 2
      %v4188 = vsel %vm681, %v4185, %v4187
      %v4189 = vrot.slane %v3703, 2
      %v4190 = vsel %vm681, %v4187, %v4189
      %v4191 = vrot.slane %v3706, 2
      %v4192 = vsel %vm681, %v4189, %v4191
      %v4193 = vrot.slane %v3711, 2
      %v4194 = vsel %vm681, %v4191, %v4193
      %v4195 = vrot.slane %v3714, 2
      %v4196 = vsel %vm681, %v4193, %v4195
      %v4197 = vrot.slane %v3719, 2
      %v4198 = vsel %vm681, %v4195, %v4197
      %v4199 = vrot.slane %v3722, 2
      %v4200 = vsel %vm681, %v4197, %v4199
      %v4201 = vrot.slane %v3727, 2
      %v4202 = vsel %vm681, %v4199, %v4201
      %v4203 = vrot.slane %v3730, 2
      %v4204 = vsel %vm681, %v4201, %v4203
      %v4205 = vrot.slane %v3735, 2
      %v4206 = vsel %vm681, %v4203, %v4205
      %v4207 = vrot.slane %v3738, 2
      %v4208 = vsel %vm681, %v4205, %v4207
      %v4209 = vrot.slane %v3743, 2
      %v4210 = vsel %vm681, %v4207, %v4209
      %v4211 = vrot.slane %v3746, 2
      %v4212 = vsel %vm681, %v4209, %v4211
      %v4213 = vrot.slane %v3751, 2
      %v4214 = vsel %vm681, %v4211, %v4213
      %v4215 = vrot.slane %v3754, 2
      %v4216 = vsel %vm681, %v4213, %v4215
      %v4217 = vrot.slane %v3759, 2
      %v4218 = vsel %vm681, %v4215, %v4217
      %v4219 = vrot.slane %v3762, 2
      %v4220 = vsel %vm681, %v4217, %v4219
      %v4221 = vrot.slane %v3767, 2
      %v4222 = vsel %vm681, %v4219, %v4221
      %v4223 = vrot.slane %v3770, 2
      %v4224 = vsel %vm681, %v4221, %v4223
      %v4225 = vrot.slane %v3775, 2
      %v4226 = vsel %vm681, %v4223, %v4225
      %v4227 = vrot.slane %v3778, 2
      %v4228 = vsel %vm681, %v4225, %v4227
      %v4229 = vrot.slane %v3783, 2
      %v4230 = vsel %vm681, %v4227, %v4229
      %v4231 = vrot.slane %v3786, 2
      %v4232 = vsel %vm681, %v4229, %v4231
      %v4233 = vrot.slane %v3791, 2
      %v4234 = vsel %vm681, %v4231, %v4233
      %v4235 = vrot.slane %v3794, 2
      %v4236 = vsel %vm681, %v4233, %v4235
      %v4237 = vrot.slane %v3799, 2
      %v4238 = vsel %vm681, %v4235, %v4237
      %v4239 = vrot.slane %v3802, 2
      %v4240 = vsel %vm681, %v4237, %v4239
      %v4241 = vrot.slane %v3807, 2
      %v4242 = vsel %vm681, %v4239, %v4241
      %v4243 = vrot.slane %v3810, 2
      %v4244 = vsel %vm681, %v4241, %v4243
      %v4245 = vrot.slane %v3815, 2
      %v4246 = vsel %vm681, %v4243, %v4245
      %v4247 = vrot.slane %v3818, 2
      %v4248 = vsel %vm681, %v4245, %v4247
      %v4249 = vsel %vm681, %v4247, %v4168
      %4250 = vrot.lane.b32.xlu0 %v4170, 120
      %v4251 = vpop.permute.xlu0 %4250
      %4252 = vrot.lane.b32.xlu0 %v4172, 120
      %v4253 = vpop.permute.xlu0 %4252
      %4254 = vrot.lane.b32.xlu0 %v4174, 120
      %v4255 = vpop.permute.xlu0 %4254
      %4256 = vrot.lane.b32.xlu0 %v4176, 120
      %v4257 = vpop.permute.xlu0 %4256
      %4258 = vrot.lane.b32.xlu0 %v4178, 120
      %v4259 = vpop.permute.xlu0 %4258
      %4260 = vrot.lane.b32.xlu0 %v4180, 120
      %v4261 = vpop.permute.xlu0 %4260
      %4262 = vrot.lane.b32.xlu0 %v4182, 120
      %v4263 = vpop.permute.xlu0 %4262
      %4264 = vrot.lane.b32.xlu0 %v4184, 120
      %v4265 = vpop.permute.xlu0 %4264
      %4266 = vrot.lane.b32.xlu0 %v4186, 120
      %v4267 = vpop.permute.xlu0 %4266
      %4268 = vrot.lane.b32.xlu0 %v4188, 120
      %v4269 = vpop.permute.xlu0 %4268
      %4270 = vrot.lane.b32.xlu0 %v4190, 120
      %v4271 = vpop.permute.xlu0 %4270
      %4272 = vrot.lane.b32.xlu0 %v4192, 120
      %v4273 = vpop.permute.xlu0 %4272
      %4274 = vrot.lane.b32.xlu0 %v4194, 120
      %v4275 = vpop.permute.xlu0 %4274
      %4276 = vrot.lane.b32.xlu0 %v4196, 120
      %v4277 = vpop.permute.xlu0 %4276
      %4278 = vrot.lane.b32.xlu0 %v4198, 120
      %v4279 = vpop.permute.xlu0 %4278
      %4280 = vrot.lane.b32.xlu0 %v4200, 120
      %v4281 = vpop.permute.xlu0 %4280
      %4282 = vrot.lane.b32.xlu0 %v4202, 120
      %v4283 = vpop.permute.xlu0 %4282
      %4284 = vrot.lane.b32.xlu0 %v4204, 120
      %v4285 = vpop.permute.xlu0 %4284
      %4286 = vrot.lane.b32.xlu0 %v4206, 120
      %v4287 = vpop.permute.xlu0 %4286
      %4288 = vrot.lane.b32.xlu0 %v4208, 120
      %v4289 = vpop.permute.xlu0 %4288
      %4290 = vrot.lane.b32.xlu0 %v4210, 120
      %v4291 = vpop.permute.xlu0 %4290
      %4292 = vrot.lane.b32.xlu0 %v4212, 120
      %v4293 = vpop.permute.xlu0 %4292
      %4294 = vrot.lane.b32.xlu0 %v4214, 120
      %v4295 = vpop.permute.xlu0 %4294
      %4296 = vrot.lane.b32.xlu0 %v4216, 120
      %v4297 = vpop.permute.xlu0 %4296
      %4298 = vrot.lane.b32.xlu0 %v4218, 120
      %v4299 = vpop.permute.xlu0 %4298
      %4300 = vrot.lane.b32.xlu0 %v4220, 120
      %v4301 = vpop.permute.xlu0 %4300
      %4302 = vrot.lane.b32.xlu0 %v4222, 120
      %v4303 = vpop.permute.xlu0 %4302
      %4304 = vrot.lane.b32.xlu0 %v4224, 120
      %v4305 = vpop.permute.xlu0 %4304
      %4306 = vrot.lane.b32.xlu0 %v4226, 120
      %v4307 = vpop.permute.xlu0 %4306
      %4308 = vrot.lane.b32.xlu0 %v4228, 120
      %v4309 = vpop.permute.xlu0 %4308
      %4310 = vrot.lane.b32.xlu0 %v4230, 120
      %v4311 = vpop.permute.xlu0 %4310
      %4312 = vrot.lane.b32.xlu0 %v4232, 120
      %v4313 = vpop.permute.xlu0 %4312
      %4314 = vrot.lane.b32.xlu0 %v4234, 120
      %v4315 = vpop.permute.xlu0 %4314
      %4316 = vrot.lane.b32.xlu0 %v4236, 120
      %v4317 = vpop.permute.xlu0 %4316
      %4318 = vrot.lane.b32.xlu0 %v4238, 120
      %v4319 = vpop.permute.xlu0 %4318
      %4320 = vrot.lane.b32.xlu0 %v4240, 120
      %v4321 = vpop.permute.xlu0 %4320
      %4322 = vrot.lane.b32.xlu0 %v4242, 120
      %v4323 = vpop.permute.xlu0 %4322
      %4324 = vrot.lane.b32.xlu0 %v4244, 120
      %v4325 = vpop.permute.xlu0 %4324
      %4326 = vrot.lane.b32.xlu0 %v4246, 120
      %v4327 = vpop.permute.xlu0 %4326
      %4328 = vrot.lane.b32.xlu0 %v4248, 120
      %v4329 = vpop.permute.xlu0 %4328
      %4330 = vrot.lane.b32.xlu0 %v4249, 120
      %v4331 = vpop.permute.xlu0 %4330
      %4332 = vrot.lane.b32.xlu0 %v4168, 120
      %v4333 = vpop.permute.xlu0 %4332
      %v4376 = vadd.f32 %v4126, %v4251
      %v4377 = vadd.f32 %v4127, %v4253
      %v4378 = vadd.f32 %v4128, %v4255
      %v4379 = vadd.f32 %v4129, %v4257
      %v4380 = vadd.f32 %v4130, %v4259
      %v4381 = vadd.f32 %v4131, %v4261
      %v4382 = vadd.f32 %v4132, %v4263
      %v4383 = vadd.f32 %v4133, %v4265
      %v4384 = vadd.f32 %v4134, %v4267
      %v4385 = vadd.f32 %v4135, %v4269
      %v4386 = vadd.f32 %v4136, %v4271
      %v4387 = vadd.f32 %v4137, %v4273
      %v4388 = vadd.f32 %v4138, %v4275
      %v4389 = vadd.f32 %v4139, %v4277
      %v4390 = vadd.f32 %v4140, %v4279
      %v4391 = vadd.f32 %v4141, %v4281
      %v4392 = vadd.f32 %v4142, %v4283
      %v4393 = vadd.f32 %v4143, %v4285
      %v4394 = vadd.f32 %v4144, %v4287
      %v4395 = vadd.f32 %v4145, %v4289
      %v4396 = vadd.f32 %v4146, %v4291
      %v4397 = vadd.f32 %v4147, %v4293
      %v4398 = vadd.f32 %v4148, %v4295
      %v4399 = vadd.f32 %v4149, %v4297
      %v4400 = vadd.f32 %v4150, %v4299
      %v4401 = vadd.f32 %v4151, %v4301
      %v4402 = vadd.f32 %v4152, %v4303
      %v4403 = vadd.f32 %v4153, %v4305
      %v4404 = vadd.f32 %v4154, %v4307
      %v4405 = vadd.f32 %v4155, %v4309
      %v4406 = vadd.f32 %v4156, %v4311
      %v4407 = vadd.f32 %v4157, %v4313
      %v4408 = vadd.f32 %v4158, %v4315
      %v4409 = vadd.f32 %v4159, %v4317
      %v4410 = vadd.f32 %v4160, %v4319
      %v4411 = vadd.f32 %v4161, %v4321
      %v4412 = vadd.f32 %v4162, %v4323
      %v4413 = vadd.f32 %v4163, %v4325
      %v4414 = vadd.f32 %v4164, %v4327
      %v4415 = vadd.f32 %v4165, %v4329
      %v4416 = vadd.f32 %v4166, %v4331
      %v4417 = vadd.f32 %v4167, %v4333
      %4418 = vrot.lane.b32.xlu0 %v4174, 116
      %v4419 = vpop.permute.xlu0 %4418
      %4420 = vrot.lane.b32.xlu0 %v4176, 116
      %v4421 = vpop.permute.xlu0 %4420
      %4422 = vrot.lane.b32.xlu0 %v4178, 116
      %v4423 = vpop.permute.xlu0 %4422
      %4424 = vrot.lane.b32.xlu0 %v4180, 116
      %v4425 = vpop.permute.xlu0 %4424
      %4426 = vrot.lane.b32.xlu0 %v4182, 116
      %v4427 = vpop.permute.xlu0 %4426
      %4428 = vrot.lane.b32.xlu0 %v4184, 116
      %v4429 = vpop.permute.xlu0 %4428
      %4430 = vrot.lane.b32.xlu0 %v4186, 116
      %v4431 = vpop.permute.xlu0 %4430
      %4432 = vrot.lane.b32.xlu0 %v4188, 116
      %v4433 = vpop.permute.xlu0 %4432
      %4434 = vrot.lane.b32.xlu0 %v4190, 116
      %v4435 = vpop.permute.xlu0 %4434
      %4436 = vrot.lane.b32.xlu0 %v4192, 116
      %v4437 = vpop.permute.xlu0 %4436
      %4438 = vrot.lane.b32.xlu0 %v4194, 116
      %v4439 = vpop.permute.xlu0 %4438
      %4440 = vrot.lane.b32.xlu0 %v4196, 116
      %v4441 = vpop.permute.xlu0 %4440
      %4442 = vrot.lane.b32.xlu0 %v4198, 116
      %v4443 = vpop.permute.xlu0 %4442
      %4444 = vrot.lane.b32.xlu0 %v4200, 116
      %v4445 = vpop.permute.xlu0 %4444
      %4446 = vrot.lane.b32.xlu0 %v4202, 116
      %v4447 = vpop.permute.xlu0 %4446
      %4448 = vrot.lane.b32.xlu0 %v4204, 116
      %v4449 = vpop.permute.xlu0 %4448
      %4450 = vrot.lane.b32.xlu0 %v4206, 116
      %v4451 = vpop.permute.xlu0 %4450
      %4452 = vrot.lane.b32.xlu0 %v4208, 116
      %v4453 = vpop.permute.xlu0 %4452
      %4454 = vrot.lane.b32.xlu0 %v4210, 116
      %v4455 = vpop.permute.xlu0 %4454
      %4456 = vrot.lane.b32.xlu0 %v4212, 116
      %v4457 = vpop.permute.xlu0 %4456
      %4458 = vrot.lane.b32.xlu0 %v4214, 116
      %v4459 = vpop.permute.xlu0 %4458
      %4460 = vrot.lane.b32.xlu0 %v4216, 116
      %v4461 = vpop.permute.xlu0 %4460
      %4462 = vrot.lane.b32.xlu0 %v4218, 116
      %v4463 = vpop.permute.xlu0 %4462
      %4464 = vrot.lane.b32.xlu0 %v4220, 116
      %v4465 = vpop.permute.xlu0 %4464
      %4466 = vrot.lane.b32.xlu0 %v4222, 116
      %v4467 = vpop.permute.xlu0 %4466
      %4468 = vrot.lane.b32.xlu0 %v4224, 116
      %v4469 = vpop.permute.xlu0 %4468
      %4470 = vrot.lane.b32.xlu0 %v4226, 116
      %v4471 = vpop.permute.xlu0 %4470
      %4472 = vrot.lane.b32.xlu0 %v4228, 116
      %v4473 = vpop.permute.xlu0 %4472
      %4474 = vrot.lane.b32.xlu0 %v4230, 116
      %v4475 = vpop.permute.xlu0 %4474
      %4476 = vrot.lane.b32.xlu0 %v4232, 116
      %v4477 = vpop.permute.xlu0 %4476
      %4478 = vrot.lane.b32.xlu0 %v4234, 116
      %v4479 = vpop.permute.xlu0 %4478
      %4480 = vrot.lane.b32.xlu0 %v4236, 116
      %v4481 = vpop.permute.xlu0 %4480
      %4482 = vrot.lane.b32.xlu0 %v4238, 116
      %v4483 = vpop.permute.xlu0 %4482
      %4484 = vrot.lane.b32.xlu0 %v4240, 116
      %v4485 = vpop.permute.xlu0 %4484
      %4486 = vrot.lane.b32.xlu0 %v4242, 116
      %v4487 = vpop.permute.xlu0 %4486
      %4488 = vrot.lane.b32.xlu0 %v4244, 116
      %v4489 = vpop.permute.xlu0 %4488
      %4490 = vrot.lane.b32.xlu0 %v4246, 116
      %v4491 = vpop.permute.xlu0 %4490
      %4492 = vrot.lane.b32.xlu0 %v4248, 116
      %v4493 = vpop.permute.xlu0 %4492
      %4494 = vrot.lane.b32.xlu0 %v4249, 116
      %v4495 = vpop.permute.xlu0 %4494
      %4496 = vrot.lane.b32.xlu0 %v4170, 116
      %v4497 = vpop.permute.xlu0 %4496
      %4498 = vrot.lane.b32.xlu0 %v4172, 116
      %v4499 = vpop.permute.xlu0 %4498
      %4500 = vrot.lane.b32.xlu0 %v4171, 116
      %v4501 = vpop.permute.xlu0 %4500
      %v4544 = vadd.f32 %v4376, %v4419
      %v4545 = vadd.f32 %v4377, %v4421
      %v4546 = vadd.f32 %v4378, %v4423
      %v4547 = vadd.f32 %v4379, %v4425
      %v4548 = vadd.f32 %v4380, %v4427
      %v4549 = vadd.f32 %v4381, %v4429
      %v4550 = vadd.f32 %v4382, %v4431
      %v4551 = vadd.f32 %v4383, %v4433
      %v4552 = vadd.f32 %v4384, %v4435
      %v4553 = vadd.f32 %v4385, %v4437
      %v4554 = vadd.f32 %v4386, %v4439
      %v4555 = vadd.f32 %v4387, %v4441
      %v4556 = vadd.f32 %v4388, %v4443
      %v4557 = vadd.f32 %v4389, %v4445
      %v4558 = vadd.f32 %v4390, %v4447
      %v4559 = vadd.f32 %v4391, %v4449
      %v4560 = vadd.f32 %v4392, %v4451
      %v4561 = vadd.f32 %v4393, %v4453
      %v4562 = vadd.f32 %v4394, %v4455
      %v4563 = vadd.f32 %v4395, %v4457
      %v4564 = vadd.f32 %v4396, %v4459
      %v4565 = vadd.f32 %v4397, %v4461
      %v4566 = vadd.f32 %v4398, %v4463
      %v4567 = vadd.f32 %v4399, %v4465
      %v4568 = vadd.f32 %v4400, %v4467
      %v4569 = vadd.f32 %v4401, %v4469
      %v4570 = vadd.f32 %v4402, %v4471
      %v4571 = vadd.f32 %v4403, %v4473
      %v4572 = vadd.f32 %v4404, %v4475
      %v4573 = vadd.f32 %v4405, %v4477
      %v4574 = vadd.f32 %v4406, %v4479
      %v4575 = vadd.f32 %v4407, %v4481
      %v4576 = vadd.f32 %v4408, %v4483
      %v4577 = vadd.f32 %v4409, %v4485
      %v4578 = vadd.f32 %v4410, %v4487
      %v4579 = vadd.f32 %v4411, %v4489
      %v4580 = vadd.f32 %v4412, %v4491
      %v4581 = vadd.f32 %v4413, %v4493
      %v4582 = vadd.f32 %v4414, %v4495
      %v4583 = vadd.f32 %v4415, %v4497
      %v4584 = vadd.f32 %v4416, %v4499
      %v4585 = vadd.f32 %v4417, %v4501
      %v4586 = vrot.slane %v3671, 3
      %v4587 = vrot.slane %v3674, 3
      %v4588 = vsel %vm1016, %v4586, %v4587
      %v4589 = vrot.slane %v3679, 3
      %v4590 = vsel %vm1016, %v4587, %v4589
      %v4591 = vrot.slane %v3682, 3
      %v4592 = vsel %vm1016, %v4589, %v4591
      %v4593 = vrot.slane %v3687, 3
      %v4594 = vsel %vm1016, %v4591, %v4593
      %v4595 = vrot.slane %v3690, 3
      %v4596 = vsel %vm1016, %v4593, %v4595
      %v4597 = vrot.slane %v3695, 3
      %v4598 = vsel %vm1016, %v4595, %v4597
      %v4599 = vrot.slane %v3698, 3
      %v4600 = vsel %vm1016, %v4597, %v4599
      %v4601 = vrot.slane %v3703, 3
      %v4602 = vsel %vm1016, %v4599, %v4601
      %v4603 = vrot.slane %v3706, 3
      %v4604 = vsel %vm1016, %v4601, %v4603
      %v4605 = vrot.slane %v3711, 3
      %v4606 = vsel %vm1016, %v4603, %v4605
      %v4607 = vrot.slane %v3714, 3
      %v4608 = vsel %vm1016, %v4605, %v4607
      %v4609 = vrot.slane %v3719, 3
      %v4610 = vsel %vm1016, %v4607, %v4609
      %v4611 = vrot.slane %v3722, 3
      %v4612 = vsel %vm1016, %v4609, %v4611
      %v4613 = vrot.slane %v3727, 3
      %v4614 = vsel %vm1016, %v4611, %v4613
      %v4615 = vrot.slane %v3730, 3
      %v4616 = vsel %vm1016, %v4613, %v4615
      %v4617 = vrot.slane %v3735, 3
      %v4618 = vsel %vm1016, %v4615, %v4617
      %v4619 = vrot.slane %v3738, 3
      %v4620 = vsel %vm1016, %v4617, %v4619
      %v4621 = vrot.slane %v3743, 3
      %v4622 = vsel %vm1016, %v4619, %v4621
      %v4623 = vrot.slane %v3746, 3
      %v4624 = vsel %vm1016, %v4621, %v4623
      %v4625 = vrot.slane %v3751, 3
      %v4626 = vsel %vm1016, %v4623, %v4625
      %v4627 = vrot.slane %v3754, 3
      %v4628 = vsel %vm1016, %v4625, %v4627
      %v4629 = vrot.slane %v3759, 3
      %v4630 = vsel %vm1016, %v4627, %v4629
      %v4631 = vrot.slane %v3762, 3
      %v4632 = vsel %vm1016, %v4629, %v4631
      %v4633 = vrot.slane %v3767, 3
      %v4634 = vsel %vm1016, %v4631, %v4633
      %v4635 = vrot.slane %v3770, 3
      %v4636 = vsel %vm1016, %v4633, %v4635
      %v4637 = vrot.slane %v3775, 3
      %v4638 = vsel %vm1016, %v4635, %v4637
      %v4639 = vrot.slane %v3778, 3
      %v4640 = vsel %vm1016, %v4637, %v4639
      %v4641 = vrot.slane %v3783, 3
      %v4642 = vsel %vm1016, %v4639, %v4641
      %v4643 = vrot.slane %v3786, 3
      %v4644 = vsel %vm1016, %v4641, %v4643
      %v4645 = vrot.slane %v3791, 3
      %v4646 = vsel %vm1016, %v4643, %v4645
      %v4647 = vrot.slane %v3794, 3
      %v4648 = vsel %vm1016, %v4645, %v4647
      %v4649 = vrot.slane %v3799, 3
      %v4650 = vsel %vm1016, %v4647, %v4649
      %v4651 = vrot.slane %v3802, 3
      %v4652 = vsel %vm1016, %v4649, %v4651
      %v4653 = vrot.slane %v3807, 3
      %v4654 = vsel %vm1016, %v4651, %v4653
      %v4655 = vrot.slane %v3810, 3
      %v4656 = vsel %vm1016, %v4653, %v4655
      %v4657 = vrot.slane %v3815, 3
      %v4658 = vsel %vm1016, %v4655, %v4657
      %v4659 = vrot.slane %v3818, 3
      %v4660 = vsel %vm1016, %v4657, %v4659
      %v4661 = vrot.slane %v3823, 3
      %v4662 = vsel %vm1016, %v4659, %v4661
      %v4663 = vrot.slane %v3826, 3
      %v4664 = vsel %vm1016, %v4661, %v4663
      %v4665 = vrot.slane %v3831, 3
      %v4666 = vsel %vm1016, %v4663, %v4665
      %4667 = vrot.lane.b32.xlu0 %v4586, 112
      %v4668 = vpop.permute.xlu0 %4667
      %4669 = vrot.lane.b32.xlu0 %v4588, 112
      %v4670 = vpop.permute.xlu0 %4669
      %4671 = vrot.lane.b32.xlu0 %v4590, 112
      %v4672 = vpop.permute.xlu0 %4671
      %4673 = vrot.lane.b32.xlu0 %v4592, 112
      %v4674 = vpop.permute.xlu0 %4673
      %4675 = vrot.lane.b32.xlu0 %v4594, 112
      %v4676 = vpop.permute.xlu0 %4675
      %4677 = vrot.lane.b32.xlu0 %v4596, 112
      %v4678 = vpop.permute.xlu0 %4677
      %4679 = vrot.lane.b32.xlu0 %v4598, 112
      %v4680 = vpop.permute.xlu0 %4679
      %4681 = vrot.lane.b32.xlu0 %v4600, 112
      %v4682 = vpop.permute.xlu0 %4681
      %4683 = vrot.lane.b32.xlu0 %v4602, 112
      %v4684 = vpop.permute.xlu0 %4683
      %4685 = vrot.lane.b32.xlu0 %v4604, 112
      %v4686 = vpop.permute.xlu0 %4685
      %4687 = vrot.lane.b32.xlu0 %v4606, 112
      %v4688 = vpop.permute.xlu0 %4687
      %4689 = vrot.lane.b32.xlu0 %v4608, 112
      %v4690 = vpop.permute.xlu0 %4689
      %4691 = vrot.lane.b32.xlu0 %v4610, 112
      %v4692 = vpop.permute.xlu0 %4691
      %4693 = vrot.lane.b32.xlu0 %v4612, 112
      %v4694 = vpop.permute.xlu0 %4693
      %4695 = vrot.lane.b32.xlu0 %v4614, 112
      %v4696 = vpop.permute.xlu0 %4695
      %4697 = vrot.lane.b32.xlu0 %v4616, 112
      %v4698 = vpop.permute.xlu0 %4697
      %4699 = vrot.lane.b32.xlu0 %v4618, 112
      %v4700 = vpop.permute.xlu0 %4699
      %4701 = vrot.lane.b32.xlu0 %v4620, 112
      %v4702 = vpop.permute.xlu0 %4701
      %4703 = vrot.lane.b32.xlu0 %v4622, 112
      %v4704 = vpop.permute.xlu0 %4703
      %4705 = vrot.lane.b32.xlu0 %v4624, 112
      %v4706 = vpop.permute.xlu0 %4705
      %4707 = vrot.lane.b32.xlu0 %v4626, 112
      %v4708 = vpop.permute.xlu0 %4707
      %4709 = vrot.lane.b32.xlu0 %v4628, 112
      %v4710 = vpop.permute.xlu0 %4709
      %4711 = vrot.lane.b32.xlu0 %v4630, 112
      %v4712 = vpop.permute.xlu0 %4711
      %4713 = vrot.lane.b32.xlu0 %v4632, 112
      %v4714 = vpop.permute.xlu0 %4713
      %4715 = vrot.lane.b32.xlu0 %v4634, 112
      %v4716 = vpop.permute.xlu0 %4715
      %4717 = vrot.lane.b32.xlu0 %v4636, 112
      %v4718 = vpop.permute.xlu0 %4717
      %4719 = vrot.lane.b32.xlu0 %v4638, 112
      %v4720 = vpop.permute.xlu0 %4719
      %4721 = vrot.lane.b32.xlu0 %v4640, 112
      %v4722 = vpop.permute.xlu0 %4721
      %4723 = vrot.lane.b32.xlu0 %v4642, 112
      %v4724 = vpop.permute.xlu0 %4723
      %4725 = vrot.lane.b32.xlu0 %v4644, 112
      %v4726 = vpop.permute.xlu0 %4725
      %4727 = vrot.lane.b32.xlu0 %v4646, 112
      %v4728 = vpop.permute.xlu0 %4727
      %4729 = vrot.lane.b32.xlu0 %v4648, 112
      %v4730 = vpop.permute.xlu0 %4729
      %4731 = vrot.lane.b32.xlu0 %v4650, 112
      %v4732 = vpop.permute.xlu0 %4731
      %4733 = vrot.lane.b32.xlu0 %v4652, 112
      %v4734 = vpop.permute.xlu0 %4733
      %4735 = vrot.lane.b32.xlu0 %v4654, 112
      %v4736 = vpop.permute.xlu0 %4735
      %4737 = vrot.lane.b32.xlu0 %v4656, 112
      %v4738 = vpop.permute.xlu0 %4737
      %4739 = vrot.lane.b32.xlu0 %v4658, 112
      %v4740 = vpop.permute.xlu0 %4739
      %4741 = vrot.lane.b32.xlu0 %v4660, 112
      %v4742 = vpop.permute.xlu0 %4741
      %4743 = vrot.lane.b32.xlu0 %v4662, 112
      %v4744 = vpop.permute.xlu0 %4743
      %4745 = vrot.lane.b32.xlu0 %v4664, 112
      %v4746 = vpop.permute.xlu0 %4745
      %4747 = vrot.lane.b32.xlu0 %v4666, 112
      %v4748 = vpop.permute.xlu0 %4747
      %4749 = vrot.lane.b32.xlu0 %v4665, 112
      %v4750 = vpop.permute.xlu0 %4749
      %v4793 = vadd.f32 %v4544, %v4668
      %v4794 = vadd.f32 %v4545, %v4670
      %v4795 = vadd.f32 %v4546, %v4672
      %v4796 = vadd.f32 %v4547, %v4674
      %v4797 = vadd.f32 %v4548, %v4676
      %v4798 = vadd.f32 %v4549, %v4678
      %v4799 = vadd.f32 %v4550, %v4680
      %v4800 = vadd.f32 %v4551, %v4682
      %v4801 = vadd.f32 %v4552, %v4684
      %v4802 = vadd.f32 %v4553, %v4686
      %v4803 = vadd.f32 %v4554, %v4688
      %v4804 = vadd.f32 %v4555, %v4690
      %v4805 = vadd.f32 %v4556, %v4692
      %v4806 = vadd.f32 %v4557, %v4694
      %v4807 = vadd.f32 %v4558, %v4696
      %v4808 = vadd.f32 %v4559, %v4698
      %v4809 = vadd.f32 %v4560, %v4700
      %v4810 = vadd.f32 %v4561, %v4702
      %v4811 = vadd.f32 %v4562, %v4704
      %v4812 = vadd.f32 %v4563, %v4706
      %v4813 = vadd.f32 %v4564, %v4708
      %v4814 = vadd.f32 %v4565, %v4710
      %v4815 = vadd.f32 %v4566, %v4712
      %v4816 = vadd.f32 %v4567, %v4714
      %v4817 = vadd.f32 %v4568, %v4716
      %v4818 = vadd.f32 %v4569, %v4718
      %v4819 = vadd.f32 %v4570, %v4720
      %v4820 = vadd.f32 %v4571, %v4722
      %v4821 = vadd.f32 %v4572, %v4724
      %v4822 = vadd.f32 %v4573, %v4726
      %v4823 = vadd.f32 %v4574, %v4728
      %v4824 = vadd.f32 %v4575, %v4730
      %v4825 = vadd.f32 %v4576, %v4732
      %v4826 = vadd.f32 %v4577, %v4734
      %v4827 = vadd.f32 %v4578, %v4736
      %v4828 = vadd.f32 %v4579, %v4738
      %v4829 = vadd.f32 %v4580, %v4740
      %v4830 = vadd.f32 %v4581, %v4742
      %v4831 = vadd.f32 %v4582, %v4744
      %v4832 = vadd.f32 %v4583, %v4746
      %v4833 = vadd.f32 %v4584, %v4748
      %v4834 = vadd.f32 %v4585, %v4750
      %v4835 = vrot.slane %v3671, 4
      %v4836 = vrot.slane %v3674, 4
      %v4837 = vsel %vm1224, %v4835, %v4836
      %v4838 = vrot.slane %v3679, 4
      %v4839 = vsel %vm1224, %v4836, %v4838
      %v4840 = vrot.slane %v3682, 4
      %v4841 = vsel %vm1224, %v4838, %v4840
      %v4842 = vrot.slane %v3687, 4
      %v4843 = vsel %vm1224, %v4840, %v4842
      %v4844 = vrot.slane %v3690, 4
      %v4845 = vsel %vm1224, %v4842, %v4844
      %v4846 = vrot.slane %v3695, 4
      %v4847 = vsel %vm1224, %v4844, %v4846
      %v4848 = vrot.slane %v3698, 4
      %v4849 = vsel %vm1224, %v4846, %v4848
      %v4850 = vrot.slane %v3703, 4
      %v4851 = vsel %vm1224, %v4848, %v4850
      %v4852 = vrot.slane %v3706, 4
      %v4853 = vsel %vm1224, %v4850, %v4852
      %v4854 = vrot.slane %v3711, 4
      %v4855 = vsel %vm1224, %v4852, %v4854
      %v4856 = vrot.slane %v3714, 4
      %v4857 = vsel %vm1224, %v4854, %v4856
      %v4858 = vrot.slane %v3719, 4
      %v4859 = vsel %vm1224, %v4856, %v4858
      %v4860 = vrot.slane %v3722, 4
      %v4861 = vsel %vm1224, %v4858, %v4860
      %v4862 = vrot.slane %v3727, 4
      %v4863 = vsel %vm1224, %v4860, %v4862
      %v4864 = vrot.slane %v3730, 4
      %v4865 = vsel %vm1224, %v4862, %v4864
      %v4866 = vrot.slane %v3735, 4
      %v4867 = vsel %vm1224, %v4864, %v4866
      %v4868 = vrot.slane %v3738, 4
      %v4869 = vsel %vm1224, %v4866, %v4868
      %v4870 = vrot.slane %v3743, 4
      %v4871 = vsel %vm1224, %v4868, %v4870
      %v4872 = vrot.slane %v3746, 4
      %v4873 = vsel %vm1224, %v4870, %v4872
      %v4874 = vrot.slane %v3751, 4
      %v4875 = vsel %vm1224, %v4872, %v4874
      %v4876 = vrot.slane %v3754, 4
      %v4877 = vsel %vm1224, %v4874, %v4876
      %v4878 = vrot.slane %v3759, 4
      %v4879 = vsel %vm1224, %v4876, %v4878
      %v4880 = vrot.slane %v3762, 4
      %v4881 = vsel %vm1224, %v4878, %v4880
      %v4882 = vrot.slane %v3767, 4
      %v4883 = vsel %vm1224, %v4880, %v4882
      %v4884 = vrot.slane %v3770, 4
      %v4885 = vsel %vm1224, %v4882, %v4884
      %v4886 = vrot.slane %v3775, 4
      %v4887 = vsel %vm1224, %v4884, %v4886
      %v4888 = vrot.slane %v3778, 4
      %v4889 = vsel %vm1224, %v4886, %v4888
      %v4890 = vrot.slane %v3783, 4
      %v4891 = vsel %vm1224, %v4888, %v4890
      %v4892 = vrot.slane %v3786, 4
      %v4893 = vsel %vm1224, %v4890, %v4892
      %v4894 = vrot.slane %v3791, 4
      %v4895 = vsel %vm1224, %v4892, %v4894
      %v4896 = vrot.slane %v3794, 4
      %v4897 = vsel %vm1224, %v4894, %v4896
      %v4898 = vrot.slane %v3799, 4
      %v4899 = vsel %vm1224, %v4896, %v4898
      %v4900 = vrot.slane %v3802, 4
      %v4901 = vsel %vm1224, %v4898, %v4900
      %v4902 = vrot.slane %v3807, 4
      %v4903 = vsel %vm1224, %v4900, %v4902
      %v4904 = vrot.slane %v3810, 4
      %v4905 = vsel %vm1224, %v4902, %v4904
      %v4906 = vrot.slane %v3815, 4
      %v4907 = vsel %vm1224, %v4904, %v4906
      %v4908 = vrot.slane %v3818, 4
      %v4909 = vsel %vm1224, %v4906, %v4908
      %v4910 = vrot.slane %v3823, 4
      %v4911 = vsel %vm1224, %v4908, %v4910
      %v4912 = vrot.slane %v3826, 4
      %v4913 = vsel %vm1224, %v4910, %v4912
      %v4914 = vrot.slane %v3831, 4
      %v4915 = vsel %vm1224, %v4912, %v4914
      %v4916 = vsel %vm1224, %v4914, %v4835
      %4917 = vrot.lane.b32.xlu0 %v4835, 108
      %v4918 = vpop.permute.xlu0 %4917
      %4919 = vrot.lane.b32.xlu0 %v4837, 108
      %v4920 = vpop.permute.xlu0 %4919
      %4921 = vrot.lane.b32.xlu0 %v4839, 108
      %v4922 = vpop.permute.xlu0 %4921
      %4923 = vrot.lane.b32.xlu0 %v4841, 108
      %v4924 = vpop.permute.xlu0 %4923
      %4925 = vrot.lane.b32.xlu0 %v4843, 108
      %v4926 = vpop.permute.xlu0 %4925
      %4927 = vrot.lane.b32.xlu0 %v4845, 108
      %v4928 = vpop.permute.xlu0 %4927
      %4929 = vrot.lane.b32.xlu0 %v4847, 108
      %v4930 = vpop.permute.xlu0 %4929
      %4931 = vrot.lane.b32.xlu0 %v4849, 108
      %v4932 = vpop.permute.xlu0 %4931
      %4933 = vrot.lane.b32.xlu0 %v4851, 108
      %v4934 = vpop.permute.xlu0 %4933
      %4935 = vrot.lane.b32.xlu0 %v4853, 108
      %v4936 = vpop.permute.xlu0 %4935
      %4937 = vrot.lane.b32.xlu0 %v4855, 108
      %v4938 = vpop.permute.xlu0 %4937
      %4939 = vrot.lane.b32.xlu0 %v4857, 108
      %v4940 = vpop.permute.xlu0 %4939
      %4941 = vrot.lane.b32.xlu0 %v4859, 108
      %v4942 = vpop.permute.xlu0 %4941
      %4943 = vrot.lane.b32.xlu0 %v4861, 108
      %v4944 = vpop.permute.xlu0 %4943
      %4945 = vrot.lane.b32.xlu0 %v4863, 108
      %v4946 = vpop.permute.xlu0 %4945
      %4947 = vrot.lane.b32.xlu0 %v4865, 108
      %v4948 = vpop.permute.xlu0 %4947
      %4949 = vrot.lane.b32.xlu0 %v4867, 108
      %v4950 = vpop.permute.xlu0 %4949
      %4951 = vrot.lane.b32.xlu0 %v4869, 108
      %v4952 = vpop.permute.xlu0 %4951
      %4953 = vrot.lane.b32.xlu0 %v4871, 108
      %v4954 = vpop.permute.xlu0 %4953
      %4955 = vrot.lane.b32.xlu0 %v4873, 108
      %v4956 = vpop.permute.xlu0 %4955
      %4957 = vrot.lane.b32.xlu0 %v4875, 108
      %v4958 = vpop.permute.xlu0 %4957
      %4959 = vrot.lane.b32.xlu0 %v4877, 108
      %v4960 = vpop.permute.xlu0 %4959
      %4961 = vrot.lane.b32.xlu0 %v4879, 108
      %v4962 = vpop.permute.xlu0 %4961
      %4963 = vrot.lane.b32.xlu0 %v4881, 108
      %v4964 = vpop.permute.xlu0 %4963
      %4965 = vrot.lane.b32.xlu0 %v4883, 108
      %v4966 = vpop.permute.xlu0 %4965
      %4967 = vrot.lane.b32.xlu0 %v4885, 108
      %v4968 = vpop.permute.xlu0 %4967
      %4969 = vrot.lane.b32.xlu0 %v4887, 108
      %v4970 = vpop.permute.xlu0 %4969
      %4971 = vrot.lane.b32.xlu0 %v4889, 108
      %v4972 = vpop.permute.xlu0 %4971
      %4973 = vrot.lane.b32.xlu0 %v4891, 108
      %v4974 = vpop.permute.xlu0 %4973
      %4975 = vrot.lane.b32.xlu0 %v4893, 108
      %v4976 = vpop.permute.xlu0 %4975
      %4977 = vrot.lane.b32.xlu0 %v4895, 108
      %v4978 = vpop.permute.xlu0 %4977
      %4979 = vrot.lane.b32.xlu0 %v4897, 108
      %v4980 = vpop.permute.xlu0 %4979
      %4981 = vrot.lane.b32.xlu0 %v4899, 108
      %v4982 = vpop.permute.xlu0 %4981
      %4983 = vrot.lane.b32.xlu0 %v4901, 108
      %v4984 = vpop.permute.xlu0 %4983
      %4985 = vrot.lane.b32.xlu0 %v4903, 108
      %v4986 = vpop.permute.xlu0 %4985
      %4987 = vrot.lane.b32.xlu0 %v4905, 108
      %v4988 = vpop.permute.xlu0 %4987
      %4989 = vrot.lane.b32.xlu0 %v4907, 108
      %v4990 = vpop.permute.xlu0 %4989
      %4991 = vrot.lane.b32.xlu0 %v4909, 108
      %v4992 = vpop.permute.xlu0 %4991
      %4993 = vrot.lane.b32.xlu0 %v4911, 108
      %v4994 = vpop.permute.xlu0 %4993
      %4995 = vrot.lane.b32.xlu0 %v4913, 108
      %v4996 = vpop.permute.xlu0 %4995
      %4997 = vrot.lane.b32.xlu0 %v4915, 108
      %v4998 = vpop.permute.xlu0 %4997
      %4999 = vrot.lane.b32.xlu0 %v4916, 108
      %v5000 = vpop.permute.xlu0 %4999
      %v5043 = vadd.f32 %v4793, %v4918
      %v5044 = vadd.f32 %v4794, %v4920
      %v5045 = vadd.f32 %v4795, %v4922
      %v5046 = vadd.f32 %v4796, %v4924
      %v5047 = vadd.f32 %v4797, %v4926
      %v5048 = vadd.f32 %v4798, %v4928
      %v5049 = vadd.f32 %v4799, %v4930
      %v5050 = vadd.f32 %v4800, %v4932
      %v5051 = vadd.f32 %v4801, %v4934
      %v5052 = vadd.f32 %v4802, %v4936
      %v5053 = vadd.f32 %v4803, %v4938
      %v5054 = vadd.f32 %v4804, %v4940
      %v5055 = vadd.f32 %v4805, %v4942
      %v5056 = vadd.f32 %v4806, %v4944
      %v5057 = vadd.f32 %v4807, %v4946
      %v5058 = vadd.f32 %v4808, %v4948
      %v5059 = vadd.f32 %v4809, %v4950
      %v5060 = vadd.f32 %v4810, %v4952
      %v5061 = vadd.f32 %v4811, %v4954
      %v5062 = vadd.f32 %v4812, %v4956
      %v5063 = vadd.f32 %v4813, %v4958
      %v5064 = vadd.f32 %v4814, %v4960
      %v5065 = vadd.f32 %v4815, %v4962
      %v5066 = vadd.f32 %v4816, %v4964
      %v5067 = vadd.f32 %v4817, %v4966
      %v5068 = vadd.f32 %v4818, %v4968
      %v5069 = vadd.f32 %v4819, %v4970
      %v5070 = vadd.f32 %v4820, %v4972
      %v5071 = vadd.f32 %v4821, %v4974
      %v5072 = vadd.f32 %v4822, %v4976
      %v5073 = vadd.f32 %v4823, %v4978
      %v5074 = vadd.f32 %v4824, %v4980
      %v5075 = vadd.f32 %v4825, %v4982
      %v5076 = vadd.f32 %v4826, %v4984
      %v5077 = vadd.f32 %v4827, %v4986
      %v5078 = vadd.f32 %v4828, %v4988
      %v5079 = vadd.f32 %v4829, %v4990
      %v5080 = vadd.f32 %v4830, %v4992
      %v5081 = vadd.f32 %v4831, %v4994
      %v5082 = vadd.f32 %v4832, %v4996
      %v5083 = vadd.f32 %v4833, %v4998
      %v5084 = vadd.f32 %v4834, %v5000
      %5085 = vrot.lane.b32.xlu0 %v4838, 104
      %v5086 = vpop.permute.xlu0 %5085
      %5087 = vrot.lane.b32.xlu0 %v4841, 104
      %v5088 = vpop.permute.xlu0 %5087
      %5089 = vrot.lane.b32.xlu0 %v4843, 104
      %v5090 = vpop.permute.xlu0 %5089
      %5091 = vrot.lane.b32.xlu0 %v4845, 104
      %v5092 = vpop.permute.xlu0 %5091
      %5093 = vrot.lane.b32.xlu0 %v4847, 104
      %v5094 = vpop.permute.xlu0 %5093
      %5095 = vrot.lane.b32.xlu0 %v4849, 104
      %v5096 = vpop.permute.xlu0 %5095
      %5097 = vrot.lane.b32.xlu0 %v4851, 104
      %v5098 = vpop.permute.xlu0 %5097
      %5099 = vrot.lane.b32.xlu0 %v4853, 104
      %v5100 = vpop.permute.xlu0 %5099
      %5101 = vrot.lane.b32.xlu0 %v4855, 104
      %v5102 = vpop.permute.xlu0 %5101
      %5103 = vrot.lane.b32.xlu0 %v4857, 104
      %v5104 = vpop.permute.xlu0 %5103
      %5105 = vrot.lane.b32.xlu0 %v4859, 104
      %v5106 = vpop.permute.xlu0 %5105
      %5107 = vrot.lane.b32.xlu0 %v4861, 104
      %v5108 = vpop.permute.xlu0 %5107
      %5109 = vrot.lane.b32.xlu0 %v4863, 104
      %v5110 = vpop.permute.xlu0 %5109
      %5111 = vrot.lane.b32.xlu0 %v4865, 104
      %v5112 = vpop.permute.xlu0 %5111
      %5113 = vrot.lane.b32.xlu0 %v4867, 104
      %v5114 = vpop.permute.xlu0 %5113
      %5115 = vrot.lane.b32.xlu0 %v4869, 104
      %v5116 = vpop.permute.xlu0 %5115
      %5117 = vrot.lane.b32.xlu0 %v4871, 104
      %v5118 = vpop.permute.xlu0 %5117
      %5119 = vrot.lane.b32.xlu0 %v4873, 104
      %v5120 = vpop.permute.xlu0 %5119
      %5121 = vrot.lane.b32.xlu0 %v4875, 104
      %v5122 = vpop.permute.xlu0 %5121
      %5123 = vrot.lane.b32.xlu0 %v4877, 104
      %v5124 = vpop.permute.xlu0 %5123
      %5125 = vrot.lane.b32.xlu0 %v4879, 104
      %v5126 = vpop.permute.xlu0 %5125
      %5127 = vrot.lane.b32.xlu0 %v4881, 104
      %v5128 = vpop.permute.xlu0 %5127
      %5129 = vrot.lane.b32.xlu0 %v4883, 104
      %v5130 = vpop.permute.xlu0 %5129
      %5131 = vrot.lane.b32.xlu0 %v4885, 104
      %v5132 = vpop.permute.xlu0 %5131
      %5133 = vrot.lane.b32.xlu0 %v4887, 104
      %v5134 = vpop.permute.xlu0 %5133
      %5135 = vrot.lane.b32.xlu0 %v4889, 104
      %v5136 = vpop.permute.xlu0 %5135
      %5137 = vrot.lane.b32.xlu0 %v4891, 104
      %v5138 = vpop.permute.xlu0 %5137
      %5139 = vrot.lane.b32.xlu0 %v4893, 104
      %v5140 = vpop.permute.xlu0 %5139
      %5141 = vrot.lane.b32.xlu0 %v4895, 104
      %v5142 = vpop.permute.xlu0 %5141
      %5143 = vrot.lane.b32.xlu0 %v4897, 104
      %v5144 = vpop.permute.xlu0 %5143
      %5145 = vrot.lane.b32.xlu0 %v4899, 104
      %v5146 = vpop.permute.xlu0 %5145
      %5147 = vrot.lane.b32.xlu0 %v4901, 104
      %v5148 = vpop.permute.xlu0 %5147
      %5149 = vrot.lane.b32.xlu0 %v4903, 104
      %v5150 = vpop.permute.xlu0 %5149
      %5151 = vrot.lane.b32.xlu0 %v4905, 104
      %v5152 = vpop.permute.xlu0 %5151
      %5153 = vrot.lane.b32.xlu0 %v4907, 104
      %v5154 = vpop.permute.xlu0 %5153
      %5155 = vrot.lane.b32.xlu0 %v4909, 104
      %v5156 = vpop.permute.xlu0 %5155
      %5157 = vrot.lane.b32.xlu0 %v4911, 104
      %v5158 = vpop.permute.xlu0 %5157
      %5159 = vrot.lane.b32.xlu0 %v4913, 104
      %v5160 = vpop.permute.xlu0 %5159
      %5161 = vrot.lane.b32.xlu0 %v4915, 104
      %v5162 = vpop.permute.xlu0 %5161
      %5163 = vrot.lane.b32.xlu0 %v4916, 104
      %v5164 = vpop.permute.xlu0 %5163
      %5165 = vrot.lane.b32.xlu0 %v4837, 104
      %v5166 = vpop.permute.xlu0 %5165
      %5167 = vrot.lane.b32.xlu0 %v4839, 104
      %v5168 = vpop.permute.xlu0 %5167
      %v5211 = vadd.f32 %v5043, %v5086
      %v5212 = vadd.f32 %v5044, %v5088
      %v5213 = vadd.f32 %v5045, %v5090
      %v5214 = vadd.f32 %v5046, %v5092
      %v5215 = vadd.f32 %v5047, %v5094
      %v5216 = vadd.f32 %v5048, %v5096
      %v5217 = vadd.f32 %v5049, %v5098
      %v5218 = vadd.f32 %v5050, %v5100
      %v5219 = vadd.f32 %v5051, %v5102
      %v5220 = vadd.f32 %v5052, %v5104
      %v5221 = vadd.f32 %v5053, %v5106
      %v5222 = vadd.f32 %v5054, %v5108
      %v5223 = vadd.f32 %v5055, %v5110
      %v5224 = vadd.f32 %v5056, %v5112
      %v5225 = vadd.f32 %v5057, %v5114
      %v5226 = vadd.f32 %v5058, %v5116
      %v5227 = vadd.f32 %v5059, %v5118
      %v5228 = vadd.f32 %v5060, %v5120
      %v5229 = vadd.f32 %v5061, %v5122
      %v5230 = vadd.f32 %v5062, %v5124
      %v5231 = vadd.f32 %v5063, %v5126
      %v5232 = vadd.f32 %v5064, %v5128
      %v5233 = vadd.f32 %v5065, %v5130
      %v5234 = vadd.f32 %v5066, %v5132
      %v5235 = vadd.f32 %v5067, %v5134
      %v5236 = vadd.f32 %v5068, %v5136
      %v5237 = vadd.f32 %v5069, %v5138
      %v5238 = vadd.f32 %v5070, %v5140
      %v5239 = vadd.f32 %v5071, %v5142
      %v5240 = vadd.f32 %v5072, %v5144
      %v5241 = vadd.f32 %v5073, %v5146
      %v5242 = vadd.f32 %v5074, %v5148
      %v5243 = vadd.f32 %v5075, %v5150
      %v5244 = vadd.f32 %v5076, %v5152
      %v5245 = vadd.f32 %v5077, %v5154
      %v5246 = vadd.f32 %v5078, %v5156
      %v5247 = vadd.f32 %v5079, %v5158
      %v5248 = vadd.f32 %v5080, %v5160
      %v5249 = vadd.f32 %v5081, %v5162
      %v5250 = vadd.f32 %v5082, %v5164
      %v5251 = vadd.f32 %v5083, %v5166
      %v5252 = vadd.f32 %v5084, %v5168
      %v5253 = vrot.slane %v3679, 5
      %v5254 = vrot.slane %v3682, 5
      %v5255 = vsel %vm1559, %v5253, %v5254
      %v5256 = vrot.slane %v3687, 5
      %v5257 = vsel %vm1559, %v5254, %v5256
      %v5258 = vrot.slane %v3690, 5
      %v5259 = vsel %vm1559, %v5256, %v5258
      %v5260 = vrot.slane %v3695, 5
      %v5261 = vsel %vm1559, %v5258, %v5260
      %v5262 = vrot.slane %v3698, 5
      %v5263 = vsel %vm1559, %v5260, %v5262
      %v5264 = vrot.slane %v3703, 5
      %v5265 = vsel %vm1559, %v5262, %v5264
      %v5266 = vrot.slane %v3706, 5
      %v5267 = vsel %vm1559, %v5264, %v5266
      %v5268 = vrot.slane %v3711, 5
      %v5269 = vsel %vm1559, %v5266, %v5268
      %v5270 = vrot.slane %v3714, 5
      %v5271 = vsel %vm1559, %v5268, %v5270
      %v5272 = vrot.slane %v3719, 5
      %v5273 = vsel %vm1559, %v5270, %v5272
      %v5274 = vrot.slane %v3722, 5
      %v5275 = vsel %vm1559, %v5272, %v5274
      %v5276 = vrot.slane %v3727, 5
      %v5277 = vsel %vm1559, %v5274, %v5276
      %v5278 = vrot.slane %v3730, 5
      %v5279 = vsel %vm1559, %v5276, %v5278
      %v5280 = vrot.slane %v3735, 5
      %v5281 = vsel %vm1559, %v5278, %v5280
      %v5282 = vrot.slane %v3738, 5
      %v5283 = vsel %vm1559, %v5280, %v5282
      %v5284 = vrot.slane %v3743, 5
      %v5285 = vsel %vm1559, %v5282, %v5284
      %v5286 = vrot.slane %v3746, 5
      %v5287 = vsel %vm1559, %v5284, %v5286
      %v5288 = vrot.slane %v3751, 5
      %v5289 = vsel %vm1559, %v5286, %v5288
      %v5290 = vrot.slane %v3754, 5
      %v5291 = vsel %vm1559, %v5288, %v5290
      %v5292 = vrot.slane %v3759, 5
      %v5293 = vsel %vm1559, %v5290, %v5292
      %v5294 = vrot.slane %v3762, 5
      %v5295 = vsel %vm1559, %v5292, %v5294
      %v5296 = vrot.slane %v3767, 5
      %v5297 = vsel %vm1559, %v5294, %v5296
      %v5298 = vrot.slane %v3770, 5
      %v5299 = vsel %vm1559, %v5296, %v5298
      %v5300 = vrot.slane %v3775, 5
      %v5301 = vsel %vm1559, %v5298, %v5300
      %v5302 = vrot.slane %v3778, 5
      %v5303 = vsel %vm1559, %v5300, %v5302
      %v5304 = vrot.slane %v3783, 5
      %v5305 = vsel %vm1559, %v5302, %v5304
      %v5306 = vrot.slane %v3786, 5
      %v5307 = vsel %vm1559, %v5304, %v5306
      %v5308 = vrot.slane %v3791, 5
      %v5309 = vsel %vm1559, %v5306, %v5308
      %v5310 = vrot.slane %v3794, 5
      %v5311 = vsel %vm1559, %v5308, %v5310
      %v5312 = vrot.slane %v3799, 5
      %v5313 = vsel %vm1559, %v5310, %v5312
      %v5314 = vrot.slane %v3802, 5
      %v5315 = vsel %vm1559, %v5312, %v5314
      %v5316 = vrot.slane %v3807, 5
      %v5317 = vsel %vm1559, %v5314, %v5316
      %v5318 = vrot.slane %v3810, 5
      %v5319 = vsel %vm1559, %v5316, %v5318
      %v5320 = vrot.slane %v3815, 5
      %v5321 = vsel %vm1559, %v5318, %v5320
      %v5322 = vrot.slane %v3818, 5
      %v5323 = vsel %vm1559, %v5320, %v5322
      %v5324 = vrot.slane %v3823, 5
      %v5325 = vsel %vm1559, %v5322, %v5324
      %v5326 = vrot.slane %v3826, 5
      %v5327 = vsel %vm1559, %v5324, %v5326
      %v5328 = vrot.slane %v3831, 5
      %v5329 = vsel %vm1559, %v5326, %v5328
      %v5330 = vrot.slane %v3671, 5
      %v5331 = vsel %vm1559, %v5328, %v5330
      %v5332 = vrot.slane %v3674, 5
      %v5333 = vsel %vm1559, %v5330, %v5332
      %v5334 = vsel %vm1559, %v5332, %v5253
      %5335 = vrot.lane.b32.xlu0 %v5253, 100
      %v5336 = vpop.permute.xlu0 %5335
      %5337 = vrot.lane.b32.xlu0 %v5255, 100
      %v5338 = vpop.permute.xlu0 %5337
      %5339 = vrot.lane.b32.xlu0 %v5257, 100
      %v5340 = vpop.permute.xlu0 %5339
      %5341 = vrot.lane.b32.xlu0 %v5259, 100
      %v5342 = vpop.permute.xlu0 %5341
      %5343 = vrot.lane.b32.xlu0 %v5261, 100
      %v5344 = vpop.permute.xlu0 %5343
      %5345 = vrot.lane.b32.xlu0 %v5263, 100
      %v5346 = vpop.permute.xlu0 %5345
      %5347 = vrot.lane.b32.xlu0 %v5265, 100
      %v5348 = vpop.permute.xlu0 %5347
      %5349 = vrot.lane.b32.xlu0 %v5267, 100
      %v5350 = vpop.permute.xlu0 %5349
      %5351 = vrot.lane.b32.xlu0 %v5269, 100
      %v5352 = vpop.permute.xlu0 %5351
      %5353 = vrot.lane.b32.xlu0 %v5271, 100
      %v5354 = vpop.permute.xlu0 %5353
      %5355 = vrot.lane.b32.xlu0 %v5273, 100
      %v5356 = vpop.permute.xlu0 %5355
      %5357 = vrot.lane.b32.xlu0 %v5275, 100
      %v5358 = vpop.permute.xlu0 %5357
      %5359 = vrot.lane.b32.xlu0 %v5277, 100
      %v5360 = vpop.permute.xlu0 %5359
      %5361 = vrot.lane.b32.xlu0 %v5279, 100
      %v5362 = vpop.permute.xlu0 %5361
      %5363 = vrot.lane.b32.xlu0 %v5281, 100
      %v5364 = vpop.permute.xlu0 %5363
      %5365 = vrot.lane.b32.xlu0 %v5283, 100
      %v5366 = vpop.permute.xlu0 %5365
      %5367 = vrot.lane.b32.xlu0 %v5285, 100
      %v5368 = vpop.permute.xlu0 %5367
      %5369 = vrot.lane.b32.xlu0 %v5287, 100
      %v5370 = vpop.permute.xlu0 %5369
      %5371 = vrot.lane.b32.xlu0 %v5289, 100
      %v5372 = vpop.permute.xlu0 %5371
      %5373 = vrot.lane.b32.xlu0 %v5291, 100
      %v5374 = vpop.permute.xlu0 %5373
      %5375 = vrot.lane.b32.xlu0 %v5293, 100
      %v5376 = vpop.permute.xlu0 %5375
      %5377 = vrot.lane.b32.xlu0 %v5295, 100
      %v5378 = vpop.permute.xlu0 %5377
      %5379 = vrot.lane.b32.xlu0 %v5297, 100
      %v5380 = vpop.permute.xlu0 %5379
      %5381 = vrot.lane.b32.xlu0 %v5299, 100
      %v5382 = vpop.permute.xlu0 %5381
      %5383 = vrot.lane.b32.xlu0 %v5301, 100
      %v5384 = vpop.permute.xlu0 %5383
      %5385 = vrot.lane.b32.xlu0 %v5303, 100
      %v5386 = vpop.permute.xlu0 %5385
      %5387 = vrot.lane.b32.xlu0 %v5305, 100
      %v5388 = vpop.permute.xlu0 %5387
      %5389 = vrot.lane.b32.xlu0 %v5307, 100
      %v5390 = vpop.permute.xlu0 %5389
      %5391 = vrot.lane.b32.xlu0 %v5309, 100
      %v5392 = vpop.permute.xlu0 %5391
      %5393 = vrot.lane.b32.xlu0 %v5311, 100
      %v5394 = vpop.permute.xlu0 %5393
      %5395 = vrot.lane.b32.xlu0 %v5313, 100
      %v5396 = vpop.permute.xlu0 %5395
      %5397 = vrot.lane.b32.xlu0 %v5315, 100
      %v5398 = vpop.permute.xlu0 %5397
      %5399 = vrot.lane.b32.xlu0 %v5317, 100
      %v5400 = vpop.permute.xlu0 %5399
      %5401 = vrot.lane.b32.xlu0 %v5319, 100
      %v5402 = vpop.permute.xlu0 %5401
      %5403 = vrot.lane.b32.xlu0 %v5321, 100
      %v5404 = vpop.permute.xlu0 %5403
      %5405 = vrot.lane.b32.xlu0 %v5323, 100
      %v5406 = vpop.permute.xlu0 %5405
      %5407 = vrot.lane.b32.xlu0 %v5325, 100
      %v5408 = vpop.permute.xlu0 %5407
      %5409 = vrot.lane.b32.xlu0 %v5327, 100
      %v5410 = vpop.permute.xlu0 %5409
      %5411 = vrot.lane.b32.xlu0 %v5329, 100
      %v5412 = vpop.permute.xlu0 %5411
      %5413 = vrot.lane.b32.xlu0 %v5331, 100
      %v5414 = vpop.permute.xlu0 %5413
      %5415 = vrot.lane.b32.xlu0 %v5333, 100
      %v5416 = vpop.permute.xlu0 %5415
      %5417 = vrot.lane.b32.xlu0 %v5334, 100
      %v5418 = vpop.permute.xlu0 %5417
      %v5461 = vadd.f32 %v5211, %v5336
      %v5462 = vadd.f32 %v5212, %v5338
      %v5463 = vadd.f32 %v5213, %v5340
      %v5464 = vadd.f32 %v5214, %v5342
      %v5465 = vadd.f32 %v5215, %v5344
      %v5466 = vadd.f32 %v5216, %v5346
      %v5467 = vadd.f32 %v5217, %v5348
      %v5468 = vadd.f32 %v5218, %v5350
      %v5469 = vadd.f32 %v5219, %v5352
      %v5470 = vadd.f32 %v5220, %v5354
      %v5471 = vadd.f32 %v5221, %v5356
      %v5472 = vadd.f32 %v5222, %v5358
      %v5473 = vadd.f32 %v5223, %v5360
      %v5474 = vadd.f32 %v5224, %v5362
      %v5475 = vadd.f32 %v5225, %v5364
      %v5476 = vadd.f32 %v5226, %v5366
      %v5477 = vadd.f32 %v5227, %v5368
      %v5478 = vadd.f32 %v5228, %v5370
      %v5479 = vadd.f32 %v5229, %v5372
      %v5480 = vadd.f32 %v5230, %v5374
      %v5481 = vadd.f32 %v5231, %v5376
      %v5482 = vadd.f32 %v5232, %v5378
      %v5483 = vadd.f32 %v5233, %v5380
      %v5484 = vadd.f32 %v5234, %v5382
      %v5485 = vadd.f32 %v5235, %v5384
      %v5486 = vadd.f32 %v5236, %v5386
      %v5487 = vadd.f32 %v5237, %v5388
      %v5488 = vadd.f32 %v5238, %v5390
      %v5489 = vadd.f32 %v5239, %v5392
      %v5490 = vadd.f32 %v5240, %v5394
      %v5491 = vadd.f32 %v5241, %v5396
      %v5492 = vadd.f32 %v5242, %v5398
      %v5493 = vadd.f32 %v5243, %v5400
      %v5494 = vadd.f32 %v5244, %v5402
      %v5495 = vadd.f32 %v5245, %v5404
      %v5496 = vadd.f32 %v5246, %v5406
      %v5497 = vadd.f32 %v5247, %v5408
      %v5498 = vadd.f32 %v5248, %v5410
      %v5499 = vadd.f32 %v5249, %v5412
      %v5500 = vadd.f32 %v5250, %v5414
      %v5501 = vadd.f32 %v5251, %v5416
      %v5502 = vadd.f32 %v5252, %v5418
      %v5503 = vrot.slane %v3679, 6
      %v5504 = vrot.slane %v3682, 6
      %v5505 = vsel %vm1768, %v5503, %v5504
      %v5506 = vrot.slane %v3687, 6
      %v5507 = vsel %vm1768, %v5504, %v5506
      %v5508 = vrot.slane %v3690, 6
      %v5509 = vsel %vm1768, %v5506, %v5508
      %v5510 = vrot.slane %v3695, 6
      %v5511 = vsel %vm1768, %v5508, %v5510
      %v5512 = vrot.slane %v3698, 6
      %v5513 = vsel %vm1768, %v5510, %v5512
      %v5514 = vrot.slane %v3703, 6
      %v5515 = vsel %vm1768, %v5512, %v5514
      %v5516 = vrot.slane %v3706, 6
      %v5517 = vsel %vm1768, %v5514, %v5516
      %v5518 = vrot.slane %v3711, 6
      %v5519 = vsel %vm1768, %v5516, %v5518
      %v5520 = vrot.slane %v3714, 6
      %v5521 = vsel %vm1768, %v5518, %v5520
      %v5522 = vrot.slane %v3719, 6
      %v5523 = vsel %vm1768, %v5520, %v5522
      %v5524 = vrot.slane %v3722, 6
      %v5525 = vsel %vm1768, %v5522, %v5524
      %v5526 = vrot.slane %v3727, 6
      %v5527 = vsel %vm1768, %v5524, %v5526
      %v5528 = vrot.slane %v3730, 6
      %v5529 = vsel %vm1768, %v5526, %v5528
      %v5530 = vrot.slane %v3735, 6
      %v5531 = vsel %vm1768, %v5528, %v5530
      %v5532 = vrot.slane %v3738, 6
      %v5533 = vsel %vm1768, %v5530, %v5532
      %v5534 = vrot.slane %v3743, 6
      %v5535 = vsel %vm1768, %v5532, %v5534
      %v5536 = vrot.slane %v3746, 6
      %v5537 = vsel %vm1768, %v5534, %v5536
      %v5538 = vrot.slane %v3751, 6
      %v5539 = vsel %vm1768, %v5536, %v5538
      %v5540 = vrot.slane %v3754, 6
      %v5541 = vsel %vm1768, %v5538, %v5540
      %v5542 = vrot.slane %v3759, 6
      %v5543 = vsel %vm1768, %v5540, %v5542
      %v5544 = vrot.slane %v3762, 6
      %v5545 = vsel %vm1768, %v5542, %v5544
      %v5546 = vrot.slane %v3767, 6
      %v5547 = vsel %vm1768, %v5544, %v5546
      %v5548 = vrot.slane %v3770, 6
      %v5549 = vsel %vm1768, %v5546, %v5548
      %v5550 = vrot.slane %v3775, 6
      %v5551 = vsel %vm1768, %v5548, %v5550
      %v5552 = vrot.slane %v3778, 6
      %v5553 = vsel %vm1768, %v5550, %v5552
      %v5554 = vrot.slane %v3783, 6
      %v5555 = vsel %vm1768, %v5552, %v5554
      %v5556 = vrot.slane %v3786, 6
      %v5557 = vsel %vm1768, %v5554, %v5556
      %v5558 = vrot.slane %v3791, 6
      %v5559 = vsel %vm1768, %v5556, %v5558
      %v5560 = vrot.slane %v3794, 6
      %v5561 = vsel %vm1768, %v5558, %v5560
      %v5562 = vrot.slane %v3799, 6
      %v5563 = vsel %vm1768, %v5560, %v5562
      %v5564 = vrot.slane %v3802, 6
      %v5565 = vsel %vm1768, %v5562, %v5564
      %v5566 = vrot.slane %v3807, 6
      %v5567 = vsel %vm1768, %v5564, %v5566
      %v5568 = vrot.slane %v3810, 6
      %v5569 = vsel %vm1768, %v5566, %v5568
      %v5570 = vrot.slane %v3815, 6
      %v5571 = vsel %vm1768, %v5568, %v5570
      %v5572 = vrot.slane %v3818, 6
      %v5573 = vsel %vm1768, %v5570, %v5572
      %v5574 = vrot.slane %v3823, 6
      %v5575 = vsel %vm1768, %v5572, %v5574
      %v5576 = vrot.slane %v3826, 6
      %v5577 = vsel %vm1768, %v5574, %v5576
      %v5578 = vrot.slane %v3831, 6
      %v5579 = vsel %vm1768, %v5576, %v5578
      %v5580 = vrot.slane %v3671, 6
      %v5581 = vsel %vm1768, %v5578, %v5580
      %v5582 = vrot.slane %v3674, 6
      %v5583 = vsel %vm1768, %v5580, %v5582
      %v5584 = vsel %vm1768, %v5582, %v5503
      %5585 = vrot.lane.b32.xlu0 %v5503, 96
      %v5586 = vpop.permute.xlu0 %5585
      %5587 = vrot.lane.b32.xlu0 %v5505, 96
      %v5588 = vpop.permute.xlu0 %5587
      %5589 = vrot.lane.b32.xlu0 %v5507, 96
      %v5590 = vpop.permute.xlu0 %5589
      %5591 = vrot.lane.b32.xlu0 %v5509, 96
      %v5592 = vpop.permute.xlu0 %5591
      %5593 = vrot.lane.b32.xlu0 %v5511, 96
      %v5594 = vpop.permute.xlu0 %5593
      %5595 = vrot.lane.b32.xlu0 %v5513, 96
      %v5596 = vpop.permute.xlu0 %5595
      %5597 = vrot.lane.b32.xlu0 %v5515, 96
      %v5598 = vpop.permute.xlu0 %5597
      %5599 = vrot.lane.b32.xlu0 %v5517, 96
      %v5600 = vpop.permute.xlu0 %5599
      %5601 = vrot.lane.b32.xlu0 %v5519, 96
      %v5602 = vpop.permute.xlu0 %5601
      %5603 = vrot.lane.b32.xlu0 %v5521, 96
      %v5604 = vpop.permute.xlu0 %5603
      %5605 = vrot.lane.b32.xlu0 %v5523, 96
      %v5606 = vpop.permute.xlu0 %5605
      %5607 = vrot.lane.b32.xlu0 %v5525, 96
      %v5608 = vpop.permute.xlu0 %5607
      %5609 = vrot.lane.b32.xlu0 %v5527, 96
      %v5610 = vpop.permute.xlu0 %5609
      %5611 = vrot.lane.b32.xlu0 %v5529, 96
      %v5612 = vpop.permute.xlu0 %5611
      %5613 = vrot.lane.b32.xlu0 %v5531, 96
      %v5614 = vpop.permute.xlu0 %5613
      %5615 = vrot.lane.b32.xlu0 %v5533, 96
      %v5616 = vpop.permute.xlu0 %5615
      %5617 = vrot.lane.b32.xlu0 %v5535, 96
      %v5618 = vpop.permute.xlu0 %5617
      %5619 = vrot.lane.b32.xlu0 %v5537, 96
      %v5620 = vpop.permute.xlu0 %5619
      %5621 = vrot.lane.b32.xlu0 %v5539, 96
      %v5622 = vpop.permute.xlu0 %5621
      %5623 = vrot.lane.b32.xlu0 %v5541, 96
      %v5624 = vpop.permute.xlu0 %5623
      %5625 = vrot.lane.b32.xlu0 %v5543, 96
      %v5626 = vpop.permute.xlu0 %5625
      %5627 = vrot.lane.b32.xlu0 %v5545, 96
      %v5628 = vpop.permute.xlu0 %5627
      %5629 = vrot.lane.b32.xlu0 %v5547, 96
      %v5630 = vpop.permute.xlu0 %5629
      %5631 = vrot.lane.b32.xlu0 %v5549, 96
      %v5632 = vpop.permute.xlu0 %5631
      %5633 = vrot.lane.b32.xlu0 %v5551, 96
      %v5634 = vpop.permute.xlu0 %5633
      %5635 = vrot.lane.b32.xlu0 %v5553, 96
      %v5636 = vpop.permute.xlu0 %5635
      %5637 = vrot.lane.b32.xlu0 %v5555, 96
      %v5638 = vpop.permute.xlu0 %5637
      %5639 = vrot.lane.b32.xlu0 %v5557, 96
      %v5640 = vpop.permute.xlu0 %5639
      %5641 = vrot.lane.b32.xlu0 %v5559, 96
      %v5642 = vpop.permute.xlu0 %5641
      %5643 = vrot.lane.b32.xlu0 %v5561, 96
      %v5644 = vpop.permute.xlu0 %5643
      %5645 = vrot.lane.b32.xlu0 %v5563, 96
      %v5646 = vpop.permute.xlu0 %5645
      %5647 = vrot.lane.b32.xlu0 %v5565, 96
      %v5648 = vpop.permute.xlu0 %5647
      %5649 = vrot.lane.b32.xlu0 %v5567, 96
      %v5650 = vpop.permute.xlu0 %5649
      %5651 = vrot.lane.b32.xlu0 %v5569, 96
      %v5652 = vpop.permute.xlu0 %5651
      %5653 = vrot.lane.b32.xlu0 %v5571, 96
      %v5654 = vpop.permute.xlu0 %5653
      %5655 = vrot.lane.b32.xlu0 %v5573, 96
      %v5656 = vpop.permute.xlu0 %5655
      %5657 = vrot.lane.b32.xlu0 %v5575, 96
      %v5658 = vpop.permute.xlu0 %5657
      %5659 = vrot.lane.b32.xlu0 %v5577, 96
      %v5660 = vpop.permute.xlu0 %5659
      %5661 = vrot.lane.b32.xlu0 %v5579, 96
      %v5662 = vpop.permute.xlu0 %5661
      %5663 = vrot.lane.b32.xlu0 %v5581, 96
      %v5664 = vpop.permute.xlu0 %5663
      %5665 = vrot.lane.b32.xlu0 %v5583, 96
      %v5666 = vpop.permute.xlu0 %5665
      %5667 = vrot.lane.b32.xlu0 %v5584, 96
      %v5668 = vpop.permute.xlu0 %5667
      %v5711 = vadd.f32 %v5461, %v5586
      %v5712 = vadd.f32 %v5462, %v5588
      %v5713 = vadd.f32 %v5463, %v5590
      %v5714 = vadd.f32 %v5464, %v5592
      %v5715 = vadd.f32 %v5465, %v5594
      %v5716 = vadd.f32 %v5466, %v5596
      %v5717 = vadd.f32 %v5467, %v5598
      %v5718 = vadd.f32 %v5468, %v5600
      %v5719 = vadd.f32 %v5469, %v5602
      %v5720 = vadd.f32 %v5470, %v5604
      %v5721 = vadd.f32 %v5471, %v5606
      %v5722 = vadd.f32 %v5472, %v5608
      %v5723 = vadd.f32 %v5473, %v5610
      %v5724 = vadd.f32 %v5474, %v5612
      %v5725 = vadd.f32 %v5475, %v5614
      %v5726 = vadd.f32 %v5476, %v5616
      %v5727 = vadd.f32 %v5477, %v5618
      %v5728 = vadd.f32 %v5478, %v5620
      %v5729 = vadd.f32 %v5479, %v5622
      %v5730 = vadd.f32 %v5480, %v5624
      %v5731 = vadd.f32 %v5481, %v5626
      %v5732 = vadd.f32 %v5482, %v5628
      %v5733 = vadd.f32 %v5483, %v5630
      %v5734 = vadd.f32 %v5484, %v5632
      %v5735 = vadd.f32 %v5485, %v5634
      %v5736 = vadd.f32 %v5486, %v5636
      %v5737 = vadd.f32 %v5487, %v5638
      %v5738 = vadd.f32 %v5488, %v5640
      %v5739 = vadd.f32 %v5489, %v5642
      %v5740 = vadd.f32 %v5490, %v5644
      %v5741 = vadd.f32 %v5491, %v5646
      %v5742 = vadd.f32 %v5492, %v5648
      %v5743 = vadd.f32 %v5493, %v5650
      %v5744 = vadd.f32 %v5494, %v5652
      %v5745 = vadd.f32 %v5495, %v5654
      %v5746 = vadd.f32 %v5496, %v5656
      %v5747 = vadd.f32 %v5497, %v5658
      %v5748 = vadd.f32 %v5498, %v5660
      %v5749 = vadd.f32 %v5499, %v5662
      %v5750 = vadd.f32 %v5500, %v5664
      %v5751 = vadd.f32 %v5501, %v5666
      %v5752 = vadd.f32 %v5502, %v5668
      %v5753 = vld [vmem:[%s8] sm:$0x1]
      %v5755 = vlaneseq
      %v5756 = vshrl.u32 %v5755, 7
      %v5757 = vsub.s32 0, %v5756
      %v5758 = vrot.slane %v5753, %v5757
      %v5760 = vadd.f32 %v5711, %v5758
      %v5761 = vadd.f32 %v5712, %v5758
      %v5762 = vadd.f32 %v5713, %v5758
      %v5763 = vadd.f32 %v5714, %v5758
      %v5764 = vadd.f32 %v5715, %v5758
      %v5765 = vadd.f32 %v5716, %v5758
      %v5766 = vadd.f32 %v5717, %v5758
      %v5767 = vadd.f32 %v5718, %v5758
      %v5768 = vadd.f32 %v5719, %v5758
      %v5769 = vadd.f32 %v5720, %v5758
      %v5770 = vadd.f32 %v5721, %v5758
      %v5771 = vadd.f32 %v5722, %v5758
      %v5772 = vadd.f32 %v5723, %v5758
      %v5773 = vadd.f32 %v5724, %v5758
      %v5774 = vadd.f32 %v5725, %v5758
      %v5775 = vadd.f32 %v5726, %v5758
      %v5776 = vadd.f32 %v5727, %v5758
      %v5777 = vadd.f32 %v5728, %v5758
      %v5778 = vadd.f32 %v5729, %v5758
      %v5779 = vadd.f32 %v5730, %v5758
      %v5780 = vadd.f32 %v5731, %v5758
      %v5781 = vadd.f32 %v5732, %v5758
      %v5782 = vadd.f32 %v5733, %v5758
      %v5783 = vadd.f32 %v5734, %v5758
      %v5784 = vadd.f32 %v5735, %v5758
      %v5785 = vadd.f32 %v5736, %v5758
      %v5786 = vadd.f32 %v5737, %v5758
      %v5787 = vadd.f32 %v5738, %v5758
      %v5788 = vadd.f32 %v5739, %v5758
      %v5789 = vadd.f32 %v5740, %v5758
      %v5790 = vadd.f32 %v5741, %v5758
      %v5791 = vadd.f32 %v5742, %v5758
      %v5792 = vadd.f32 %v5743, %v5758
      %v5793 = vadd.f32 %v5744, %v5758
      %v5794 = vadd.f32 %v5745, %v5758
      %v5795 = vadd.f32 %v5746, %v5758
      %v5796 = vadd.f32 %v5747, %v5758
      %v5797 = vadd.f32 %v5748, %v5758
      %v5798 = vadd.f32 %v5749, %v5758
      %v5799 = vadd.f32 %v5750, %v5758
      %v5800 = vadd.f32 %v5751, %v5758
      %v5801 = vadd.f32 %v5752, %v5758
      %v5802 = vadd.f32 %v5760, 2.0
      %v5803 = vadd.f32 %v5761, 2.0
      %v5804 = vadd.f32 %v5762, 2.0
      %v5805 = vadd.f32 %v5763, 2.0
      %v5806 = vadd.f32 %v5764, 2.0
      %v5807 = vadd.f32 %v5765, 2.0
      %v5808 = vadd.f32 %v5766, 2.0
      %v5809 = vadd.f32 %v5767, 2.0
      %v5810 = vadd.f32 %v5768, 2.0
      %v5811 = vadd.f32 %v5769, 2.0
      %v5812 = vadd.f32 %v5770, 2.0
      %v5813 = vadd.f32 %v5771, 2.0
      %v5814 = vadd.f32 %v5772, 2.0
      %v5815 = vadd.f32 %v5773, 2.0
      %v5816 = vadd.f32 %v5774, 2.0
      %v5817 = vadd.f32 %v5775, 2.0
      %v5818 = vadd.f32 %v5776, 2.0
      %v5819 = vadd.f32 %v5777, 2.0
      %v5820 = vadd.f32 %v5778, 2.0
      %v5821 = vadd.f32 %v5779, 2.0
      %v5822 = vadd.f32 %v5780, 2.0
      %v5823 = vadd.f32 %v5781, 2.0
      %v5824 = vadd.f32 %v5782, 2.0
      %v5825 = vadd.f32 %v5783, 2.0
      %v5826 = vadd.f32 %v5784, 2.0
      %v5827 = vadd.f32 %v5785, 2.0
      %v5828 = vadd.f32 %v5786, 2.0
      %v5829 = vadd.f32 %v5787, 2.0
      %v5830 = vadd.f32 %v5788, 2.0
      %v5831 = vadd.f32 %v5789, 2.0
      %v5832 = vadd.f32 %v5790, 2.0
      %v5833 = vadd.f32 %v5791, 2.0
      %v5834 = vadd.f32 %v5792, 2.0
      %v5835 = vadd.f32 %v5793, 2.0
      %v5836 = vadd.f32 %v5794, 2.0
      %v5837 = vadd.f32 %v5795, 2.0
      %v5838 = vadd.f32 %v5796, 2.0
      %v5839 = vadd.f32 %v5797, 2.0
      %v5840 = vadd.f32 %v5798, 2.0
      %v5841 = vadd.f32 %v5799, 2.0
      %v5842 = vadd.f32 %v5800, 2.0
      %v5843 = vadd.f32 %v5801, 2.0
      %v5844 = vxor.u32 %v5802, 2147483648
      %v5845 = vxor.u32 %v5803, 2147483648
      %v5846 = vxor.u32 %v5804, 2147483648
      %v5847 = vxor.u32 %v5805, 2147483648
      %v5848 = vxor.u32 %v5806, 2147483648
      %v5849 = vxor.u32 %v5807, 2147483648
      %v5850 = vxor.u32 %v5808, 2147483648
      %v5851 = vxor.u32 %v5809, 2147483648
      %v5852 = vxor.u32 %v5810, 2147483648
      %v5853 = vxor.u32 %v5811, 2147483648
      %v5854 = vxor.u32 %v5812, 2147483648
      %v5855 = vxor.u32 %v5813, 2147483648
      %v5856 = vxor.u32 %v5814, 2147483648
      %v5857 = vxor.u32 %v5815, 2147483648
      %v5858 = vxor.u32 %v5816, 2147483648
      %v5859 = vxor.u32 %v5817, 2147483648
      %v5860 = vxor.u32 %v5818, 2147483648
      %v5861 = vxor.u32 %v5819, 2147483648
      %v5862 = vxor.u32 %v5820, 2147483648
      %v5863 = vxor.u32 %v5821, 2147483648
      %v5864 = vxor.u32 %v5822, 2147483648
      %v5865 = vxor.u32 %v5823, 2147483648
      %v5866 = vxor.u32 %v5824, 2147483648
      %v5867 = vxor.u32 %v5825, 2147483648
      %v5868 = vxor.u32 %v5826, 2147483648
      %v5869 = vxor.u32 %v5827, 2147483648
      %v5870 = vxor.u32 %v5828, 2147483648
      %v5871 = vxor.u32 %v5829, 2147483648
      %v5872 = vxor.u32 %v5830, 2147483648
      %v5873 = vxor.u32 %v5831, 2147483648
      %v5874 = vxor.u32 %v5832, 2147483648
      %v5875 = vxor.u32 %v5833, 2147483648
      %v5876 = vxor.u32 %v5834, 2147483648
      %v5877 = vxor.u32 %v5835, 2147483648
      %v5878 = vxor.u32 %v5836, 2147483648
      %v5879 = vxor.u32 %v5837, 2147483648
      %v5880 = vxor.u32 %v5838, 2147483648
      %v5881 = vxor.u32 %v5839, 2147483648
      %v5882 = vxor.u32 %v5840, 2147483648
      %v5883 = vxor.u32 %v5841, 2147483648
      %v5884 = vxor.u32 %v5842, 2147483648
      %v5885 = vxor.u32 %v5843, 2147483648
      %v5886 = vmul.f32 %v5844, 1.442695
      %v5887 = vpow.pop %v5886
      %v5888 = vmul.f32 %v5845, 1.442695
      %v5889 = vpow.pop %v5888
      %v5890 = vmul.f32 %v5846, 1.442695
      %v5891 = vpow.pop %v5890
      %v5892 = vmul.f32 %v5847, 1.442695
      %v5893 = vpow.pop %v5892
      %v5894 = vmul.f32 %v5848, 1.442695
      %v5895 = vpow.pop %v5894
      %v5896 = vmul.f32 %v5849, 1.442695
      %v5897 = vpow.pop %v5896
      %v5898 = vmul.f32 %v5850, 1.442695
      %v5899 = vpow.pop %v5898
      %v5900 = vmul.f32 %v5851, 1.442695
      %v5901 = vpow.pop %v5900
      %v5902 = vmul.f32 %v5852, 1.442695
      %v5903 = vpow.pop %v5902
      %v5904 = vmul.f32 %v5853, 1.442695
      %v5905 = vpow.pop %v5904
      %v5906 = vmul.f32 %v5854, 1.442695
      %v5907 = vpow.pop %v5906
      %v5908 = vmul.f32 %v5855, 1.442695
      %v5909 = vpow.pop %v5908
      %v5910 = vmul.f32 %v5856, 1.442695
      %v5911 = vpow.pop %v5910
      %v5912 = vmul.f32 %v5857, 1.442695
      %v5913 = vpow.pop %v5912
      %v5914 = vmul.f32 %v5858, 1.442695
      %v5915 = vpow.pop %v5914
      %v5916 = vmul.f32 %v5859, 1.442695
      %v5917 = vpow.pop %v5916
      %v5918 = vmul.f32 %v5860, 1.442695
      %v5919 = vpow.pop %v5918
      %v5920 = vmul.f32 %v5861, 1.442695
      %v5921 = vpow.pop %v5920
      %v5922 = vmul.f32 %v5862, 1.442695
      %v5923 = vpow.pop %v5922
      %v5924 = vmul.f32 %v5863, 1.442695
      %v5925 = vpow.pop %v5924
      %v5926 = vmul.f32 %v5864, 1.442695
      %v5927 = vpow.pop %v5926
      %v5928 = vmul.f32 %v5865, 1.442695
      %v5929 = vpow.pop %v5928
      %v5930 = vmul.f32 %v5866, 1.442695
      %v5931 = vpow.pop %v5930
      %v5932 = vmul.f32 %v5867, 1.442695
      %v5933 = vpow.pop %v5932
      %v5934 = vmul.f32 %v5868, 1.442695
      %v5935 = vpow.pop %v5934
      %v5936 = vmul.f32 %v5869, 1.442695
      %v5937 = vpow.pop %v5936
      %v5938 = vmul.f32 %v5870, 1.442695
      %v5939 = vpow.pop %v5938
      %v5940 = vmul.f32 %v5871, 1.442695
      %v5941 = vpow.pop %v5940
      %v5942 = vmul.f32 %v5872, 1.442695
      %v5943 = vpow.pop %v5942
      %v5944 = vmul.f32 %v5873, 1.442695
      %v5945 = vpow.pop %v5944
      %v5946 = vmul.f32 %v5874, 1.442695
      %v5947 = vpow.pop %v5946
      %v5948 = vmul.f32 %v5875, 1.442695
      %v5949 = vpow.pop %v5948
      %v5950 = vmul.f32 %v5876, 1.442695
      %v5951 = vpow.pop %v5950
      %v5952 = vmul.f32 %v5877, 1.442695
      %v5953 = vpow.pop %v5952
      %v5954 = vmul.f32 %v5878, 1.442695
      %v5955 = vpow.pop %v5954
      %v5956 = vmul.f32 %v5879, 1.442695
      %v5957 = vpow.pop %v5956
      %v5958 = vmul.f32 %v5880, 1.442695
      %v5959 = vpow.pop %v5958
      %v5960 = vmul.f32 %v5881, 1.442695
      %v5961 = vpow.pop %v5960
      %v5962 = vmul.f32 %v5882, 1.442695
      %v5963 = vpow.pop %v5962
      %v5964 = vmul.f32 %v5883, 1.442695
      %v5965 = vpow.pop %v5964
      %v5966 = vmul.f32 %v5884, 1.442695
      %v5967 = vpow.pop %v5966
      %v5968 = vmul.f32 %v5885, 1.442695
      %v5969 = vpow.pop %v5968
      %v5970 = vadd.f32 %v5887, 1.0
      %v5971 = vadd.f32 %v5889, 1.0
      %v5972 = vadd.f32 %v5891, 1.0
      %v5973 = vadd.f32 %v5893, 1.0
      %v5974 = vadd.f32 %v5895, 1.0
      %v5975 = vadd.f32 %v5897, 1.0
      %v5976 = vadd.f32 %v5899, 1.0
      %v5977 = vadd.f32 %v5901, 1.0
      %v5978 = vadd.f32 %v5903, 1.0
      %v5979 = vadd.f32 %v5905, 1.0
      %v5980 = vadd.f32 %v5907, 1.0
      %v5981 = vadd.f32 %v5909, 1.0
      %v5982 = vadd.f32 %v5911, 1.0
      %v5983 = vadd.f32 %v5913, 1.0
      %v5984 = vadd.f32 %v5915, 1.0
      %v5985 = vadd.f32 %v5917, 1.0
      %v5986 = vadd.f32 %v5919, 1.0
      %v5987 = vadd.f32 %v5921, 1.0
      %v5988 = vadd.f32 %v5923, 1.0
      %v5989 = vadd.f32 %v5925, 1.0
      %v5990 = vadd.f32 %v5927, 1.0
      %v5991 = vadd.f32 %v5929, 1.0
      %v5992 = vadd.f32 %v5931, 1.0
      %v5993 = vadd.f32 %v5933, 1.0
      %v5994 = vadd.f32 %v5935, 1.0
      %v5995 = vadd.f32 %v5937, 1.0
      %v5996 = vadd.f32 %v5939, 1.0
      %v5997 = vadd.f32 %v5941, 1.0
      %v5998 = vadd.f32 %v5943, 1.0
      %v5999 = vadd.f32 %v5945, 1.0
      %v6000 = vadd.f32 %v5947, 1.0
      %v6001 = vadd.f32 %v5949, 1.0
      %v6002 = vadd.f32 %v5951, 1.0
      %v6003 = vadd.f32 %v5953, 1.0
      %v6004 = vadd.f32 %v5955, 1.0
      %v6005 = vadd.f32 %v5957, 1.0
      %v6006 = vadd.f32 %v5959, 1.0
      %v6007 = vadd.f32 %v5961, 1.0
      %v6008 = vadd.f32 %v5963, 1.0
      %v6009 = vadd.f32 %v5965, 1.0
      %v6010 = vadd.f32 %v5967, 1.0
      %v6011 = vadd.f32 %v5969, 1.0
      %v6012 = vrcp.pop %v5970
      %v6013 = vmul.f32 1.0, %v6012
      %v6014 = vrcp.pop %v5971
      %v6015 = vmul.f32 1.0, %v6014
      %v6016 = vrcp.pop %v5972
      %v6017 = vmul.f32 1.0, %v6016
      %v6018 = vrcp.pop %v5973
      %v6019 = vmul.f32 1.0, %v6018
      %v6020 = vrcp.pop %v5974
      %v6021 = vmul.f32 1.0, %v6020
      %v6022 = vrcp.pop %v5975
      %v6023 = vmul.f32 1.0, %v6022
      %v6024 = vrcp.pop %v5976
      %v6025 = vmul.f32 1.0, %v6024
      %v6026 = vrcp.pop %v5977
      %v6027 = vmul.f32 1.0, %v6026
      %v6028 = vrcp.pop %v5978
      %v6029 = vmul.f32 1.0, %v6028
      %v6030 = vrcp.pop %v5979
      %v6031 = vmul.f32 1.0, %v6030
      %v6032 = vrcp.pop %v5980
      %v6033 = vmul.f32 1.0, %v6032
      %v6034 = vrcp.pop %v5981
      %v6035 = vmul.f32 1.0, %v6034
      %v6036 = vrcp.pop %v5982
      %v6037 = vmul.f32 1.0, %v6036
      %v6038 = vrcp.pop %v5983
      %v6039 = vmul.f32 1.0, %v6038
      %v6040 = vrcp.pop %v5984
      %v6041 = vmul.f32 1.0, %v6040
      %v6042 = vrcp.pop %v5985
      %v6043 = vmul.f32 1.0, %v6042
      %v6044 = vrcp.pop %v5986
      %v6045 = vmul.f32 1.0, %v6044
      %v6046 = vrcp.pop %v5987
      %v6047 = vmul.f32 1.0, %v6046
      %v6048 = vrcp.pop %v5988
      %v6049 = vmul.f32 1.0, %v6048
      %v6050 = vrcp.pop %v5989
      %v6051 = vmul.f32 1.0, %v6050
      %v6052 = vrcp.pop %v5990
      %v6053 = vmul.f32 1.0, %v6052
      %v6054 = vrcp.pop %v5991
      %v6055 = vmul.f32 1.0, %v6054
      %v6056 = vrcp.pop %v5992
      %v6057 = vmul.f32 1.0, %v6056
      %v6058 = vrcp.pop %v5993
      %v6059 = vmul.f32 1.0, %v6058
      %v6060 = vrcp.pop %v5994
      %v6061 = vmul.f32 1.0, %v6060
      %v6062 = vrcp.pop %v5995
      %v6063 = vmul.f32 1.0, %v6062
      %v6064 = vrcp.pop %v5996
      %v6065 = vmul.f32 1.0, %v6064
      %v6066 = vrcp.pop %v5997
      %v6067 = vmul.f32 1.0, %v6066
      %v6068 = vrcp.pop %v5998
      %v6069 = vmul.f32 1.0, %v6068
      %v6070 = vrcp.pop %v5999
      %v6071 = vmul.f32 1.0, %v6070
      %v6072 = vrcp.pop %v6000
      %v6073 = vmul.f32 1.0, %v6072
      %v6074 = vrcp.pop %v6001
      %v6075 = vmul.f32 1.0, %v6074
      %v6076 = vrcp.pop %v6002
      %v6077 = vmul.f32 1.0, %v6076
      %v6078 = vrcp.pop %v6003
      %v6079 = vmul.f32 1.0, %v6078
      %v6080 = vrcp.pop %v6004
      %v6081 = vmul.f32 1.0, %v6080
      %v6082 = vrcp.pop %v6005
      %v6083 = vmul.f32 1.0, %v6082
      %v6084 = vrcp.pop %v6006
      %v6085 = vmul.f32 1.0, %v6084
      %v6086 = vrcp.pop %v6007
      %v6087 = vmul.f32 1.0, %v6086
      %v6088 = vrcp.pop %v6008
      %v6089 = vmul.f32 1.0, %v6088
      %v6090 = vrcp.pop %v6009
      %v6091 = vmul.f32 1.0, %v6090
      %v6092 = vrcp.pop %v6010
      %v6093 = vmul.f32 1.0, %v6092
      %v6094 = vrcp.pop %v6011
      %v6095 = vmul.f32 1.0, %v6094
      %v6096 = vld [vmem:[%s380] sm:$0xff]
      %v6097 = vld [vmem:[%s380 + $0x8] sm:$0xff]
      %v6098 = vld [vmem:[%s380 + $0x10] sm:$0xff]
      %v6099 = vld [vmem:[%s380 + $0x18] sm:$0xff]
      %v6100 = vld [vmem:[%s380 + $0x20] sm:$0xff]
      %v6101 = vld [vmem:[%s380 + $0x28] sm:$0xff]
      %v6102 = vld [vmem:[%s380 + $0x30] sm:$0xff]
      %v6103 = vld [vmem:[%s380 + $0x38] sm:$0xff]
      %v6104 = vld [vmem:[%s380 + $0x40] sm:$0xff]
      %v6105 = vld [vmem:[%s380 + $0x48] sm:$0xff]
      %v6106 = vld [vmem:[%s380 + $0x50] sm:$0xff]
      %v6107 = vld [vmem:[%s380 + $0x58] sm:$0xff]
      %v6108 = vld [vmem:[%s380 + $0x60] sm:$0xff]
      %v6109 = vld [vmem:[%s380 + $0x68] sm:$0xff]
      %v6110 = vld [vmem:[%s380 + $0x70] sm:$0xff]
      %v6111 = vld [vmem:[%s380 + $0x78] sm:$0xff]
      %v6112 = vld [vmem:[%s380 + $0x80] sm:$0xff]
      %v6113 = vld [vmem:[%s380 + $0x88] sm:$0xff]
      %v6114 = vld [vmem:[%s380 + $0x90] sm:$0xff]
      %v6115 = vld [vmem:[%s380 + $0x98] sm:$0xff]
      %v6116 = vld [vmem:[%s380 + $0xa0] sm:$0xff]
      %v6117 = vld [vmem:[%s380 + $0xa8] sm:$0xff]
      %v6118 = vld [vmem:[%s380 + $0xb0] sm:$0xff]
      %v6119 = vld [vmem:[%s380 + $0xb8] sm:$0xff]
      %v6120 = vld [vmem:[%s380 + $0xc0] sm:$0xff]
      %v6121 = vld [vmem:[%s380 + $0xc8] sm:$0xff]
      %v6122 = vld [vmem:[%s380 + $0xd0] sm:$0xff]
      %v6123 = vld [vmem:[%s380 + $0xd8] sm:$0xff]
      %v6124 = vld [vmem:[%s380 + $0xe0] sm:$0xff]
      %v6125 = vld [vmem:[%s380 + $0xe8] sm:$0xff]
      %v6126 = vld [vmem:[%s380 + $0xf0] sm:$0xff]
      %v6127 = vld [vmem:[%s380 + $0xf8] sm:$0xff]
      %v6128 = vld [vmem:[%s380 + $0x100] sm:$0xff]
      %v6129 = vld [vmem:[%s380 + $0x108] sm:$0xff]
      %v6130 = vld [vmem:[%s380 + $0x110] sm:$0xff]
      %v6131 = vld [vmem:[%s380 + $0x118] sm:$0xff]
      %v6132 = vld [vmem:[%s380 + $0x120] sm:$0xff]
      %v6133 = vld [vmem:[%s380 + $0x128] sm:$0xff]
      %v6134 = vld [vmem:[%s380 + $0x130] sm:$0xff]
      %v6135 = vld [vmem:[%s380 + $0x138] sm:$0xff]
      %v6136 = vld [vmem:[%s380 + $0x140] sm:$0xff]
      %v6179 = vrot.slane %v5760, 5
      %v6180 = vrot.slane %v5761, 5
      %v6181 = vsel %vm1559, %v6179, %v6180
      %v6182 = vrot.slane %v5762, 5
      %v6183 = vsel %vm1559, %v6180, %v6182
      %v6184 = vrot.slane %v5763, 5
      %v6185 = vsel %vm1559, %v6182, %v6184
      %v6186 = vrot.slane %v5764, 5
      %v6187 = vsel %vm1559, %v6184, %v6186
      %v6188 = vrot.slane %v5765, 5
      %v6189 = vsel %vm1559, %v6186, %v6188
      %v6190 = vrot.slane %v5766, 5
      %v6191 = vsel %vm1559, %v6188, %v6190
      %v6192 = vrot.slane %v5767, 5
      %v6193 = vsel %vm1559, %v6190, %v6192
      %v6194 = vrot.slane %v5768, 5
      %v6195 = vsel %vm1559, %v6192, %v6194
      %v6196 = vrot.slane %v5769, 5
      %v6197 = vsel %vm1559, %v6194, %v6196
      %v6198 = vrot.slane %v5770, 5
      %v6199 = vsel %vm1559, %v6196, %v6198
      %v6200 = vrot.slane %v5771, 5
      %v6201 = vsel %vm1559, %v6198, %v6200
      %v6202 = vrot.slane %v5772, 5
      %v6203 = vsel %vm1559, %v6200, %v6202
      %v6204 = vrot.slane %v5773, 5
      %v6205 = vsel %vm1559, %v6202, %v6204
      %v6206 = vrot.slane %v5774, 5
      %v6207 = vsel %vm1559, %v6204, %v6206
      %v6208 = vrot.slane %v5775, 5
      %v6209 = vsel %vm1559, %v6206, %v6208
      %v6210 = vrot.slane %v5776, 5
      %v6211 = vsel %vm1559, %v6208, %v6210
      %v6212 = vrot.slane %v5777, 5
      %v6213 = vsel %vm1559, %v6210, %v6212
      %v6214 = vrot.slane %v5778, 5
      %v6215 = vsel %vm1559, %v6212, %v6214
      %v6216 = vrot.slane %v5779, 5
      %v6217 = vsel %vm1559, %v6214, %v6216
      %v6218 = vrot.slane %v5780, 5
      %v6219 = vsel %vm1559, %v6216, %v6218
      %v6220 = vrot.slane %v5781, 5
      %v6221 = vsel %vm1559, %v6218, %v6220
      %v6222 = vrot.slane %v5782, 5
      %v6223 = vsel %vm1559, %v6220, %v6222
      %v6224 = vrot.slane %v5783, 5
      %v6225 = vsel %vm1559, %v6222, %v6224
      %v6226 = vrot.slane %v5784, 5
      %v6227 = vsel %vm1559, %v6224, %v6226
      %v6228 = vrot.slane %v5785, 5
      %v6229 = vsel %vm1559, %v6226, %v6228
      %v6230 = vrot.slane %v5786, 5
      %v6231 = vsel %vm1559, %v6228, %v6230
      %v6232 = vrot.slane %v5787, 5
      %v6233 = vsel %vm1559, %v6230, %v6232
      %v6234 = vrot.slane %v5788, 5
      %v6235 = vsel %vm1559, %v6232, %v6234
      %v6236 = vrot.slane %v5789, 5
      %v6237 = vsel %vm1559, %v6234, %v6236
      %v6238 = vrot.slane %v5790, 5
      %v6239 = vsel %vm1559, %v6236, %v6238
      %v6240 = vrot.slane %v5791, 5
      %v6241 = vsel %vm1559, %v6238, %v6240
      %v6242 = vrot.slane %v5792, 5
      %v6243 = vsel %vm1559, %v6240, %v6242
      %v6244 = vrot.slane %v5793, 5
      %v6245 = vsel %vm1559, %v6242, %v6244
      %v6246 = vrot.slane %v5794, 5
      %v6247 = vsel %vm1559, %v6244, %v6246
      %v6248 = vrot.slane %v5795, 5
      %v6249 = vsel %vm1559, %v6246, %v6248
      %v6250 = vrot.slane %v5796, 5
      %v6251 = vsel %vm1559, %v6248, %v6250
      %v6252 = vrot.slane %v5797, 5
      %v6253 = vsel %vm1559, %v6250, %v6252
      %v6254 = vrot.slane %v5798, 5
      %v6255 = vsel %vm1559, %v6252, %v6254
      %v6256 = vrot.slane %v5799, 5
      %v6257 = vsel %vm1559, %v6254, %v6256
      %v6258 = vrot.slane %v5800, 5
      %v6259 = vsel %vm1559, %v6256, %v6258
      %v6260 = vrot.slane %v5801, 5
      %v6261 = vsel %vm1559, %v6258, %v6260
      %6262 = vrot.lane.b32.xlu0 %v6181, 126
      %v6263 = vpop.permute.xlu0 %6262
      %6264 = vrot.lane.b32.xlu0 %v6183, 126
      %v6265 = vpop.permute.xlu0 %6264
      %6266 = vrot.lane.b32.xlu0 %v6185, 126
      %v6267 = vpop.permute.xlu0 %6266
      %6268 = vrot.lane.b32.xlu0 %v6187, 126
      %v6269 = vpop.permute.xlu0 %6268
      %6270 = vrot.lane.b32.xlu0 %v6189, 126
      %v6271 = vpop.permute.xlu0 %6270
      %6272 = vrot.lane.b32.xlu0 %v6191, 126
      %v6273 = vpop.permute.xlu0 %6272
      %6274 = vrot.lane.b32.xlu0 %v6193, 126
      %v6275 = vpop.permute.xlu0 %6274
      %6276 = vrot.lane.b32.xlu0 %v6195, 126
      %v6277 = vpop.permute.xlu0 %6276
      %6278 = vrot.lane.b32.xlu0 %v6197, 126
      %v6279 = vpop.permute.xlu0 %6278
      %6280 = vrot.lane.b32.xlu0 %v6199, 126
      %v6281 = vpop.permute.xlu0 %6280
      %6282 = vrot.lane.b32.xlu0 %v6201, 126
      %v6283 = vpop.permute.xlu0 %6282
      %6284 = vrot.lane.b32.xlu0 %v6203, 126
      %v6285 = vpop.permute.xlu0 %6284
      %6286 = vrot.lane.b32.xlu0 %v6205, 126
      %v6287 = vpop.permute.xlu0 %6286
      %6288 = vrot.lane.b32.xlu0 %v6207, 126
      %v6289 = vpop.permute.xlu0 %6288
      %6290 = vrot.lane.b32.xlu0 %v6209, 126
      %v6291 = vpop.permute.xlu0 %6290
      %6292 = vrot.lane.b32.xlu0 %v6211, 126
      %v6293 = vpop.permute.xlu0 %6292
      %6294 = vrot.lane.b32.xlu0 %v6213, 126
      %v6295 = vpop.permute.xlu0 %6294
      %6296 = vrot.lane.b32.xlu0 %v6215, 126
      %v6297 = vpop.permute.xlu0 %6296
      %6298 = vrot.lane.b32.xlu0 %v6217, 126
      %v6299 = vpop.permute.xlu0 %6298
      %6300 = vrot.lane.b32.xlu0 %v6219, 126
      %v6301 = vpop.permute.xlu0 %6300
      %6302 = vrot.lane.b32.xlu0 %v6221, 126
      %v6303 = vpop.permute.xlu0 %6302
      %6304 = vrot.lane.b32.xlu0 %v6223, 126
      %v6305 = vpop.permute.xlu0 %6304
      %6306 = vrot.lane.b32.xlu0 %v6225, 126
      %v6307 = vpop.permute.xlu0 %6306
      %6308 = vrot.lane.b32.xlu0 %v6227, 126
      %v6309 = vpop.permute.xlu0 %6308
      %6310 = vrot.lane.b32.xlu0 %v6229, 126
      %v6311 = vpop.permute.xlu0 %6310
      %6312 = vrot.lane.b32.xlu0 %v6231, 126
      %v6313 = vpop.permute.xlu0 %6312
      %6314 = vrot.lane.b32.xlu0 %v6233, 126
      %v6315 = vpop.permute.xlu0 %6314
      %6316 = vrot.lane.b32.xlu0 %v6235, 126
      %v6317 = vpop.permute.xlu0 %6316
      %6318 = vrot.lane.b32.xlu0 %v6237, 126
      %v6319 = vpop.permute.xlu0 %6318
      %6320 = vrot.lane.b32.xlu0 %v6239, 126
      %v6321 = vpop.permute.xlu0 %6320
      %6322 = vrot.lane.b32.xlu0 %v6241, 126
      %v6323 = vpop.permute.xlu0 %6322
      %6324 = vrot.lane.b32.xlu0 %v6243, 126
      %v6325 = vpop.permute.xlu0 %6324
      %6326 = vrot.lane.b32.xlu0 %v6245, 126
      %v6327 = vpop.permute.xlu0 %6326
      %6328 = vrot.lane.b32.xlu0 %v6247, 126
      %v6329 = vpop.permute.xlu0 %6328
      %6330 = vrot.lane.b32.xlu0 %v6249, 126
      %v6331 = vpop.permute.xlu0 %6330
      %6332 = vrot.lane.b32.xlu0 %v6251, 126
      %v6333 = vpop.permute.xlu0 %6332
      %6334 = vrot.lane.b32.xlu0 %v6253, 126
      %v6335 = vpop.permute.xlu0 %6334
      %6336 = vrot.lane.b32.xlu0 %v6255, 126
      %v6337 = vpop.permute.xlu0 %6336
      %6338 = vrot.lane.b32.xlu0 %v6257, 126
      %v6339 = vpop.permute.xlu0 %6338
      %6340 = vrot.lane.b32.xlu0 %v6259, 126
      %v6341 = vpop.permute.xlu0 %6340
      %6342 = vrot.lane.b32.xlu0 %v6261, 126
      %v6343 = vpop.permute.xlu0 %6342
      %v6385 = vadd.f32 %v6096, %v6263
      %v6386 = vadd.f32 %v6097, %v6265
      %v6387 = vadd.f32 %v6098, %v6267
      %v6388 = vadd.f32 %v6099, %v6269
      %v6389 = vadd.f32 %v6100, %v6271
      %v6390 = vadd.f32 %v6101, %v6273
      %v6391 = vadd.f32 %v6102, %v6275
      %v6392 = vadd.f32 %v6103, %v6277
      %v6393 = vadd.f32 %v6104, %v6279
      %v6394 = vadd.f32 %v6105, %v6281
      %v6395 = vadd.f32 %v6106, %v6283
      %v6396 = vadd.f32 %v6107, %v6285
      %v6397 = vadd.f32 %v6108, %v6287
      %v6398 = vadd.f32 %v6109, %v6289
      %v6399 = vadd.f32 %v6110, %v6291
      %v6400 = vadd.f32 %v6111, %v6293
      %v6401 = vadd.f32 %v6112, %v6295
      %v6402 = vadd.f32 %v6113, %v6297
      %v6403 = vadd.f32 %v6114, %v6299
      %v6404 = vadd.f32 %v6115, %v6301
      %v6405 = vadd.f32 %v6116, %v6303
      %v6406 = vadd.f32 %v6117, %v6305
      %v6407 = vadd.f32 %v6118, %v6307
      %v6408 = vadd.f32 %v6119, %v6309
      %v6409 = vadd.f32 %v6120, %v6311
      %v6410 = vadd.f32 %v6121, %v6313
      %v6411 = vadd.f32 %v6122, %v6315
      %v6412 = vadd.f32 %v6123, %v6317
      %v6413 = vadd.f32 %v6124, %v6319
      %v6414 = vadd.f32 %v6125, %v6321
      %v6415 = vadd.f32 %v6126, %v6323
      %v6416 = vadd.f32 %v6127, %v6325
      %v6417 = vadd.f32 %v6128, %v6327
      %v6418 = vadd.f32 %v6129, %v6329
      %v6419 = vadd.f32 %v6130, %v6331
      %v6420 = vadd.f32 %v6131, %v6333
      %v6421 = vadd.f32 %v6132, %v6335
      %v6422 = vadd.f32 %v6133, %v6337
      %v6423 = vadd.f32 %v6134, %v6339
      %v6424 = vadd.f32 %v6135, %v6341
      %v6425 = vadd.f32 %v6136, %v6343
      %v6468 = vrot.slane %v6013, 5
      %v6469 = vrot.slane %v6015, 5
      %v6470 = vsel %vm1559, %v6468, %v6469
      %v6471 = vrot.slane %v6017, 5
      %v6472 = vsel %vm1559, %v6469, %v6471
      %v6473 = vrot.slane %v6019, 5
      %v6474 = vsel %vm1559, %v6471, %v6473
      %v6475 = vrot.slane %v6021, 5
      %v6476 = vsel %vm1559, %v6473, %v6475
      %v6477 = vrot.slane %v6023, 5
      %v6478 = vsel %vm1559, %v6475, %v6477
      %v6479 = vrot.slane %v6025, 5
      %v6480 = vsel %vm1559, %v6477, %v6479
      %v6481 = vrot.slane %v6027, 5
      %v6482 = vsel %vm1559, %v6479, %v6481
      %v6483 = vrot.slane %v6029, 5
      %v6484 = vsel %vm1559, %v6481, %v6483
      %v6485 = vrot.slane %v6031, 5
      %v6486 = vsel %vm1559, %v6483, %v6485
      %v6487 = vrot.slane %v6033, 5
      %v6488 = vsel %vm1559, %v6485, %v6487
      %v6489 = vrot.slane %v6035, 5
      %v6490 = vsel %vm1559, %v6487, %v6489
      %v6491 = vrot.slane %v6037, 5
      %v6492 = vsel %vm1559, %v6489, %v6491
      %v6493 = vrot.slane %v6039, 5
      %v6494 = vsel %vm1559, %v6491, %v6493
      %v6495 = vrot.slane %v6041, 5
      %v6496 = vsel %vm1559, %v6493, %v6495
      %v6497 = vrot.slane %v6043, 5
      %v6498 = vsel %vm1559, %v6495, %v6497
      %v6499 = vrot.slane %v6045, 5
      %v6500 = vsel %vm1559, %v6497, %v6499
      %v6501 = vrot.slane %v6047, 5
      %v6502 = vsel %vm1559, %v6499, %v6501
      %v6503 = vrot.slane %v6049, 5
      %v6504 = vsel %vm1559, %v6501, %v6503
      %v6505 = vrot.slane %v6051, 5
      %v6506 = vsel %vm1559, %v6503, %v6505
      %v6507 = vrot.slane %v6053, 5
      %v6508 = vsel %vm1559, %v6505, %v6507
      %v6509 = vrot.slane %v6055, 5
      %v6510 = vsel %vm1559, %v6507, %v6509
      %v6511 = vrot.slane %v6057, 5
      %v6512 = vsel %vm1559, %v6509, %v6511
      %v6513 = vrot.slane %v6059, 5
      %v6514 = vsel %vm1559, %v6511, %v6513
      %v6515 = vrot.slane %v6061, 5
      %v6516 = vsel %vm1559, %v6513, %v6515
      %v6517 = vrot.slane %v6063, 5
      %v6518 = vsel %vm1559, %v6515, %v6517
      %v6519 = vrot.slane %v6065, 5
      %v6520 = vsel %vm1559, %v6517, %v6519
      %v6521 = vrot.slane %v6067, 5
      %v6522 = vsel %vm1559, %v6519, %v6521
      %v6523 = vrot.slane %v6069, 5
      %v6524 = vsel %vm1559, %v6521, %v6523
      %v6525 = vrot.slane %v6071, 5
      %v6526 = vsel %vm1559, %v6523, %v6525
      %v6527 = vrot.slane %v6073, 5
      %v6528 = vsel %vm1559, %v6525, %v6527
      %v6529 = vrot.slane %v6075, 5
      %v6530 = vsel %vm1559, %v6527, %v6529
      %v6531 = vrot.slane %v6077, 5
      %v6532 = vsel %vm1559, %v6529, %v6531
      %v6533 = vrot.slane %v6079, 5
      %v6534 = vsel %vm1559, %v6531, %v6533
      %v6535 = vrot.slane %v6081, 5
      %v6536 = vsel %vm1559, %v6533, %v6535
      %v6537 = vrot.slane %v6083, 5
      %v6538 = vsel %vm1559, %v6535, %v6537
      %v6539 = vrot.slane %v6085, 5
      %v6540 = vsel %vm1559, %v6537, %v6539
      %v6541 = vrot.slane %v6087, 5
      %v6542 = vsel %vm1559, %v6539, %v6541
      %v6543 = vrot.slane %v6089, 5
      %v6544 = vsel %vm1559, %v6541, %v6543
      %v6545 = vrot.slane %v6091, 5
      %v6546 = vsel %vm1559, %v6543, %v6545
      %v6547 = vrot.slane %v6093, 5
      %v6548 = vsel %vm1559, %v6545, %v6547
      %v6549 = vrot.slane %v6095, 5
      %v6550 = vsel %vm1559, %v6547, %v6549
      %v6592 = vmul.f32 %v6385, %v6470
      %v6593 = vmul.f32 %v6386, %v6472
      %v6594 = vmul.f32 %v6387, %v6474
      %v6595 = vmul.f32 %v6388, %v6476
      %v6596 = vmul.f32 %v6389, %v6478
      %v6597 = vmul.f32 %v6390, %v6480
      %v6598 = vmul.f32 %v6391, %v6482
      %v6599 = vmul.f32 %v6392, %v6484
      %v6600 = vmul.f32 %v6393, %v6486
      %v6601 = vmul.f32 %v6394, %v6488
      %v6602 = vmul.f32 %v6395, %v6490
      %v6603 = vmul.f32 %v6396, %v6492
      %v6604 = vmul.f32 %v6397, %v6494
      %v6605 = vmul.f32 %v6398, %v6496
      %v6606 = vmul.f32 %v6399, %v6498
      %v6607 = vmul.f32 %v6400, %v6500
      %v6608 = vmul.f32 %v6401, %v6502
      %v6609 = vmul.f32 %v6402, %v6504
      %v6610 = vmul.f32 %v6403, %v6506
      %v6611 = vmul.f32 %v6404, %v6508
      %v6612 = vmul.f32 %v6405, %v6510
      %v6613 = vmul.f32 %v6406, %v6512
      %v6614 = vmul.f32 %v6407, %v6514
      %v6615 = vmul.f32 %v6408, %v6516
      %v6616 = vmul.f32 %v6409, %v6518
      %v6617 = vmul.f32 %v6410, %v6520
      %v6618 = vmul.f32 %v6411, %v6522
      %v6619 = vmul.f32 %v6412, %v6524
      %v6620 = vmul.f32 %v6413, %v6526
      %v6621 = vmul.f32 %v6414, %v6528
      %v6622 = vmul.f32 %v6415, %v6530
      %v6623 = vmul.f32 %v6416, %v6532
      %v6624 = vmul.f32 %v6417, %v6534
      %v6625 = vmul.f32 %v6418, %v6536
      %v6626 = vmul.f32 %v6419, %v6538
      %v6627 = vmul.f32 %v6420, %v6540
      %v6628 = vmul.f32 %v6421, %v6542
      %v6629 = vmul.f32 %v6422, %v6544
      %v6630 = vmul.f32 %v6423, %v6546
      %v6631 = vmul.f32 %v6424, %v6548
      %v6632 = vmul.f32 %v6425, %v6550
      %6633 = vst.msk [vmem:[%s385] sm:$0xff] %vm1977, %v6592
      %6634 = vst.msk [vmem:[%s385 + $0x8] sm:$0xff] %vm1977, %v6593
      %6635 = vst.msk [vmem:[%s385 + $0x10] sm:$0xff] %vm1977, %v6594
      %6636 = vst.msk [vmem:[%s385 + $0x18] sm:$0xff] %vm1977, %v6595
      %6637 = vst.msk [vmem:[%s385 + $0x20] sm:$0xff] %vm1977, %v6596
      %6638 = vst.msk [vmem:[%s385 + $0x28] sm:$0xff] %vm1977, %v6597
      %6639 = vst.msk [vmem:[%s385 + $0x30] sm:$0xff] %vm1977, %v6598
      %6640 = vst.msk [vmem:[%s385 + $0x38] sm:$0xff] %vm1977, %v6599
      %6641 = vst.msk [vmem:[%s385 + $0x40] sm:$0xff] %vm1977, %v6600
      %6642 = vst.msk [vmem:[%s385 + $0x48] sm:$0xff] %vm1977, %v6601
      %6643 = vst.msk [vmem:[%s385 + $0x50] sm:$0xff] %vm1977, %v6602
      %6644 = vst.msk [vmem:[%s385 + $0x58] sm:$0xff] %vm1977, %v6603
      %6645 = vst.msk [vmem:[%s385 + $0x60] sm:$0xff] %vm1977, %v6604
      %6646 = vst.msk [vmem:[%s385 + $0x68] sm:$0xff] %vm1977, %v6605
      %6647 = vst.msk [vmem:[%s385 + $0x70] sm:$0xff] %vm1977, %v6606
      %6648 = vst.msk [vmem:[%s385 + $0x78] sm:$0xff] %vm1977, %v6607
      %6649 = vst.msk [vmem:[%s385 + $0x80] sm:$0xff] %vm1977, %v6608
      %6650 = vst.msk [vmem:[%s385 + $0x88] sm:$0xff] %vm1977, %v6609
      %6651 = vst.msk [vmem:[%s385 + $0x90] sm:$0xff] %vm1977, %v6610
      %6652 = vst.msk [vmem:[%s385 + $0x98] sm:$0xff] %vm1977, %v6611
      %6653 = vst.msk [vmem:[%s385 + $0xa0] sm:$0xff] %vm1977, %v6612
      %6654 = vst.msk [vmem:[%s385 + $0xa8] sm:$0xff] %vm1977, %v6613
      %6655 = vst.msk [vmem:[%s385 + $0xb0] sm:$0xff] %vm1977, %v6614
      %6656 = vst.msk [vmem:[%s385 + $0xb8] sm:$0xff] %vm1977, %v6615
      %6657 = vst.msk [vmem:[%s385 + $0xc0] sm:$0xff] %vm1977, %v6616
      %6658 = vst.msk [vmem:[%s385 + $0xc8] sm:$0xff] %vm1977, %v6617
      %6659 = vst.msk [vmem:[%s385 + $0xd0] sm:$0xff] %vm1977, %v6618
      %6660 = vst.msk [vmem:[%s385 + $0xd8] sm:$0xff] %vm1977, %v6619
      %6661 = vst.msk [vmem:[%s385 + $0xe0] sm:$0xff] %vm1977, %v6620
      %6662 = vst.msk [vmem:[%s385 + $0xe8] sm:$0xff] %vm1977, %v6621
      %6663 = vst.msk [vmem:[%s385 + $0xf0] sm:$0xff] %vm1977, %v6622
      %6664 = vst.msk [vmem:[%s385 + $0xf8] sm:$0xff] %vm1977, %v6623
      %6665 = vst.msk [vmem:[%s385 + $0x100] sm:$0xff] %vm1977, %v6624
      %6666 = vst.msk [vmem:[%s385 + $0x108] sm:$0xff] %vm1977, %v6625
      %6667 = vst.msk [vmem:[%s385 + $0x110] sm:$0xff] %vm1977, %v6626
      %6668 = vst.msk [vmem:[%s385 + $0x118] sm:$0xff] %vm1977, %v6627
      %6669 = vst.msk [vmem:[%s385 + $0x120] sm:$0xff] %vm1977, %v6628
      %6670 = vst.msk [vmem:[%s385 + $0x128] sm:$0xff] %vm1977, %v6629
      %6671 = vst.msk [vmem:[%s385 + $0x130] sm:$0xff] %vm1977, %v6630
      %6672 = vst.msk [vmem:[%s385 + $0x138] sm:$0xff] %vm1977, %v6631
      %6673 = vst.msk [vmem:[%s385 + $0x140] sm:$0xff] %vm1977, %v6632
      %v6674 = vlog2.pop %v6013
      %v6675 = vmul.f32 %v6674, 0.6931472
      %v6676 = vlog2.pop %v6015
      %v6677 = vmul.f32 %v6676, 0.6931472
      %v6678 = vlog2.pop %v6017
      %v6679 = vmul.f32 %v6678, 0.6931472
      %v6680 = vlog2.pop %v6019
      %v6681 = vmul.f32 %v6680, 0.6931472
      %v6682 = vlog2.pop %v6021
      %v6683 = vmul.f32 %v6682, 0.6931472
      %v6684 = vlog2.pop %v6023
      %v6685 = vmul.f32 %v6684, 0.6931472
      %v6686 = vlog2.pop %v6025
      %v6687 = vmul.f32 %v6686, 0.6931472
      %v6688 = vlog2.pop %v6027
      %v6689 = vmul.f32 %v6688, 0.6931472
      %v6690 = vlog2.pop %v6029
      %v6691 = vmul.f32 %v6690, 0.6931472
      %v6692 = vlog2.pop %v6031
      %v6693 = vmul.f32 %v6692, 0.6931472
      %v6694 = vlog2.pop %v6033
      %v6695 = vmul.f32 %v6694, 0.6931472
      %v6696 = vlog2.pop %v6035
      %v6697 = vmul.f32 %v6696, 0.6931472
      %v6698 = vlog2.pop %v6037
      %v6699 = vmul.f32 %v6698, 0.6931472
      %v6700 = vlog2.pop %v6039
      %v6701 = vmul.f32 %v6700, 0.6931472
      %v6702 = vlog2.pop %v6041
      %v6703 = vmul.f32 %v6702, 0.6931472
      %v6704 = vlog2.pop %v6043
      %v6705 = vmul.f32 %v6704, 0.6931472
      %v6706 = vlog2.pop %v6045
      %v6707 = vmul.f32 %v6706, 0.6931472
      %v6708 = vlog2.pop %v6047
      %v6709 = vmul.f32 %v6708, 0.6931472
      %v6710 = vlog2.pop %v6049
      %v6711 = vmul.f32 %v6710, 0.6931472
      %v6712 = vlog2.pop %v6051
      %v6713 = vmul.f32 %v6712, 0.6931472
      %v6714 = vlog2.pop %v6053
      %v6715 = vmul.f32 %v6714, 0.6931472
      %v6716 = vlog2.pop %v6055
      %v6717 = vmul.f32 %v6716, 0.6931472
      %v6718 = vlog2.pop %v6057
      %v6719 = vmul.f32 %v6718, 0.6931472
      %v6720 = vlog2.pop %v6059
      %v6721 = vmul.f32 %v6720, 0.6931472
      %v6722 = vlog2.pop %v6061
      %v6723 = vmul.f32 %v6722, 0.6931472
      %v6724 = vlog2.pop %v6063
      %v6725 = vmul.f32 %v6724, 0.6931472
      %v6726 = vlog2.pop %v6065
      %v6727 = vmul.f32 %v6726, 0.6931472
      %v6728 = vlog2.pop %v6067
      %v6729 = vmul.f32 %v6728, 0.6931472
      %v6730 = vlog2.pop %v6069
      %v6731 = vmul.f32 %v6730, 0.6931472
      %v6732 = vlog2.pop %v6071
      %v6733 = vmul.f32 %v6732, 0.6931472
      %v6734 = vlog2.pop %v6073
      %v6735 = vmul.f32 %v6734, 0.6931472
      %v6736 = vlog2.pop %v6075
      %v6737 = vmul.f32 %v6736, 0.6931472
      %v6738 = vlog2.pop %v6077
      %v6739 = vmul.f32 %v6738, 0.6931472
      %v6740 = vlog2.pop %v6079
      %v6741 = vmul.f32 %v6740, 0.6931472
      %v6742 = vlog2.pop %v6081
      %v6743 = vmul.f32 %v6742, 0.6931472
      %v6744 = vlog2.pop %v6083
      %v6745 = vmul.f32 %v6744, 0.6931472
      %v6746 = vlog2.pop %v6085
      %v6747 = vmul.f32 %v6746, 0.6931472
      %v6748 = vlog2.pop %v6087
      %v6749 = vmul.f32 %v6748, 0.6931472
      %v6750 = vlog2.pop %v6089
      %v6751 = vmul.f32 %v6750, 0.6931472
      %v6752 = vlog2.pop %v6091
      %v6753 = vmul.f32 %v6752, 0.6931472
      %v6754 = vlog2.pop %v6093
      %v6755 = vmul.f32 %v6754, 0.6931472
      %v6756 = vlog2.pop %v6095
      %v6757 = vmul.f32 %v6756, 0.6931472
      %v6800 = vrot.slane %v6675, 5
      %v6801 = vrot.slane %v6677, 5
      %v6802 = vsel %vm1559, %v6800, %v6801
      %v6803 = vrot.slane %v6679, 5
      %v6804 = vsel %vm1559, %v6801, %v6803
      %v6805 = vrot.slane %v6681, 5
      %v6806 = vsel %vm1559, %v6803, %v6805
      %v6807 = vrot.slane %v6683, 5
      %v6808 = vsel %vm1559, %v6805, %v6807
      %v6809 = vrot.slane %v6685, 5
      %v6810 = vsel %vm1559, %v6807, %v6809
      %v6811 = vrot.slane %v6687, 5
      %v6812 = vsel %vm1559, %v6809, %v6811
      %v6813 = vrot.slane %v6689, 5
      %v6814 = vsel %vm1559, %v6811, %v6813
      %v6815 = vrot.slane %v6691, 5
      %v6816 = vsel %vm1559, %v6813, %v6815
      %v6817 = vrot.slane %v6693, 5
      %v6818 = vsel %vm1559, %v6815, %v6817
      %v6819 = vrot.slane %v6695, 5
      %v6820 = vsel %vm1559, %v6817, %v6819
      %v6821 = vrot.slane %v6697, 5
      %v6822 = vsel %vm1559, %v6819, %v6821
      %v6823 = vrot.slane %v6699, 5
      %v6824 = vsel %vm1559, %v6821, %v6823
      %v6825 = vrot.slane %v6701, 5
      %v6826 = vsel %vm1559, %v6823, %v6825
      %v6827 = vrot.slane %v6703, 5
      %v6828 = vsel %vm1559, %v6825, %v6827
      %v6829 = vrot.slane %v6705, 5
      %v6830 = vsel %vm1559, %v6827, %v6829
      %v6831 = vrot.slane %v6707, 5
      %v6832 = vsel %vm1559, %v6829, %v6831
      %v6833 = vrot.slane %v6709, 5
      %v6834 = vsel %vm1559, %v6831, %v6833
      %v6835 = vrot.slane %v6711, 5
      %v6836 = vsel %vm1559, %v6833, %v6835
      %v6837 = vrot.slane %v6713, 5
      %v6838 = vsel %vm1559, %v6835, %v6837
      %v6839 = vrot.slane %v6715, 5
      %v6840 = vsel %vm1559, %v6837, %v6839
      %v6841 = vrot.slane %v6717, 5
      %v6842 = vsel %vm1559, %v6839, %v6841
      %v6843 = vrot.slane %v6719, 5
      %v6844 = vsel %vm1559, %v6841, %v6843
      %v6845 = vrot.slane %v6721, 5
      %v6846 = vsel %vm1559, %v6843, %v6845
      %v6847 = vrot.slane %v6723, 5
      %v6848 = vsel %vm1559, %v6845, %v6847
      %v6849 = vrot.slane %v6725, 5
      %v6850 = vsel %vm1559, %v6847, %v6849
      %v6851 = vrot.slane %v6727, 5
      %v6852 = vsel %vm1559, %v6849, %v6851
      %v6853 = vrot.slane %v6729, 5
      %v6854 = vsel %vm1559, %v6851, %v6853
      %v6855 = vrot.slane %v6731, 5
      %v6856 = vsel %vm1559, %v6853, %v6855
      %v6857 = vrot.slane %v6733, 5
      %v6858 = vsel %vm1559, %v6855, %v6857
      %v6859 = vrot.slane %v6735, 5
      %v6860 = vsel %vm1559, %v6857, %v6859
      %v6861 = vrot.slane %v6737, 5
      %v6862 = vsel %vm1559, %v6859, %v6861
      %v6863 = vrot.slane %v6739, 5
      %v6864 = vsel %vm1559, %v6861, %v6863
      %v6865 = vrot.slane %v6741, 5
      %v6866 = vsel %vm1559, %v6863, %v6865
      %v6867 = vrot.slane %v6743, 5
      %v6868 = vsel %vm1559, %v6865, %v6867
      %v6869 = vrot.slane %v6745, 5
      %v6870 = vsel %vm1559, %v6867, %v6869
      %v6871 = vrot.slane %v6747, 5
      %v6872 = vsel %vm1559, %v6869, %v6871
      %v6873 = vrot.slane %v6749, 5
      %v6874 = vsel %vm1559, %v6871, %v6873
      %v6875 = vrot.slane %v6751, 5
      %v6876 = vsel %vm1559, %v6873, %v6875
      %v6877 = vrot.slane %v6753, 5
      %v6878 = vsel %vm1559, %v6875, %v6877
      %v6879 = vrot.slane %v6755, 5
      %v6880 = vsel %vm1559, %v6877, %v6879
      %v6881 = vrot.slane %v6757, 5
      %v6882 = vsel %vm1559, %v6879, %v6881
      %v6924 = vsel %vm3454, %v6802, 0.0
      %v6925 = vsel %vm3455, %v6804, 0.0
      %v6926 = vsel %vm3456, %v6806, 0.0
      %v6927 = vsel %vm3457, %v6808, 0.0
      %v6928 = vsel %vm3458, %v6810, 0.0
      %v6929 = vsel %vm3459, %v6812, 0.0
      %v6930 = vsel %vm3460, %v6814, 0.0
      %v6931 = vsel %vm3461, %v6816, 0.0
      %v6932 = vsel %vm3462, %v6818, 0.0
      %v6933 = vsel %vm3463, %v6820, 0.0
      %v6934 = vsel %vm3464, %v6822, 0.0
      %v6935 = vsel %vm3465, %v6824, 0.0
      %v6936 = vsel %vm3466, %v6826, 0.0
      %v6937 = vsel %vm3467, %v6828, 0.0
      %v6938 = vsel %vm3468, %v6830, 0.0
      %v6939 = vsel %vm3469, %v6832, 0.0
      %v6940 = vsel %vm3470, %v6834, 0.0
      %v6941 = vsel %vm3471, %v6836, 0.0
      %v6942 = vsel %vm3472, %v6838, 0.0
      %v6943 = vsel %vm3473, %v6840, 0.0
      %v6944 = vsel %vm3474, %v6842, 0.0
      %v6945 = vsel %vm3475, %v6844, 0.0
      %v6946 = vsel %vm3476, %v6846, 0.0
      %v6947 = vsel %vm3477, %v6848, 0.0
      %v6948 = vsel %vm3478, %v6850, 0.0
      %v6949 = vsel %vm3479, %v6852, 0.0
      %v6950 = vsel %vm3480, %v6854, 0.0
      %v6951 = vsel %vm3481, %v6856, 0.0
      %v6952 = vsel %vm3482, %v6858, 0.0
      %v6953 = vsel %vm3483, %v6860, 0.0
      %v6954 = vsel %vm3484, %v6862, 0.0
      %v6955 = vsel %vm3485, %v6864, 0.0
      %v6956 = vsel %vm3486, %v6866, 0.0
      %v6957 = vsel %vm3487, %v6868, 0.0
      %v6958 = vsel %vm3488, %v6870, 0.0
      %v6959 = vsel %vm3489, %v6872, 0.0
      %v6960 = vsel %vm3490, %v6874, 0.0
      %v6961 = vsel %vm3491, %v6876, 0.0
      %v6962 = vsel %vm3492, %v6878, 0.0
      %v6963 = vsel %vm3493, %v6880, 0.0
      %v6964 = vsel %vm3494, %v6882, 0.0
      %v6965 = vsel %vm1977, %v6924, 0.0
      %v6966 = vsel %vm1977, %v6925, 0.0
      %v6967 = vadd.f32 %v6965, %v6966
      %v6968 = vsel %vm1977, %v6926, 0.0
      %v6969 = vadd.f32 %v6967, %v6968
      %v6970 = vsel %vm1977, %v6927, 0.0
      %v6971 = vadd.f32 %v6969, %v6970
      %v6972 = vsel %vm1977, %v6928, 0.0
      %v6973 = vadd.f32 %v6971, %v6972
      %v6974 = vsel %vm1977, %v6929, 0.0
      %v6975 = vadd.f32 %v6973, %v6974
      %v6976 = vsel %vm1977, %v6930, 0.0
      %v6977 = vadd.f32 %v6975, %v6976
      %v6978 = vsel %vm1977, %v6931, 0.0
      %v6979 = vadd.f32 %v6977, %v6978
      %v6980 = vsel %vm1977, %v6932, 0.0
      %v6981 = vadd.f32 %v6979, %v6980
      %v6982 = vsel %vm1977, %v6933, 0.0
      %v6983 = vadd.f32 %v6981, %v6982
      %v6984 = vsel %vm1977, %v6934, 0.0
      %v6985 = vadd.f32 %v6983, %v6984
      %v6986 = vsel %vm1977, %v6935, 0.0
      %v6987 = vadd.f32 %v6985, %v6986
      %v6988 = vsel %vm1977, %v6936, 0.0
      %v6989 = vadd.f32 %v6987, %v6988
      %v6990 = vsel %vm1977, %v6937, 0.0
      %v6991 = vadd.f32 %v6989, %v6990
      %v6992 = vsel %vm1977, %v6938, 0.0
      %v6993 = vadd.f32 %v6991, %v6992
      %v6994 = vsel %vm1977, %v6939, 0.0
      %v6995 = vadd.f32 %v6993, %v6994
      %v6996 = vsel %vm1977, %v6940, 0.0
      %v6997 = vadd.f32 %v6995, %v6996
      %v6998 = vsel %vm1977, %v6941, 0.0
      %v6999 = vadd.f32 %v6997, %v6998
      %v7000 = vsel %vm1977, %v6942, 0.0
      %v7001 = vadd.f32 %v6999, %v7000
      %v7002 = vsel %vm1977, %v6943, 0.0
      %v7003 = vadd.f32 %v7001, %v7002
      %v7004 = vsel %vm1977, %v6944, 0.0
      %v7005 = vadd.f32 %v7003, %v7004
      %v7006 = vsel %vm1977, %v6945, 0.0
      %v7007 = vadd.f32 %v7005, %v7006
      %v7008 = vsel %vm1977, %v6946, 0.0
      %v7009 = vadd.f32 %v7007, %v7008
      %v7010 = vsel %vm1977, %v6947, 0.0
      %v7011 = vadd.f32 %v7009, %v7010
      %v7012 = vsel %vm1977, %v6948, 0.0
      %v7013 = vadd.f32 %v7011, %v7012
      %v7014 = vsel %vm1977, %v6949, 0.0
      %v7015 = vadd.f32 %v7013, %v7014
      %v7016 = vsel %vm1977, %v6950, 0.0
      %v7017 = vadd.f32 %v7015, %v7016
      %v7018 = vsel %vm1977, %v6951, 0.0
      %v7019 = vadd.f32 %v7017, %v7018
      %v7020 = vsel %vm1977, %v6952, 0.0
      %v7021 = vadd.f32 %v7019, %v7020
      %v7022 = vsel %vm1977, %v6953, 0.0
      %v7023 = vadd.f32 %v7021, %v7022
      %v7024 = vsel %vm1977, %v6954, 0.0
      %v7025 = vadd.f32 %v7023, %v7024
      %v7026 = vsel %vm1977, %v6955, 0.0
      %v7027 = vadd.f32 %v7025, %v7026
      %v7028 = vsel %vm1977, %v6956, 0.0
      %v7029 = vadd.f32 %v7027, %v7028
      %v7030 = vsel %vm1977, %v6957, 0.0
      %v7031 = vadd.f32 %v7029, %v7030
      %v7032 = vsel %vm1977, %v6958, 0.0
      %v7033 = vadd.f32 %v7031, %v7032
      %v7034 = vsel %vm1977, %v6959, 0.0
      %v7035 = vadd.f32 %v7033, %v7034
      %v7036 = vsel %vm1977, %v6960, 0.0
      %v7037 = vadd.f32 %v7035, %v7036
      %v7038 = vsel %vm1977, %v6961, 0.0
      %v7039 = vadd.f32 %v7037, %v7038
      %v7040 = vsel %vm1977, %v6962, 0.0
      %v7041 = vadd.f32 %v7039, %v7040
      %v7042 = vsel %vm1977, %v6963, 0.0
      %v7043 = vadd.f32 %v7041, %v7042
      %v7044 = vsel %vm1977, %v6964, 0.0
      %v7045 = vadd.f32 %v7043, %v7044
      %v7046 = vrot.slane %v7045, 4
      %v7047 = vadd.f32 %v7045, %v7046
      %v7048 = vrot.slane %v7047, 2
      %v7049 = vadd.f32 %v7047, %v7048
      %v7050 = vrot.slane %v7049, 1
      %v7051 = vadd.f32 %v7049, %v7050
      %vm7052 = vcmask 8192
      %7053 = vst.msk [vmem:[%s388] sm:$0x1] %vm7052, %v7051
      %p7054 = scmp.lt.s32.totalorder %s22, 1
      %s7055 = scalar_select %p7054, %s22, 1
      %s7056 = smul.addr %s7055, 41
      %s7057 = smul.addr %s7056, 8
      %s7058 = scalar_lea.vmem %s9, %s7057
      %p7059 = scmp.lt.s32.totalorder %s22, 1
      %s7060 = scalar_select %p7059, %s22, 1
      %s7061 = scalar_lea.vmem %s10, %s7060
      // Predicated region
      $region57: #{affine_coupling_forward.1} parent=55 // pred_check
        %p7062 = pneg %p239
      $region58: #{affine_coupling_forward.1} parent=55 // pred_check_branch
        %7064 = sbr.rel (%p7062) target = $region60
      $region59: #{affine_coupling_forward.1} parent=55 // pred_region
        _
      $region60: #{affine_coupling_forward.1} parent=55 // pred_fallthru
        _
      // Predicated region
      $region61: #{affine_coupling_forward.1} parent=55 // pred_check
        %p7065 = pneg %p265
      $region62: #{affine_coupling_forward.1} parent=55 // pred_check_branch
        %7067 = sbr.rel (%p7065) target = $region64
      $region63: #{affine_coupling_forward.1} parent=55 // pred_region
        _
      $region64: #{affine_coupling_forward.1} parent=55 // pred_fallthru
        _
    $region56: #{affine_coupling_forward.1} parent=5 // pred_fallthru
      _
    %p7068 = scmp.le.s32.totalorder 2, %s17
    // Predicated region
    $region65: #{affine_coupling_forward.1} parent=5 // pred_check
      %p7069 = pneg %p7068
    $region66: #{affine_coupling_forward.1} parent=5 // pred_check_branch
      %7071 = sbr.rel (%p7069) target = $region68
    $region67: #{affine_coupling_forward.1} parent=5 // pred_region
      %s7072 = ssub.s32 %s17, 2
      // Predicated region
      $region69: #{affine_coupling_forward.1} parent=67 // pred_check
        %p7073 = pneg %p245
      $region70: #{affine_coupling_forward.1} parent=67 // pred_check_branch
        %7075 = sbr.rel (%p7073) target = $region72
      $region71: #{affine_coupling_forward.1} parent=67 // pred_region
        %p7076 = scmp.lt.s32.totalorder %s23, 1
        %s7077 = scalar_select %p7076, %s23, 1
        %s7078 = smul.addr %s7077, 41
        %s7079 = smul.addr %s7078, 8
        %s7080 = scalar_lea.vmem %s9, %s7079
      $region72: #{affine_coupling_forward.1} parent=67 // pred_fallthru
        _
      // Predicated region
      $region73: #{affine_coupling_forward.1} parent=67 // pred_check
        %p7081 = pneg %p271
      $region74: #{affine_coupling_forward.1} parent=67 // pred_check_branch
        %7083 = sbr.rel (%p7081) target = $region76
      $region75: #{affine_coupling_forward.1} parent=67 // pred_region
        %p7084 = scmp.lt.s32.totalorder %s23, 1
        %s7085 = scalar_select %p7084, %s23, 1
        %s7086 = scalar_lea.vmem %s10, %s7085
      $region76: #{affine_coupling_forward.1} parent=67 // pred_fallthru
        _
    $region68: #{affine_coupling_forward.1} parent=5 // pred_fallthru
      _
  $region6: #{affine_coupling_forward.1} parent=0 // loop_footer
    %s21 = sadd.s32 1, %s17
  $region7: #{affine_coupling_forward.1} parent=0 // loop_footer_branch
    %16 = sbr.rel target = $region3
  $region8: #{affine_coupling_forward.1} parent=0 // loop_exit
    _

</llo_original>
